<compile_context>
chip_gen: v5e
topology: v5e:2x2
jax: 0.10.0
libtpu: 0.0.40
codegen_flags: <defaults>
</compile_context>

<pallas_src>
import functools

import jax
import jax.numpy as jnp
from jax import lax
from jax.experimental import pallas as pl
from jax.experimental.pallas import tpu as pltpu


_VMEM = pl.BlockSpec(memory_space=pltpu.MemorySpace.VMEM)
_CPARAMS = pltpu.CompilerParams(vmem_limit_bytes=64 * 1024 * 1024)


# ---------------------------------------------------------------------------
# In-kernel helpers
# ---------------------------------------------------------------------------

def _project_inputs(x_ref, wih_ref, b_ref, xp_ref, T, unroll):
    """xp[t] = x[t] @ W_ih + (b_ih + b_hh), all timesteps, into VMEM scratch.

    x_ref: (T, B, In) bf16   wih_ref: (In, 8H) bf16   b_ref: (1, 8H) f32
    xp_ref: (T, B, 8H) f32 scratch, direction-major columns
            [fwd: i f g o | bwd: i f g o].
    """
    wih = wih_ref[...]                      # hoisted out of the loop
    b = b_ref[...]

    def proj(t, carry):
        xp_ref[t] = jnp.dot(x_ref[t], wih,
                            preferred_element_type=jnp.float32) + b
        return carry

    lax.fori_loop(0, T, proj, 0, unroll=unroll)


def _lstm_bidir_cell(xg, h, c, whh, H):
    """One fused bidirectional LSTM step.

    xg : (B, 8H) f32 input-projection gates [fwd i f g o | bwd i f g o]
         (fwd gates taken at time t, bwd gates at time T-1-t)
    h,c: (B, 2H) f32 state, [:, :H] = fwd, [:, H:] = bwd
    whh: (2H, 8H) bf16 block-diagonal recurrent weights (rows 0:H -> fwd cols,
         rows H:2H -> bwd cols)

    Returns (h_fwd, h_bwd, c_new) with h_* (B, H) f32 and c_new (B, 2H) f32.
    """
    H4 = 4 * H
    # Single MXU push covers all 4 gates x both directions.
    gates = xg + jnp.dot(h.astype(jnp.bfloat16), whh,
                         preferred_element_type=jnp.float32)      # (B, 8H)

    def one_dir(g4, c1):
        i = jax.nn.sigmoid(g4[:, 0 * H:1 * H])
        f = jax.nn.sigmoid(g4[:, 1 * H:2 * H])
        g = jnp.tanh(g4[:, 2 * H:3 * H])
        o = jax.nn.sigmoid(g4[:, 3 * H:4 * H])
        c2 = f * c1 + i * g
        return o * jnp.tanh(c2), c2

    hf, cf = one_dir(gates[:, :H4], c[:, :H])
    hb, cb = one_dir(gates[:, H4:], c[:, H:])
    return hf, hb, jnp.concatenate([cf, cb], axis=1)


def _unroll_for(T):
    return True if T <= 16 else 8


# ---------------------------------------------------------------------------
# Pallas kernels (one per layer; last layer fuses the FC head)
# ---------------------------------------------------------------------------

def bilstm_layer_kernel(x_ref, wih_ref, whh_ref, b_ref, out_ref, xp_ref):
    """Fused input-projection + bidirectional recurrence for one layer.

    x_ref  : (T, B, In) bf16
    wih_ref: (In, 8H) bf16    whh_ref: (2H, 8H) bf16    b_ref: (1, 8H) f32
    out_ref: (T, B, 2H) bf16  out[t, :, :H] = fwd h(t), out[t, :, H:] = bwd h(t)
    xp_ref : (T, B, 8H) f32 VMEM scratch (input projections, never hits HBM)
    """
    T, B, _ = x_ref.shape
    H8 = xp_ref.shape[-1]
    H = H8 // 8
    H4 = 4 * H
    unroll = _unroll_for(T)

    _project_inputs(x_ref, wih_ref, b_ref, xp_ref, T, unroll)
    whh = whh_ref[...]                      # hoisted

    def step(t, carry):
        h, c = carry
        rt = T - 1 - t
        # fwd gates from time t, bwd gates from time T-1-t (direction-major).
        xg = jnp.concatenate([xp_ref[t, :, 0:H4], xp_ref[rt, :, H4:]], axis=1)
        hf, hb, c_new = _lstm_bidir_cell(xg, h, c, whh, H)
        out_ref[t, :, :H] = hf.astype(out_ref.dtype)    # fwd hidden at t
        out_ref[rt, :, H:] = hb.astype(out_ref.dtype)   # bwd hidden at T-1-t
        return jnp.concatenate([hf, hb], axis=1), c_new

    h0 = jnp.zeros((B, 2 * H), jnp.float32)
    c0 = jnp.zeros((B, 2 * H), jnp.float32)
    lax.fori_loop(0, T, step, (h0, c0), unroll=unroll)


def bilstm_layer_fc_kernel(x_ref, wih_ref, whh_ref, b_ref, fcw_ref, fcb_ref,
                           logits_ref, xp_ref):
    """Last LSTM layer fused with encoding concat + FC head.

    Never writes the (T,B,2H) sequence: output[0] / output[-1] are tracked in
    registers and only lane-dense logits (B, Cpad) are stored.
    """
    T, B, _ = x_ref.shape
    H8 = xp_ref.shape[-1]
    H = H8 // 8
    H4 = 4 * H
    unroll = _unroll_for(T)

    _project_inputs(x_ref, wih_ref, b_ref, xp_ref, T, unroll)
    whh = whh_ref[...]

    def xg_at(t, rt):
        return jnp.concatenate([xp_ref[t, :, 0:H4], xp_ref[rt, :, H4:]],
                               axis=1)

    h0 = jnp.zeros((B, 2 * H), jnp.float32)
    c0 = jnp.zeros((B, 2 * H), jnp.float32)

    # Peel step 0: hf0 = fwd h(t=0), hb0 = bwd h(t=T-1).
    hf0, hb0, c1 = _lstm_bidir_cell(xg_at(0, T - 1), h0, c0, whh, H)
    h1 = jnp.concatenate([hf0, hb0], axis=1)

    def step(t, carry):
        h, c = carry
        rt = T - 1 - t
        hf, hb, c_new = _lstm_bidir_cell(xg_at(t, rt), h, c, whh, H)
        return jnp.concatenate([hf, hb], axis=1), c_new

    h_fin, _ = lax.fori_loop(1, T, step, (h1, c1), unroll=unroll)

    # encoding = concat(output[0], output[-1])
    #          = [fwd h(0), bwd h(0), fwd h(T-1), bwd h(T-1)]
    enc = jnp.concatenate([hf0, h_fin[:, H:], h_fin[:, :H], hb0], axis=1)

    logits_ref[...] = (jnp.dot(enc.astype(jnp.bfloat16), fcw_ref[...],
                               preferred_element_type=jnp.float32)
                       + fcb_ref[...])


# ---------------------------------------------------------------------------
# pallas_call wrappers (one launch per layer)
# ---------------------------------------------------------------------------

def bilstm_layer(x, layer):
    T, B, _ = x.shape
    H8 = layer["wih"].shape[1]
    H = H8 // 8
    return pl.pallas_call(
        bilstm_layer_kernel,
        out_shape=jax.ShapeDtypeStruct((T, B, 2 * H), jnp.bfloat16),
        in_specs=[_VMEM, _VMEM, _VMEM, _VMEM],
        out_specs=_VMEM,
        scratch_shapes=[pltpu.VMEM((T, B, H8), jnp.float32)],
        compiler_params=_CPARAMS,
    )(x, layer["wih"], layer["whh"], layer["b"])


def bilstm_layer_fc(x, layer, fc_w, fc_b):
    T, B, _ = x.shape
    H8 = layer["wih"].shape[1]
    c_pad = fc_w.shape[1]
    return pl.pallas_call(
        bilstm_layer_fc_kernel,
        out_shape=jax.ShapeDtypeStruct((B, c_pad), jnp.float32),
        in_specs=[_VMEM, _VMEM, _VMEM, _VMEM, _VMEM, _VMEM],
        out_specs=_VMEM,
        scratch_shapes=[pltpu.VMEM((T, B, H8), jnp.float32)],
        compiler_params=_CPARAMS,
    )(x, layer["wih"], layer["whh"], layer["b"], fc_w, fc_b)


# ---------------------------------------------------------------------------
# Model forward
# ---------------------------------------------------------------------------

def bilstm_forward(params, x_tokens, num_classes):
    """x_tokens: (B, S) int32 -> (B, num_classes) f32 logits."""
    # Embedding lookup + time-major transpose: plain-JAX glue (gather).
    emb = jnp.take(params["embedding"], x_tokens, axis=0)        # (B, S, E) bf16
    seq = jnp.transpose(emb, (1, 0, 2))                          # (T, B, E) bf16

    layers = params["lstm"]
    layer_in = seq
    for layer in layers[:-1]:
        layer_in = bilstm_layer(layer_in, layer)                 # (T, B, 2H) bf16
    logits_pad = bilstm_layer_fc(layer_in, layers[-1],
                                 params["fc_w"], params["fc_b"])  # (B, Cpad) f32
    return logits_pad[:, :num_classes]


# ---------------------------------------------------------------------------
# Parameters: PyTorch-style init + conversion to the fused kernel layout
# ---------------------------------------------------------------------------

def init_torch_params(key, vocab_size, embedding_dim, hidden_dim, num_layers,
                      num_classes):
    """PyTorch-layout parameters (gate order i, f, g, o along 4H rows)."""
    H = hidden_dim
    keys = jax.random.split(key, 2 + num_layers)

    def rnd(k, shape, scale=0.1):
        return jax.random.normal(k, shape, jnp.float32) * scale

    embedding = rnd(keys[0], (vocab_size, embedding_dim))

    lstm = []
    in_dim = embedding_dim
    for l in range(num_layers):
        ks = jax.random.split(keys[2 + l], 8)
        dirs = []
        for d in range(2):  # 0 = forward, 1 = backward
            dirs.append(dict(
                w_ih=rnd(ks[4 * d + 0], (4 * H, in_dim)),
                w_hh=rnd(ks[4 * d + 1], (4 * H, H)),
                b_ih=rnd(ks[4 * d + 2], (4 * H,)),
                b_hh=rnd(ks[4 * d + 3], (4 * H,)),
            ))
        lstm.append(dirs)
        in_dim = 2 * H  # bidirectional output feeds next layer

    fc_w = rnd(keys[1], (num_classes, 4 * H))
    fc_b = jnp.zeros((num_classes,), jnp.float32)
    return dict(embedding=embedding, lstm=lstm, fc_w=fc_w, fc_b=fc_b)


def prepare_params(raw, hidden_dim):
    """Convert PyTorch-layout params to the fused, direction-major layout."""
    H = hidden_dim
    layers = []
    for layer in raw["lstm"]:
        in_dim = layer[0]["w_ih"].shape[1]
        wih = jnp.zeros((in_dim, 8 * H), jnp.float32)
        whh = jnp.zeros((2 * H, 8 * H), jnp.float32)   # block-diagonal
        b = jnp.zeros((1, 8 * H), jnp.float32)
        for d in range(2):           # direction-major: [fwd 4H | bwd 4H]
            for gi in range(4):      # gate order i, f, g, o within each block
                rows = slice(gi * H, (gi + 1) * H)
                cols = slice(d * 4 * H + gi * H, d * 4 * H + (gi + 1) * H)
                wih = wih.at[:, cols].set(layer[d]["w_ih"][rows, :].T)
                whh = whh.at[d * H:(d + 1) * H, cols].set(
                    layer[d]["w_hh"][rows, :].T)
                b = b.at[:, cols].set(
                    (layer[d]["b_ih"][rows] + layer[d]["b_hh"][rows])[None, :])
        layers.append(dict(wih=wih.astype(jnp.bfloat16),
                           whh=whh.astype(jnp.bfloat16),
                           b=b))

    C = raw["fc_w"].shape[0]
    c_pad = max(128, ((C + 127) // 128) * 128)   # lane-dense FC output
    fc_w = jnp.zeros((4 * H, c_pad), jnp.float32).at[:, :C].set(raw["fc_w"].T)
    fc_b = jnp.zeros((1, c_pad), jnp.float32).at[:, :C].set(raw["fc_b"][None, :])
    return dict(embedding=raw["embedding"].astype(jnp.bfloat16),
                lstm=layers,
                fc_w=fc_w.astype(jnp.bfloat16), fc_b=fc_b)


# ---------------------------------------------------------------------------
# Pure-JAX reference (matches the PyTorch module, f32)
# ---------------------------------------------------------------------------

def reference_forward(raw, x_tokens, hidden_dim):
    H = hidden_dim
    emb = jnp.take(raw["embedding"], x_tokens, axis=0)
    seq = jnp.transpose(emb, (1, 0, 2)).astype(jnp.float32)
    T, B, _ = seq.shape
    layer_in = seq
    for layer in raw["lstm"]:
        outs = []
        for d in range(2):
            p = layer[d]
            bias = p["b_ih"] + p["b_hh"]
            xs = layer_in if d == 0 else layer_in[::-1]

            def cell(carry, x_t, w_ih=p["w_ih"], w_hh=p["w_hh"], b=bias):
                h, c = carry
                gates = x_t @ w_ih.T + h @ w_hh.T + b
                i = jax.nn.sigmoid(gates[:, 0:H])
                f = jax.nn.sigmoid(gates[:, H:2 * H])
                g = jnp.tanh(gates[:, 2 * H:3 * H])
                o = jax.nn.sigmoid(gates[:, 3 * H:4 * H])
                c = f * c + i * g
                h = o * jnp.tanh(c)
                return (h, c), h

            init = (jnp.zeros((B, H), jnp.float32),
                    jnp.zeros((B, H), jnp.float32))
            _, hs = lax.scan(cell, init, xs)
            if d == 1:
                hs = hs[::-1]
            outs.append(hs)
        layer_in = jnp.concatenate(outs, axis=-1)
    enc = jnp.concatenate([layer_in[0], layer_in[-1]], axis=1)
    return enc @ raw["fc_w"].T + raw["fc_b"]


# ---------------------------------------------------------------------------

if __name__ == "__main__":
    vocab_size = 100
    embedding_dim = 16
    hidden_dim = 32
    num_layers = 2
    num_classes = 3
    batch = 2
    seq_len = 8

    key = jax.random.PRNGKey(0)
    k_params, k_x = jax.random.split(key)

    raw = init_torch_params(k_params, vocab_size, embedding_dim, hidden_dim,
                            num_layers, num_classes)
    params = prepare_params(raw, hidden_dim)
    x = jax.random.randint(k_x, (batch, seq_len), 0, vocab_size,
                           dtype=jnp.int32)

    fwd = jax.jit(functools.partial(bilstm_forward, num_classes=num_classes))
    out = jax.block_until_ready(fwd(params, x))

    assert out.shape == (batch, num_classes), out.shape
    assert bool(jnp.all(jnp.isfinite(out)))

    ref = reference_forward(raw, x, hidden_dim)
    assert bool(jnp.allclose(out, ref, atol=2e-2, rtol=2e-2)), (out, ref)

    print("KERNEL_OK")
</pallas_src>

<mosaic_0001>
module attributes {stable_mosaic.version = 11 : i64} {
  func.func @bilstm_layer_fc_kernel(%arg0: memref<8x2x64xbf16, #tpu.memory_space<vmem>>, %arg1: memref<64x256xbf16, #tpu.memory_space<vmem>>, %arg2: memref<64x256xbf16, #tpu.memory_space<vmem>>, %arg3: memref<1x256xf32, #tpu.memory_space<vmem>>, %arg4: memref<128x128xbf16, #tpu.memory_space<vmem>>, %arg5: memref<1x128xf32, #tpu.memory_space<vmem>>, %arg6: memref<2x128xf32, #tpu.memory_space<vmem>>, %arg7: memref<8x2x256xf32, #tpu.memory_space<vmem>>) attributes {dimension_semantics = [], scalar_prefetch = 0 : i64, scratch_operands = 1 : i64, tpu.core_type = #tpu.core_type<tc>} {
    %c0 = arith.constant 0 : index
    %c0_0 = arith.constant 0 : index
    %0 = vector.load %arg1[%c0, %c0_0] : memref<64x256xbf16, #tpu.memory_space<vmem>>, vector<64x256xbf16>
    %c0_1 = arith.constant 0 : index
    %c0_2 = arith.constant 0 : index
    %1 = vector.load %arg3[%c0_1, %c0_2] : memref<1x256xf32, #tpu.memory_space<vmem>>, vector<1x256xf32>
    %c0_i32 = arith.constant 0 : i32
    %2 = arith.index_cast %c0_i32 : i32 to index
    %c0_3 = arith.constant 0 : index
    %c0_4 = arith.constant 0 : index
    %3 = vector.load %arg0[%2, %c0_3, %c0_4] : memref<8x2x64xbf16, #tpu.memory_space<vmem>>, vector<1x2x64xbf16>
    %4 = vector.shape_cast %3 : vector<1x2x64xbf16> to vector<2x64xbf16>
    %cst = arith.constant dense<0.000000e+00> : vector<2x256xf32>
    %5 = tpu.matmul %4, %0, %cst {dimension_numbers = #tpu.dot_dimension_numbers<[1], [0], [0], [1], [0, 0, 1, 1], [], []>} : vector<2x64xbf16>, vector<64x256xbf16>, vector<2x256xf32> -> vector<2x256xf32>
    %6 = vector.broadcast %1 : vector<1x256xf32> to vector<2x256xf32>
    %7 = arith.addf %5, %6 : vector<2x256xf32>
    %8 = arith.index_cast %c0_i32 : i32 to index
    %c0_5 = arith.constant 0 : index
    %c0_6 = arith.constant 0 : index
    %9 = vector.load %arg7[%8, %c0_5, %c0_6] : memref<8x2x256xf32, #tpu.memory_space<vmem>>, vector<1x2x256xf32>
    %10 = vector.shape_cast %9 : vector<1x2x256xf32> to vector<2x256xf32>
    %11 = vector.shape_cast %7 : vector<2x256xf32> to vector<1x2x256xf32>
    tpu.vector_store %arg7[%8, %c0_5, %c0_6], %11 {strides = array<i32>} : memref<8x2x256xf32, #tpu.memory_space<vmem>>, vector<1x2x256xf32>,
    %c1_i32 = arith.constant 1 : i32
    %12 = arith.index_cast %c1_i32 : i32 to index
    %c0_7 = arith.constant 0 : index
    %c0_8 = arith.constant 0 : index
    %13 = vector.load %arg0[%12, %c0_7, %c0_8] : memref<8x2x64xbf16, #tpu.memory_space<vmem>>, vector<1x2x64xbf16>
    %14 = vector.shape_cast %13 : vector<1x2x64xbf16> to vector<2x64xbf16>
    %cst_9 = arith.constant dense<0.000000e+00> : vector<2x256xf32>
    %15 = tpu.matmul %14, %0, %cst_9 {dimension_numbers = #tpu.dot_dimension_numbers<[1], [0], [0], [1], [0, 0, 1, 1], [], []>} : vector<2x64xbf16>, vector<64x256xbf16>, vector<2x256xf32> -> vector<2x256xf32>
    %16 = vector.broadcast %1 : vector<1x256xf32> to vector<2x256xf32>
    %17 = arith.addf %15, %16 : vector<2x256xf32>
    %18 = arith.index_cast %c1_i32 : i32 to index
    %c0_10 = arith.constant 0 : index
    %c0_11 = arith.constant 0 : index
    %19 = vector.load %arg7[%18, %c0_10, %c0_11] : memref<8x2x256xf32, #tpu.memory_space<vmem>>, vector<1x2x256xf32>
    %20 = vector.shape_cast %19 : vector<1x2x256xf32> to vector<2x256xf32>
    %21 = vector.shape_cast %17 : vector<2x256xf32> to vector<1x2x256xf32>
    tpu.vector_store %arg7[%18, %c0_10, %c0_11], %21 {strides = array<i32>} : memref<8x2x256xf32, #tpu.memory_space<vmem>>, vector<1x2x256xf32>,
    %c2_i32 = arith.constant 2 : i32
    %22 = arith.index_cast %c2_i32 : i32 to index
    %c0_12 = arith.constant 0 : index
    %c0_13 = arith.constant 0 : index
    %23 = vector.load %arg0[%22, %c0_12, %c0_13] : memref<8x2x64xbf16, #tpu.memory_space<vmem>>, vector<1x2x64xbf16>
    %24 = vector.shape_cast %23 : vector<1x2x64xbf16> to vector<2x64xbf16>
    %cst_14 = arith.constant dense<0.000000e+00> : vector<2x256xf32>
    %25 = tpu.matmul %24, %0, %cst_14 {dimension_numbers = #tpu.dot_dimension_numbers<[1], [0], [0], [1], [0, 0, 1, 1], [], []>} : vector<2x64xbf16>, vector<64x256xbf16>, vector<2x256xf32> -> vector<2x256xf32>
    %26 = vector.broadcast %1 : vector<1x256xf32> to vector<2x256xf32>
    %27 = arith.addf %25, %26 : vector<2x256xf32>
    %28 = arith.index_cast %c2_i32 : i32 to index
    %c0_15 = arith.constant 0 : index
    %c0_16 = arith.constant 0 : index
    %29 = vector.load %arg7[%28, %c0_15, %c0_16] : memref<8x2x256xf32, #tpu.memory_space<vmem>>, vector<1x2x256xf32>
    %30 = vector.shape_cast %29 : vector<1x2x256xf32> to vector<2x256xf32>
    %31 = vector.shape_cast %27 : vector<2x256xf32> to vector<1x2x256xf32>
    tpu.vector_store %arg7[%28, %c0_15, %c0_16], %31 {strides = array<i32>} : memref<8x2x256xf32, #tpu.memory_space<vmem>>, vector<1x2x256xf32>,
    %c3_i32 = arith.constant 3 : i32
    %32 = arith.index_cast %c3_i32 : i32 to index
    %c0_17 = arith.constant 0 : index
    %c0_18 = arith.constant 0 : index
    %33 = vector.load %arg0[%32, %c0_17, %c0_18] : memref<8x2x64xbf16, #tpu.memory_space<vmem>>, vector<1x2x64xbf16>
    %34 = vector.shape_cast %33 : vector<1x2x64xbf16> to vector<2x64xbf16>
    %cst_19 = arith.constant dense<0.000000e+00> : vector<2x256xf32>
    %35 = tpu.matmul %34, %0, %cst_19 {dimension_numbers = #tpu.dot_dimension_numbers<[1], [0], [0], [1], [0, 0, 1, 1], [], []>} : vector<2x64xbf16>, vector<64x256xbf16>, vector<2x256xf32> -> vector<2x256xf32>
    %36 = vector.broadcast %1 : vector<1x256xf32> to vector<2x256xf32>
    %37 = arith.addf %35, %36 : vector<2x256xf32>
    %38 = arith.index_cast %c3_i32 : i32 to index
    %c0_20 = arith.constant 0 : index
    %c0_21 = arith.constant 0 : index
    %39 = vector.load %arg7[%38, %c0_20, %c0_21] : memref<8x2x256xf32, #tpu.memory_space<vmem>>, vector<1x2x256xf32>
    %40 = vector.shape_cast %39 : vector<1x2x256xf32> to vector<2x256xf32>
    %41 = vector.shape_cast %37 : vector<2x256xf32> to vector<1x2x256xf32>
    tpu.vector_store %arg7[%38, %c0_20, %c0_21], %41 {strides = array<i32>} : memref<8x2x256xf32, #tpu.memory_space<vmem>>, vector<1x2x256xf32>,
    %c4_i32 = arith.constant 4 : i32
    %42 = arith.index_cast %c4_i32 : i32 to index
    %c0_22 = arith.constant 0 : index
    %c0_23 = arith.constant 0 : index
    %43 = vector.load %arg0[%42, %c0_22, %c0_23] : memref<8x2x64xbf16, #tpu.memory_space<vmem>>, vector<1x2x64xbf16>
    %44 = vector.shape_cast %43 : vector<1x2x64xbf16> to vector<2x64xbf16>
    %cst_24 = arith.constant dense<0.000000e+00> : vector<2x256xf32>
    %45 = tpu.matmul %44, %0, %cst_24 {dimension_numbers = #tpu.dot_dimension_numbers<[1], [0], [0], [1], [0, 0, 1, 1], [], []>} : vector<2x64xbf16>, vector<64x256xbf16>, vector<2x256xf32> -> vector<2x256xf32>
    %46 = vector.broadcast %1 : vector<1x256xf32> to vector<2x256xf32>
    %47 = arith.addf %45, %46 : vector<2x256xf32>
    %48 = arith.index_cast %c4_i32 : i32 to index
    %c0_25 = arith.constant 0 : index
    %c0_26 = arith.constant 0 : index
    %49 = vector.load %arg7[%48, %c0_25, %c0_26] : memref<8x2x256xf32, #tpu.memory_space<vmem>>, vector<1x2x256xf32>
    %50 = vector.shape_cast %49 : vector<1x2x256xf32> to vector<2x256xf32>
    %51 = vector.shape_cast %47 : vector<2x256xf32> to vector<1x2x256xf32>
    tpu.vector_store %arg7[%48, %c0_25, %c0_26], %51 {strides = array<i32>} : memref<8x2x256xf32, #tpu.memory_space<vmem>>, vector<1x2x256xf32>,
    %c5_i32 = arith.constant 5 : i32
    %52 = arith.index_cast %c5_i32 : i32 to index
    %c0_27 = arith.constant 0 : index
    %c0_28 = arith.constant 0 : index
    %53 = vector.load %arg0[%52, %c0_27, %c0_28] : memref<8x2x64xbf16, #tpu.memory_space<vmem>>, vector<1x2x64xbf16>
    %54 = vector.shape_cast %53 : vector<1x2x64xbf16> to vector<2x64xbf16>
    %cst_29 = arith.constant dense<0.000000e+00> : vector<2x256xf32>
    %55 = tpu.matmul %54, %0, %cst_29 {dimension_numbers = #tpu.dot_dimension_numbers<[1], [0], [0], [1], [0, 0, 1, 1], [], []>} : vector<2x64xbf16>, vector<64x256xbf16>, vector<2x256xf32> -> vector<2x256xf32>
    %56 = vector.broadcast %1 : vector<1x256xf32> to vector<2x256xf32>
    %57 = arith.addf %55, %56 : vector<2x256xf32>
    %58 = arith.index_cast %c5_i32 : i32 to index
    %c0_30 = arith.constant 0 : index
    %c0_31 = arith.constant 0 : index
    %59 = vector.load %arg7[%58, %c0_30, %c0_31] : memref<8x2x256xf32, #tpu.memory_space<vmem>>, vector<1x2x256xf32>
    %60 = vector.shape_cast %59 : vector<1x2x256xf32> to vector<2x256xf32>
    %61 = vector.shape_cast %57 : vector<2x256xf32> to vector<1x2x256xf32>
    tpu.vector_store %arg7[%58, %c0_30, %c0_31], %61 {strides = array<i32>} : memref<8x2x256xf32, #tpu.memory_space<vmem>>, vector<1x2x256xf32>,
    %c6_i32 = arith.constant 6 : i32
    %62 = arith.index_cast %c6_i32 : i32 to index
    %c0_32 = arith.constant 0 : index
    %c0_33 = arith.constant 0 : index
    %63 = vector.load %arg0[%62, %c0_32, %c0_33] : memref<8x2x64xbf16, #tpu.memory_space<vmem>>, vector<1x2x64xbf16>
    %64 = vector.shape_cast %63 : vector<1x2x64xbf16> to vector<2x64xbf16>
    %cst_34 = arith.constant dense<0.000000e+00> : vector<2x256xf32>
    %65 = tpu.matmul %64, %0, %cst_34 {dimension_numbers = #tpu.dot_dimension_numbers<[1], [0], [0], [1], [0, 0, 1, 1], [], []>} : vector<2x64xbf16>, vector<64x256xbf16>, vector<2x256xf32> -> vector<2x256xf32>
    %66 = vector.broadcast %1 : vector<1x256xf32> to vector<2x256xf32>
    %67 = arith.addf %65, %66 : vector<2x256xf32>
    %68 = arith.index_cast %c6_i32 : i32 to index
    %c0_35 = arith.constant 0 : index
    %c0_36 = arith.constant 0 : index
    %69 = vector.load %arg7[%68, %c0_35, %c0_36] : memref<8x2x256xf32, #tpu.memory_space<vmem>>, vector<1x2x256xf32>
    %70 = vector.shape_cast %69 : vector<1x2x256xf32> to vector<2x256xf32>
    %71 = vector.shape_cast %67 : vector<2x256xf32> to vector<1x2x256xf32>
    tpu.vector_store %arg7[%68, %c0_35, %c0_36], %71 {strides = array<i32>} : memref<8x2x256xf32, #tpu.memory_space<vmem>>, vector<1x2x256xf32>,
    %c7_i32 = arith.constant 7 : i32
    %72 = arith.index_cast %c7_i32 : i32 to index
    %c0_37 = arith.constant 0 : index
    %c0_38 = arith.constant 0 : index
    %73 = vector.load %arg0[%72, %c0_37, %c0_38] : memref<8x2x64xbf16, #tpu.memory_space<vmem>>, vector<1x2x64xbf16>
    %74 = vector.shape_cast %73 : vector<1x2x64xbf16> to vector<2x64xbf16>
    %cst_39 = arith.constant dense<0.000000e+00> : vector<2x256xf32>
    %75 = tpu.matmul %74, %0, %cst_39 {dimension_numbers = #tpu.dot_dimension_numbers<[1], [0], [0], [1], [0, 0, 1, 1], [], []>} : vector<2x64xbf16>, vector<64x256xbf16>, vector<2x256xf32> -> vector<2x256xf32>
    %76 = vector.broadcast %1 : vector<1x256xf32> to vector<2x256xf32>
    %77 = arith.addf %75, %76 : vector<2x256xf32>
    %78 = arith.index_cast %c7_i32 : i32 to index
    %c0_40 = arith.constant 0 : index
    %c0_41 = arith.constant 0 : index
    %79 = vector.load %arg7[%78, %c0_40, %c0_41] : memref<8x2x256xf32, #tpu.memory_space<vmem>>, vector<1x2x256xf32>
    %80 = vector.shape_cast %79 : vector<1x2x256xf32> to vector<2x256xf32>
    %81 = vector.shape_cast %77 : vector<2x256xf32> to vector<1x2x256xf32>
    tpu.vector_store %arg7[%78, %c0_40, %c0_41], %81 {strides = array<i32>} : memref<8x2x256xf32, #tpu.memory_space<vmem>>, vector<1x2x256xf32>,
    %c8_i32 = arith.constant 8 : i32
    %c0_42 = arith.constant 0 : index
    %c0_43 = arith.constant 0 : index
    %82 = vector.load %arg2[%c0_42, %c0_43] : memref<64x256xbf16, #tpu.memory_space<vmem>>, vector<64x256xbf16>
    %cst_44 = arith.constant 0.000000e+00 : f32
    %83 = vector.broadcast %cst_44 : f32 to vector<2x64xf32>
    %cst_45 = arith.constant 0.000000e+00 : f32
    %84 = vector.broadcast %cst_45 : f32 to vector<2x64xf32>
    %c0_46 = arith.constant 0 : index
    %c0_47 = arith.constant 0 : index
    %c0_48 = arith.constant 0 : index
    %85 = vector.load %arg7[%c0_46, %c0_47, %c0_48] : memref<8x2x256xf32, #tpu.memory_space<vmem>>, vector<1x2x128xf32>
    %86 = vector.shape_cast %85 : vector<1x2x128xf32> to vector<2x128xf32>
    %c7 = arith.constant 7 : index
    %c0_49 = arith.constant 0 : index
    %c128 = arith.constant 128 : index
    %87 = vector.load %arg7[%c7, %c0_49, %c128] : memref<8x2x256xf32, #tpu.memory_space<vmem>>, vector<1x2x128xf32>
    %88 = vector.shape_cast %87 : vector<1x2x128xf32> to vector<2x128xf32>
    %89 = tpu.concatenate %86, %88 in 1 : vector<2x128xf32>, vector<2x128xf32> -> vector<2x256xf32>
    %90 = arith.truncf %83 : vector<2x64xf32> to vector<2x64xbf16>
    %cst_50 = arith.constant dense<0.000000e+00> : vector<2x256xf32>
    %91 = tpu.matmul %90, %82, %cst_50 {dimension_numbers = #tpu.dot_dimension_numbers<[1], [0], [0], [1], [0, 0, 1, 1], [], []>} : vector<2x64xbf16>, vector<64x256xbf16>, vector<2x256xf32> -> vector<2x256xf32>
    %92 = arith.addf %89, %91 : vector<2x256xf32>
    %93 = vector.extract_strided_slice %92 {offsets = [0, 0], sizes = [2, 128], strides = [1, 1]} : vector<2x256xf32> to vector<2x128xf32>
    %94 = vector.extract_strided_slice %84 {offsets = [0, 0], sizes = [2, 32], strides = [1, 1]} : vector<2x64xf32> to vector<2x32xf32>
    %95 = vector.extract_strided_slice %93 {offsets = [0, 0], sizes = [2, 32], strides = [1, 1]} : vector<2x128xf32> to vector<2x32xf32>
    %96 = arith.negf %95 : vector<2x32xf32>
    %97 = math.exp %96 : vector<2x32xf32>
    %cst_51 = arith.constant 1.000000e+00 : f32
    %98 = vector.broadcast %cst_51 : f32 to vector<2x32xf32>
    %99 = arith.addf %98, %97 : vector<2x32xf32>
    %100 = arith.divf %98, %99 : vector<2x32xf32>
    %101 = vector.extract_strided_slice %93 {offsets = [0, 32], sizes = [2, 32], strides = [1, 1]} : vector<2x128xf32> to vector<2x32xf32>
    %102 = arith.negf %101 : vector<2x32xf32>
    %103 = math.exp %102 : vector<2x32xf32>
    %cst_52 = arith.constant 1.000000e+00 : f32
    %104 = vector.broadcast %cst_52 : f32 to vector<2x32xf32>
    %105 = arith.addf %104, %103 : vector<2x32xf32>
    %106 = arith.divf %104, %105 : vector<2x32xf32>
    %107 = vector.extract_strided_slice %93 {offsets = [0, 64], sizes = [2, 32], strides = [1, 1]} : vector<2x128xf32> to vector<2x32xf32>
    %108 = math.tanh %107 : vector<2x32xf32>
    %109 = vector.extract_strided_slice %93 {offsets = [0, 96], sizes = [2, 32], strides = [1, 1]} : vector<2x128xf32> to vector<2x32xf32>
    %110 = arith.negf %109 : vector<2x32xf32>
    %111 = math.exp %110 : vector<2x32xf32>
    %cst_53 = arith.constant 1.000000e+00 : f32
    %112 = vector.broadcast %cst_53 : f32 to vector<2x32xf32>
    %113 = arith.addf %112, %111 : vector<2x32xf32>
    %114 = arith.divf %112, %113 : vector<2x32xf32>
    %115 = arith.mulf %106, %94 : vector<2x32xf32>
    %116 = arith.mulf %100, %108 : vector<2x32xf32>
    %117 = arith.addf %115, %116 : vector<2x32xf32>
    %118 = math.tanh %117 : vector<2x32xf32>
    %119 = arith.mulf %114, %118 : vector<2x32xf32>
    %120 = vector.extract_strided_slice %92 {offsets = [0, 128], sizes = [2, 128], strides = [1, 1]} : vector<2x256xf32> to vector<2x128xf32>
    %121 = vector.extract_strided_slice %84 {offsets = [0, 32], sizes = [2, 32], strides = [1, 1]} : vector<2x64xf32> to vector<2x32xf32>
    %122 = vector.extract_strided_slice %120 {offsets = [0, 0], sizes = [2, 32], strides = [1, 1]} : vector<2x128xf32> to vector<2x32xf32>
    %123 = arith.negf %122 : vector<2x32xf32>
    %124 = math.exp %123 : vector<2x32xf32>
    %cst_54 = arith.constant 1.000000e+00 : f32
    %125 = vector.broadcast %cst_54 : f32 to vector<2x32xf32>
    %126 = arith.addf %125, %124 : vector<2x32xf32>
    %127 = arith.divf %125, %126 : vector<2x32xf32>
    %128 = vector.extract_strided_slice %120 {offsets = [0, 32], sizes = [2, 32], strides = [1, 1]} : vector<2x128xf32> to vector<2x32xf32>
    %129 = arith.negf %128 : vector<2x32xf32>
    %130 = math.exp %129 : vector<2x32xf32>
    %cst_55 = arith.constant 1.000000e+00 : f32
    %131 = vector.broadcast %cst_55 : f32 to vector<2x32xf32>
    %132 = arith.addf %131, %130 : vector<2x32xf32>
    %133 = arith.divf %131, %132 : vector<2x32xf32>
    %134 = vector.extract_strided_slice %120 {offsets = [0, 64], sizes = [2, 32], strides = [1, 1]} : vector<2x128xf32> to vector<2x32xf32>
    %135 = math.tanh %134 : vector<2x32xf32>
    %136 = vector.extract_strided_slice %120 {offsets = [0, 96], sizes = [2, 32], strides = [1, 1]} : vector<2x128xf32> to vector<2x32xf32>
    %137 = arith.negf %136 : vector<2x32xf32>
    %138 = math.exp %137 : vector<2x32xf32>
    %cst_56 = arith.constant 1.000000e+00 : f32
    %139 = vector.broadcast %cst_56 : f32 to vector<2x32xf32>
    %140 = arith.addf %139, %138 : vector<2x32xf32>
    %141 = arith.divf %139, %140 : vector<2x32xf32>
    %142 = arith.mulf %133, %121 : vector<2x32xf32>
    %143 = arith.mulf %127, %135 : vector<2x32xf32>
    %144 = arith.addf %142, %143 : vector<2x32xf32>
    %145 = math.tanh %144 : vector<2x32xf32>
    %146 = arith.mulf %141, %145 : vector<2x32xf32>
    %147 = tpu.concatenate %117, %144 in 1 : vector<2x32xf32>, vector<2x32xf32> -> vector<2x64xf32>
    %148 = tpu.concatenate %119, %146 in 1 : vector<2x32xf32>, vector<2x32xf32> -> vector<2x64xf32>
    %c1_i32_57 = arith.constant 1 : i32
    %c7_i32_58 = arith.constant 7 : i32
    %149 = arith.subi %c7_i32_58, %c1_i32_57 : i32
    %150 = arith.index_cast %c1_i32_57 : i32 to index
    %c0_59 = arith.constant 0 : index
    %c0_60 = arith.constant 0 : index
    %151 = vector.load %arg7[%150, %c0_59, %c0_60] : memref<8x2x256xf32, #tpu.memory_space<vmem>>, vector<1x2x128xf32>
    %152 = vector.shape_cast %151 : vector<1x2x128xf32> to vector<2x128xf32>
    %153 = arith.index_cast %149 : i32 to index
    %c0_61 = arith.constant 0 : index
    %c128_62 = arith.constant 128 : index
    %154 = vector.load %arg7[%153, %c0_61, %c128_62] : memref<8x2x256xf32, #tpu.memory_space<vmem>>, vector<1x2x128xf32>
    %155 = vector.shape_cast %154 : vector<1x2x128xf32> to vector<2x128xf32>
    %156 = tpu.concatenate %152, %155 in 1 : vector<2x128xf32>, vector<2x128xf32> -> vector<2x256xf32>
    %157 = arith.truncf %148 : vector<2x64xf32> to vector<2x64xbf16>
    %cst_63 = arith.constant dense<0.000000e+00> : vector<2x256xf32>
    %158 = tpu.matmul %157, %82, %cst_63 {dimension_numbers = #tpu.dot_dimension_numbers<[1], [0], [0], [1], [0, 0, 1, 1], [], []>} : vector<2x64xbf16>, vector<64x256xbf16>, vector<2x256xf32> -> vector<2x256xf32>
    %159 = arith.addf %156, %158 : vector<2x256xf32>
    %160 = vector.extract_strided_slice %159 {offsets = [0, 0], sizes = [2, 128], strides = [1, 1]} : vector<2x256xf32> to vector<2x128xf32>
    %161 = vector.extract_strided_slice %147 {offsets = [0, 0], sizes = [2, 32], strides = [1, 1]} : vector<2x64xf32> to vector<2x32xf32>
    %162 = vector.extract_strided_slice %160 {offsets = [0, 0], sizes = [2, 32], strides = [1, 1]} : vector<2x128xf32> to vector<2x32xf32>
    %163 = arith.negf %162 : vector<2x32xf32>
    %164 = math.exp %163 : vector<2x32xf32>
    %cst_64 = arith.constant 1.000000e+00 : f32
    %165 = vector.broadcast %cst_64 : f32 to vector<2x32xf32>
    %166 = arith.addf %165, %164 : vector<2x32xf32>
    %167 = arith.divf %165, %166 : vector<2x32xf32>
    %168 = vector.extract_strided_slice %160 {offsets = [0, 32], sizes = [2, 32], strides = [1, 1]} : vector<2x128xf32> to vector<2x32xf32>
    %169 = arith.negf %168 : vector<2x32xf32>
    %170 = math.exp %169 : vector<2x32xf32>
    %cst_65 = arith.constant 1.000000e+00 : f32
    %171 = vector.broadcast %cst_65 : f32 to vector<2x32xf32>
    %172 = arith.addf %171, %170 : vector<2x32xf32>
    %173 = arith.divf %171, %172 : vector<2x32xf32>
    %174 = vector.extract_strided_slice %160 {offsets = [0, 64], sizes = [2, 32], strides = [1, 1]} : vector<2x128xf32> to vector<2x32xf32>
    %175 = math.tanh %174 : vector<2x32xf32>
    %176 = vector.extract_strided_slice %160 {offsets = [0, 96], sizes = [2, 32], strides = [1, 1]} : vector<2x128xf32> to vector<2x32xf32>
    %177 = arith.negf %176 : vector<2x32xf32>
    %178 = math.exp %177 : vector<2x32xf32>
    %cst_66 = arith.constant 1.000000e+00 : f32
    %179 = vector.broadcast %cst_66 : f32 to vector<2x32xf32>
    %180 = arith.addf %179, %178 : vector<2x32xf32>
    %181 = arith.divf %179, %180 : vector<2x32xf32>
    %182 = arith.mulf %173, %161 : vector<2x32xf32>
    %183 = arith.mulf %167, %175 : vector<2x32xf32>
    %184 = arith.addf %182, %183 : vector<2x32xf32>
    %185 = math.tanh %184 : vector<2x32xf32>
    %186 = arith.mulf %181, %185 : vector<2x32xf32>
    %187 = vector.extract_strided_slice %159 {offsets = [0, 128], sizes = [2, 128], strides = [1, 1]} : vector<2x256xf32> to vector<2x128xf32>
    %188 = vector.extract_strided_slice %147 {offsets = [0, 32], sizes = [2, 32], strides = [1, 1]} : vector<2x64xf32> to vector<2x32xf32>
    %189 = vector.extract_strided_slice %187 {offsets = [0, 0], sizes = [2, 32], strides = [1, 1]} : vector<2x128xf32> to vector<2x32xf32>
    %190 = arith.negf %189 : vector<2x32xf32>
    %191 = math.exp %190 : vector<2x32xf32>
    %cst_67 = arith.constant 1.000000e+00 : f32
    %192 = vector.broadcast %cst_67 : f32 to vector<2x32xf32>
    %193 = arith.addf %192, %191 : vector<2x32xf32>
    %194 = arith.divf %192, %193 : vector<2x32xf32>
    %195 = vector.extract_strided_slice %187 {offsets = [0, 32], sizes = [2, 32], strides = [1, 1]} : vector<2x128xf32> to vector<2x32xf32>
    %196 = arith.negf %195 : vector<2x32xf32>
    %197 = math.exp %196 : vector<2x32xf32>
    %cst_68 = arith.constant 1.000000e+00 : f32
    %198 = vector.broadcast %cst_68 : f32 to vector<2x32xf32>
    %199 = arith.addf %198, %197 : vector<2x32xf32>
    %200 = arith.divf %198, %199 : vector<2x32xf32>
    %201 = vector.extract_strided_slice %187 {offsets = [0, 64], sizes = [2, 32], strides = [1, 1]} : vector<2x128xf32> to vector<2x32xf32>
    %202 = math.tanh %201 : vector<2x32xf32>
    %203 = vector.extract_strided_slice %187 {offsets = [0, 96], sizes = [2, 32], strides = [1, 1]} : vector<2x128xf32> to vector<2x32xf32>
    %204 = arith.negf %203 : vector<2x32xf32>
    %205 = math.exp %204 : vector<2x32xf32>
    %cst_69 = arith.constant 1.000000e+00 : f32
    %206 = vector.broadcast %cst_69 : f32 to vector<2x32xf32>
    %207 = arith.addf %206, %205 : vector<2x32xf32>
    %208 = arith.divf %206, %207 : vector<2x32xf32>
    %209 = arith.mulf %200, %188 : vector<2x32xf32>
    %210 = arith.mulf %194, %202 : vector<2x32xf32>
    %211 = arith.addf %209, %210 : vector<2x32xf32>
    %212 = math.tanh %211 : vector<2x32xf32>
    %213 = arith.mulf %208, %212 : vector<2x32xf32>
    %214 = tpu.concatenate %184, %211 in 1 : vector<2x32xf32>, vector<2x32xf32> -> vector<2x64xf32>
    %215 = tpu.concatenate %186, %213 in 1 : vector<2x32xf32>, vector<2x32xf32> -> vector<2x64xf32>
    %c2_i32_70 = arith.constant 2 : i32
    %c7_i32_71 = arith.constant 7 : i32
    %216 = arith.subi %c7_i32_71, %c2_i32_70 : i32
    %217 = arith.index_cast %c2_i32_70 : i32 to index
    %c0_72 = arith.constant 0 : index
    %c0_73 = arith.constant 0 : index
    %218 = vector.load %arg7[%217, %c0_72, %c0_73] : memref<8x2x256xf32, #tpu.memory_space<vmem>>, vector<1x2x128xf32>
    %219 = vector.shape_cast %218 : vector<1x2x128xf32> to vector<2x128xf32>
    %220 = arith.index_cast %216 : i32 to index
    %c0_74 = arith.constant 0 : index
    %c128_75 = arith.constant 128 : index
    %221 = vector.load %arg7[%220, %c0_74, %c128_75] : memref<8x2x256xf32, #tpu.memory_space<vmem>>, vector<1x2x128xf32>
    %222 = vector.shape_cast %221 : vector<1x2x128xf32> to vector<2x128xf32>
    %223 = tpu.concatenate %219, %222 in 1 : vector<2x128xf32>, vector<2x128xf32> -> vector<2x256xf32>
    %224 = arith.truncf %215 : vector<2x64xf32> to vector<2x64xbf16>
    %cst_76 = arith.constant dense<0.000000e+00> : vector<2x256xf32>
    %225 = tpu.matmul %224, %82, %cst_76 {dimension_numbers = #tpu.dot_dimension_numbers<[1], [0], [0], [1], [0, 0, 1, 1], [], []>} : vector<2x64xbf16>, vector<64x256xbf16>, vector<2x256xf32> -> vector<2x256xf32>
    %226 = arith.addf %223, %225 : vector<2x256xf32>
    %227 = vector.extract_strided_slice %226 {offsets = [0, 0], sizes = [2, 128], strides = [1, 1]} : vector<2x256xf32> to vector<2x128xf32>
    %228 = vector.extract_strided_slice %214 {offsets = [0, 0], sizes = [2, 32], strides = [1, 1]} : vector<2x64xf32> to vector<2x32xf32>
    %229 = vector.extract_strided_slice %227 {offsets = [0, 0], sizes = [2, 32], strides = [1, 1]} : vector<2x128xf32> to vector<2x32xf32>
    %230 = arith.negf %229 : vector<2x32xf32>
    %231 = math.exp %230 : vector<2x32xf32>
    %cst_77 = arith.constant 1.000000e+00 : f32
    %232 = vector.broadcast %cst_77 : f32 to vector<2x32xf32>
    %233 = arith.addf %232, %231 : vector<2x32xf32>
    %234 = arith.divf %232, %233 : vector<2x32xf32>
    %235 = vector.extract_strided_slice %227 {offsets = [0, 32], sizes = [2, 32], strides = [1, 1]} : vector<2x128xf32> to vector<2x32xf32>
    %236 = arith.negf %235 : vector<2x32xf32>
    %237 = math.exp %236 : vector<2x32xf32>
    %cst_78 = arith.constant 1.000000e+00 : f32
    %238 = vector.broadcast %cst_78 : f32 to vector<2x32xf32>
    %239 = arith.addf %238, %237 : vector<2x32xf32>
    %240 = arith.divf %238, %239 : vector<2x32xf32>
    %241 = vector.extract_strided_slice %227 {offsets = [0, 64], sizes = [2, 32], strides = [1, 1]} : vector<2x128xf32> to vector<2x32xf32>
    %242 = math.tanh %241 : vector<2x32xf32>
    %243 = vector.extract_strided_slice %227 {offsets = [0, 96], sizes = [2, 32], strides = [1, 1]} : vector<2x128xf32> to vector<2x32xf32>
    %244 = arith.negf %243 : vector<2x32xf32>
    %245 = math.exp %244 : vector<2x32xf32>
    %cst_79 = arith.constant 1.000000e+00 : f32
    %246 = vector.broadcast %cst_79 : f32 to vector<2x32xf32>
    %247 = arith.addf %246, %245 : vector<2x32xf32>
    %248 = arith.divf %246, %247 : vector<2x32xf32>
    %249 = arith.mulf %240, %228 : vector<2x32xf32>
    %250 = arith.mulf %234, %242 : vector<2x32xf32>
    %251 = arith.addf %249, %250 : vector<2x32xf32>
    %252 = math.tanh %251 : vector<2x32xf32>
    %253 = arith.mulf %248, %252 : vector<2x32xf32>
    %254 = vector.extract_strided_slice %226 {offsets = [0, 128], sizes = [2, 128], strides = [1, 1]} : vector<2x256xf32> to vector<2x128xf32>
    %255 = vector.extract_strided_slice %214 {offsets = [0, 32], sizes = [2, 32], strides = [1, 1]} : vector<2x64xf32> to vector<2x32xf32>
    %256 = vector.extract_strided_slice %254 {offsets = [0, 0], sizes = [2, 32], strides = [1, 1]} : vector<2x128xf32> to vector<2x32xf32>
    %257 = arith.negf %256 : vector<2x32xf32>
    %258 = math.exp %257 : vector<2x32xf32>
    %cst_80 = arith.constant 1.000000e+00 : f32
    %259 = vector.broadcast %cst_80 : f32 to vector<2x32xf32>
    %260 = arith.addf %259, %258 : vector<2x32xf32>
    %261 = arith.divf %259, %260 : vector<2x32xf32>
    %262 = vector.extract_strided_slice %254 {offsets = [0, 32], sizes = [2, 32], strides = [1, 1]} : vector<2x128xf32> to vector<2x32xf32>
    %263 = arith.negf %262 : vector<2x32xf32>
    %264 = math.exp %263 : vector<2x32xf32>
    %cst_81 = arith.constant 1.000000e+00 : f32
    %265 = vector.broadcast %cst_81 : f32 to vector<2x32xf32>
    %266 = arith.addf %265, %264 : vector<2x32xf32>
    %267 = arith.divf %265, %266 : vector<2x32xf32>
    %268 = vector.extract_strided_slice %254 {offsets = [0, 64], sizes = [2, 32], strides = [1, 1]} : vector<2x128xf32> to vector<2x32xf32>
    %269 = math.tanh %268 : vector<2x32xf32>
    %270 = vector.extract_strided_slice %254 {offsets = [0, 96], sizes = [2, 32], strides = [1, 1]} : vector<2x128xf32> to vector<2x32xf32>
    %271 = arith.negf %270 : vector<2x32xf32>
    %272 = math.exp %271 : vector<2x32xf32>
    %cst_82 = arith.constant 1.000000e+00 : f32
    %273 = vector.broadcast %cst_82 : f32 to vector<2x32xf32>
    %274 = arith.addf %273, %272 : vector<2x32xf32>
    %275 = arith.divf %273, %274 : vector<2x32xf32>
    %276 = arith.mulf %267, %255 : vector<2x32xf32>
    %277 = arith.mulf %261, %269 : vector<2x32xf32>
    %278 = arith.addf %276, %277 : vector<2x32xf32>
    %279 = math.tanh %278 : vector<2x32xf32>
    %280 = arith.mulf %275, %279 : vector<2x32xf32>
    %281 = tpu.concatenate %251, %278 in 1 : vector<2x32xf32>, vector<2x32xf32> -> vector<2x64xf32>
    %282 = tpu.concatenate %253, %280 in 1 : vector<2x32xf32>, vector<2x32xf32> -> vector<2x64xf32>
    %c3_i32_83 = arith.constant 3 : i32
    %c7_i32_84 = arith.constant 7 : i32
    %283 = arith.subi %c7_i32_84, %c3_i32_83 : i32
    %284 = arith.index_cast %c3_i32_83 : i32 to index
    %c0_85 = arith.constant 0 : index
    %c0_86 = arith.constant 0 : index
    %285 = vector.load %arg7[%284, %c0_85, %c0_86] : memref<8x2x256xf32, #tpu.memory_space<vmem>>, vector<1x2x128xf32>
    %286 = vector.shape_cast %285 : vector<1x2x128xf32> to vector<2x128xf32>
    %287 = arith.index_cast %283 : i32 to index
    %c0_87 = arith.constant 0 : index
    %c128_88 = arith.constant 128 : index
    %288 = vector.load %arg7[%287, %c0_87, %c128_88] : memref<8x2x256xf32, #tpu.memory_space<vmem>>, vector<1x2x128xf32>
    %289 = vector.shape_cast %288 : vector<1x2x128xf32> to vector<2x128xf32>
    %290 = tpu.concatenate %286, %289 in 1 : vector<2x128xf32>, vector<2x128xf32> -> vector<2x256xf32>
    %291 = arith.truncf %282 : vector<2x64xf32> to vector<2x64xbf16>
    %cst_89 = arith.constant dense<0.000000e+00> : vector<2x256xf32>
    %292 = tpu.matmul %291, %82, %cst_89 {dimension_numbers = #tpu.dot_dimension_numbers<[1], [0], [0], [1], [0, 0, 1, 1], [], []>} : vector<2x64xbf16>, vector<64x256xbf16>, vector<2x256xf32> -> vector<2x256xf32>
    %293 = arith.addf %290, %292 : vector<2x256xf32>
    %294 = vector.extract_strided_slice %293 {offsets = [0, 0], sizes = [2, 128], strides = [1, 1]} : vector<2x256xf32> to vector<2x128xf32>
    %295 = vector.extract_strided_slice %281 {offsets = [0, 0], sizes = [2, 32], strides = [1, 1]} : vector<2x64xf32> to vector<2x32xf32>
    %296 = vector.extract_strided_slice %294 {offsets = [0, 0], sizes = [2, 32], strides = [1, 1]} : vector<2x128xf32> to vector<2x32xf32>
    %297 = arith.negf %296 : vector<2x32xf32>
    %298 = math.exp %297 : vector<2x32xf32>
    %cst_90 = arith.constant 1.000000e+00 : f32
    %299 = vector.broadcast %cst_90 : f32 to vector<2x32xf32>
    %300 = arith.addf %299, %298 : vector<2x32xf32>
    %301 = arith.divf %299, %300 : vector<2x32xf32>
    %302 = vector.extract_strided_slice %294 {offsets = [0, 32], sizes = [2, 32], strides = [1, 1]} : vector<2x128xf32> to vector<2x32xf32>
    %303 = arith.negf %302 : vector<2x32xf32>
    %304 = math.exp %303 : vector<2x32xf32>
    %cst_91 = arith.constant 1.000000e+00 : f32
    %305 = vector.broadcast %cst_91 : f32 to vector<2x32xf32>
    %306 = arith.addf %305, %304 : vector<2x32xf32>
    %307 = arith.divf %305, %306 : vector<2x32xf32>
    %308 = vector.extract_strided_slice %294 {offsets = [0, 64], sizes = [2, 32], strides = [1, 1]} : vector<2x128xf32> to vector<2x32xf32>
    %309 = math.tanh %308 : vector<2x32xf32>
    %310 = vector.extract_strided_slice %294 {offsets = [0, 96], sizes = [2, 32], strides = [1, 1]} : vector<2x128xf32> to vector<2x32xf32>
    %311 = arith.negf %310 : vector<2x32xf32>
    %312 = math.exp %311 : vector<2x32xf32>
    %cst_92 = arith.constant 1.000000e+00 : f32
    %313 = vector.broadcast %cst_92 : f32 to vector<2x32xf32>
    %314 = arith.addf %313, %312 : vector<2x32xf32>
    %315 = arith.divf %313, %314 : vector<2x32xf32>
    %316 = arith.mulf %307, %295 : vector<2x32xf32>
    %317 = arith.mulf %301, %309 : vector<2x32xf32>
    %318 = arith.addf %316, %317 : vector<2x32xf32>
    %319 = math.tanh %318 : vector<2x32xf32>
    %320 = arith.mulf %315, %319 : vector<2x32xf32>
    %321 = vector.extract_strided_slice %293 {offsets = [0, 128], sizes = [2, 128], strides = [1, 1]} : vector<2x256xf32> to vector<2x128xf32>
    %322 = vector.extract_strided_slice %281 {offsets = [0, 32], sizes = [2, 32], strides = [1, 1]} : vector<2x64xf32> to vector<2x32xf32>
    %323 = vector.extract_strided_slice %321 {offsets = [0, 0], sizes = [2, 32], strides = [1, 1]} : vector<2x128xf32> to vector<2x32xf32>
    %324 = arith.negf %323 : vector<2x32xf32>
    %325 = math.exp %324 : vector<2x32xf32>
    %cst_93 = arith.constant 1.000000e+00 : f32
    %326 = vector.broadcast %cst_93 : f32 to vector<2x32xf32>
    %327 = arith.addf %326, %325 : vector<2x32xf32>
    %328 = arith.divf %326, %327 : vector<2x32xf32>
    %329 = vector.extract_strided_slice %321 {offsets = [0, 32], sizes = [2, 32], strides = [1, 1]} : vector<2x128xf32> to vector<2x32xf32>
    %330 = arith.negf %329 : vector<2x32xf32>
    %331 = math.exp %330 : vector<2x32xf32>
    %cst_94 = arith.constant 1.000000e+00 : f32
    %332 = vector.broadcast %cst_94 : f32 to vector<2x32xf32>
    %333 = arith.addf %332, %331 : vector<2x32xf32>
    %334 = arith.divf %332, %333 : vector<2x32xf32>
    %335 = vector.extract_strided_slice %321 {offsets = [0, 64], sizes = [2, 32], strides = [1, 1]} : vector<2x128xf32> to vector<2x32xf32>
    %336 = math.tanh %335 : vector<2x32xf32>
    %337 = vector.extract_strided_slice %321 {offsets = [0, 96], sizes = [2, 32], strides = [1, 1]} : vector<2x128xf32> to vector<2x32xf32>
    %338 = arith.negf %337 : vector<2x32xf32>
    %339 = math.exp %338 : vector<2x32xf32>
    %cst_95 = arith.constant 1.000000e+00 : f32
    %340 = vector.broadcast %cst_95 : f32 to vector<2x32xf32>
    %341 = arith.addf %340, %339 : vector<2x32xf32>
    %342 = arith.divf %340, %341 : vector<2x32xf32>
    %343 = arith.mulf %334, %322 : vector<2x32xf32>
    %344 = arith.mulf %328, %336 : vector<2x32xf32>
    %345 = arith.addf %343, %344 : vector<2x32xf32>
    %346 = math.tanh %345 : vector<2x32xf32>
    %347 = arith.mulf %342, %346 : vector<2x32xf32>
    %348 = tpu.concatenate %318, %345 in 1 : vector<2x32xf32>, vector<2x32xf32> -> vector<2x64xf32>
    %349 = tpu.concatenate %320, %347 in 1 : vector<2x32xf32>, vector<2x32xf32> -> vector<2x64xf32>
    %c4_i32_96 = arith.constant 4 : i32
    %c7_i32_97 = arith.constant 7 : i32
    %350 = arith.subi %c7_i32_97, %c4_i32_96 : i32
    %351 = arith.index_cast %c4_i32_96 : i32 to index
    %c0_98 = arith.constant 0 : index
    %c0_99 = arith.constant 0 : index
    %352 = vector.load %arg7[%351, %c0_98, %c0_99] : memref<8x2x256xf32, #tpu.memory_space<vmem>>, vector<1x2x128xf32>
    %353 = vector.shape_cast %352 : vector<1x2x128xf32> to vector<2x128xf32>
    %354 = arith.index_cast %350 : i32 to index
    %c0_100 = arith.constant 0 : index
    %c128_101 = arith.constant 128 : index
    %355 = vector.load %arg7[%354, %c0_100, %c128_101] : memref<8x2x256xf32, #tpu.memory_space<vmem>>, vector<1x2x128xf32>
    %356 = vector.shape_cast %355 : vector<1x2x128xf32> to vector<2x128xf32>
    %357 = tpu.concatenate %353, %356 in 1 : vector<2x128xf32>, vector<2x128xf32> -> vector<2x256xf32>
    %358 = arith.truncf %349 : vector<2x64xf32> to vector<2x64xbf16>
    %cst_102 = arith.constant dense<0.000000e+00> : vector<2x256xf32>
    %359 = tpu.matmul %358, %82, %cst_102 {dimension_numbers = #tpu.dot_dimension_numbers<[1], [0], [0], [1], [0, 0, 1, 1], [], []>} : vector<2x64xbf16>, vector<64x256xbf16>, vector<2x256xf32> -> vector<2x256xf32>
    %360 = arith.addf %357, %359 : vector<2x256xf32>
    %361 = vector.extract_strided_slice %360 {offsets = [0, 0], sizes = [2, 128], strides = [1, 1]} : vector<2x256xf32> to vector<2x128xf32>
    %362 = vector.extract_strided_slice %348 {offsets = [0, 0], sizes = [2, 32], strides = [1, 1]} : vector<2x64xf32> to vector<2x32xf32>
    %363 = vector.extract_strided_slice %361 {offsets = [0, 0], sizes = [2, 32], strides = [1, 1]} : vector<2x128xf32> to vector<2x32xf32>
    %364 = arith.negf %363 : vector<2x32xf32>
    %365 = math.exp %364 : vector<2x32xf32>
    %cst_103 = arith.constant 1.000000e+00 : f32
    %366 = vector.broadcast %cst_103 : f32 to vector<2x32xf32>
    %367 = arith.addf %366, %365 : vector<2x32xf32>
    %368 = arith.divf %366, %367 : vector<2x32xf32>
    %369 = vector.extract_strided_slice %361 {offsets = [0, 32], sizes = [2, 32], strides = [1, 1]} : vector<2x128xf32> to vector<2x32xf32>
    %370 = arith.negf %369 : vector<2x32xf32>
    %371 = math.exp %370 : vector<2x32xf32>
    %cst_104 = arith.constant 1.000000e+00 : f32
    %372 = vector.broadcast %cst_104 : f32 to vector<2x32xf32>
    %373 = arith.addf %372, %371 : vector<2x32xf32>
    %374 = arith.divf %372, %373 : vector<2x32xf32>
    %375 = vector.extract_strided_slice %361 {offsets = [0, 64], sizes = [2, 32], strides = [1, 1]} : vector<2x128xf32> to vector<2x32xf32>
    %376 = math.tanh %375 : vector<2x32xf32>
    %377 = vector.extract_strided_slice %361 {offsets = [0, 96], sizes = [2, 32], strides = [1, 1]} : vector<2x128xf32> to vector<2x32xf32>
    %378 = arith.negf %377 : vector<2x32xf32>
    %379 = math.exp %378 : vector<2x32xf32>
    %cst_105 = arith.constant 1.000000e+00 : f32
    %380 = vector.broadcast %cst_105 : f32 to vector<2x32xf32>
    %381 = arith.addf %380, %379 : vector<2x32xf32>
    %382 = arith.divf %380, %381 : vector<2x32xf32>
    %383 = arith.mulf %374, %362 : vector<2x32xf32>
    %384 = arith.mulf %368, %376 : vector<2x32xf32>
    %385 = arith.addf %383, %384 : vector<2x32xf32>
    %386 = math.tanh %385 : vector<2x32xf32>
    %387 = arith.mulf %382, %386 : vector<2x32xf32>
    %388 = vector.extract_strided_slice %360 {offsets = [0, 128], sizes = [2, 128], strides = [1, 1]} : vector<2x256xf32> to vector<2x128xf32>
    %389 = vector.extract_strided_slice %348 {offsets = [0, 32], sizes = [2, 32], strides = [1, 1]} : vector<2x64xf32> to vector<2x32xf32>
    %390 = vector.extract_strided_slice %388 {offsets = [0, 0], sizes = [2, 32], strides = [1, 1]} : vector<2x128xf32> to vector<2x32xf32>
    %391 = arith.negf %390 : vector<2x32xf32>
    %392 = math.exp %391 : vector<2x32xf32>
    %cst_106 = arith.constant 1.000000e+00 : f32
    %393 = vector.broadcast %cst_106 : f32 to vector<2x32xf32>
    %394 = arith.addf %393, %392 : vector<2x32xf32>
    %395 = arith.divf %393, %394 : vector<2x32xf32>
    %396 = vector.extract_strided_slice %388 {offsets = [0, 32], sizes = [2, 32], strides = [1, 1]} : vector<2x128xf32> to vector<2x32xf32>
    %397 = arith.negf %396 : vector<2x32xf32>
    %398 = math.exp %397 : vector<2x32xf32>
    %cst_107 = arith.constant 1.000000e+00 : f32
    %399 = vector.broadcast %cst_107 : f32 to vector<2x32xf32>
    %400 = arith.addf %399, %398 : vector<2x32xf32>
    %401 = arith.divf %399, %400 : vector<2x32xf32>
    %402 = vector.extract_strided_slice %388 {offsets = [0, 64], sizes = [2, 32], strides = [1, 1]} : vector<2x128xf32> to vector<2x32xf32>
    %403 = math.tanh %402 : vector<2x32xf32>
    %404 = vector.extract_strided_slice %388 {offsets = [0, 96], sizes = [2, 32], strides = [1, 1]} : vector<2x128xf32> to vector<2x32xf32>
    %405 = arith.negf %404 : vector<2x32xf32>
    %406 = math.exp %405 : vector<2x32xf32>
    %cst_108 = arith.constant 1.000000e+00 : f32
    %407 = vector.broadcast %cst_108 : f32 to vector<2x32xf32>
    %408 = arith.addf %407, %406 : vector<2x32xf32>
    %409 = arith.divf %407, %408 : vector<2x32xf32>
    %410 = arith.mulf %401, %389 : vector<2x32xf32>
    %411 = arith.mulf %395, %403 : vector<2x32xf32>
    %412 = arith.addf %410, %411 : vector<2x32xf32>
    %413 = math.tanh %412 : vector<2x32xf32>
    %414 = arith.mulf %409, %413 : vector<2x32xf32>
    %415 = tpu.concatenate %385, %412 in 1 : vector<2x32xf32>, vector<2x32xf32> -> vector<2x64xf32>
    %416 = tpu.concatenate %387, %414 in 1 : vector<2x32xf32>, vector<2x32xf32> -> vector<2x64xf32>
    %c5_i32_109 = arith.constant 5 : i32
    %c7_i32_110 = arith.constant 7 : i32
    %417 = arith.subi %c7_i32_110, %c5_i32_109 : i32
    %418 = arith.index_cast %c5_i32_109 : i32 to index
    %c0_111 = arith.constant 0 : index
    %c0_112 = arith.constant 0 : index
    %419 = vector.load %arg7[%418, %c0_111, %c0_112] : memref<8x2x256xf32, #tpu.memory_space<vmem>>, vector<1x2x128xf32>
    %420 = vector.shape_cast %419 : vector<1x2x128xf32> to vector<2x128xf32>
    %421 = arith.index_cast %417 : i32 to index
    %c0_113 = arith.constant 0 : index
    %c128_114 = arith.constant 128 : index
    %422 = vector.load %arg7[%421, %c0_113, %c128_114] : memref<8x2x256xf32, #tpu.memory_space<vmem>>, vector<1x2x128xf32>
    %423 = vector.shape_cast %422 : vector<1x2x128xf32> to vector<2x128xf32>
    %424 = tpu.concatenate %420, %423 in 1 : vector<2x128xf32>, vector<2x128xf32> -> vector<2x256xf32>
    %425 = arith.truncf %416 : vector<2x64xf32> to vector<2x64xbf16>
    %cst_115 = arith.constant dense<0.000000e+00> : vector<2x256xf32>
    %426 = tpu.matmul %425, %82, %cst_115 {dimension_numbers = #tpu.dot_dimension_numbers<[1], [0], [0], [1], [0, 0, 1, 1], [], []>} : vector<2x64xbf16>, vector<64x256xbf16>, vector<2x256xf32> -> vector<2x256xf32>
    %427 = arith.addf %424, %426 : vector<2x256xf32>
    %428 = vector.extract_strided_slice %427 {offsets = [0, 0], sizes = [2, 128], strides = [1, 1]} : vector<2x256xf32> to vector<2x128xf32>
    %429 = vector.extract_strided_slice %415 {offsets = [0, 0], sizes = [2, 32], strides = [1, 1]} : vector<2x64xf32> to vector<2x32xf32>
    %430 = vector.extract_strided_slice %428 {offsets = [0, 0], sizes = [2, 32], strides = [1, 1]} : vector<2x128xf32> to vector<2x32xf32>
    %431 = arith.negf %430 : vector<2x32xf32>
    %432 = math.exp %431 : vector<2x32xf32>
    %cst_116 = arith.constant 1.000000e+00 : f32
    %433 = vector.broadcast %cst_116 : f32 to vector<2x32xf32>
    %434 = arith.addf %433, %432 : vector<2x32xf32>
    %435 = arith.divf %433, %434 : vector<2x32xf32>
    %436 = vector.extract_strided_slice %428 {offsets = [0, 32], sizes = [2, 32], strides = [1, 1]} : vector<2x128xf32> to vector<2x32xf32>
    %437 = arith.negf %436 : vector<2x32xf32>
    %438 = math.exp %437 : vector<2x32xf32>
    %cst_117 = arith.constant 1.000000e+00 : f32
    %439 = vector.broadcast %cst_117 : f32 to vector<2x32xf32>
    %440 = arith.addf %439, %438 : vector<2x32xf32>
    %441 = arith.divf %439, %440 : vector<2x32xf32>
    %442 = vector.extract_strided_slice %428 {offsets = [0, 64], sizes = [2, 32], strides = [1, 1]} : vector<2x128xf32> to vector<2x32xf32>
    %443 = math.tanh %442 : vector<2x32xf32>
    %444 = vector.extract_strided_slice %428 {offsets = [0, 96], sizes = [2, 32], strides = [1, 1]} : vector<2x128xf32> to vector<2x32xf32>
    %445 = arith.negf %444 : vector<2x32xf32>
    %446 = math.exp %445 : vector<2x32xf32>
    %cst_118 = arith.constant 1.000000e+00 : f32
    %447 = vector.broadcast %cst_118 : f32 to vector<2x32xf32>
    %448 = arith.addf %447, %446 : vector<2x32xf32>
    %449 = arith.divf %447, %448 : vector<2x32xf32>
    %450 = arith.mulf %441, %429 : vector<2x32xf32>
    %451 = arith.mulf %435, %443 : vector<2x32xf32>
    %452 = arith.addf %450, %451 : vector<2x32xf32>
    %453 = math.tanh %452 : vector<2x32xf32>
    %454 = arith.mulf %449, %453 : vector<2x32xf32>
    %455 = vector.extract_strided_slice %427 {offsets = [0, 128], sizes = [2, 128], strides = [1, 1]} : vector<2x256xf32> to vector<2x128xf32>
    %456 = vector.extract_strided_slice %415 {offsets = [0, 32], sizes = [2, 32], strides = [1, 1]} : vector<2x64xf32> to vector<2x32xf32>
    %457 = vector.extract_strided_slice %455 {offsets = [0, 0], sizes = [2, 32], strides = [1, 1]} : vector<2x128xf32> to vector<2x32xf32>
    %458 = arith.negf %457 : vector<2x32xf32>
    %459 = math.exp %458 : vector<2x32xf32>
    %cst_119 = arith.constant 1.000000e+00 : f32
    %460 = vector.broadcast %cst_119 : f32 to vector<2x32xf32>
    %461 = arith.addf %460, %459 : vector<2x32xf32>
    %462 = arith.divf %460, %461 : vector<2x32xf32>
    %463 = vector.extract_strided_slice %455 {offsets = [0, 32], sizes = [2, 32], strides = [1, 1]} : vector<2x128xf32> to vector<2x32xf32>
    %464 = arith.negf %463 : vector<2x32xf32>
    %465 = math.exp %464 : vector<2x32xf32>
    %cst_120 = arith.constant 1.000000e+00 : f32
    %466 = vector.broadcast %cst_120 : f32 to vector<2x32xf32>
    %467 = arith.addf %466, %465 : vector<2x32xf32>
    %468 = arith.divf %466, %467 : vector<2x32xf32>
    %469 = vector.extract_strided_slice %455 {offsets = [0, 64], sizes = [2, 32], strides = [1, 1]} : vector<2x128xf32> to vector<2x32xf32>
    %470 = math.tanh %469 : vector<2x32xf32>
    %471 = vector.extract_strided_slice %455 {offsets = [0, 96], sizes = [2, 32], strides = [1, 1]} : vector<2x128xf32> to vector<2x32xf32>
    %472 = arith.negf %471 : vector<2x32xf32>
    %473 = math.exp %472 : vector<2x32xf32>
    %cst_121 = arith.constant 1.000000e+00 : f32
    %474 = vector.broadcast %cst_121 : f32 to vector<2x32xf32>
    %475 = arith.addf %474, %473 : vector<2x32xf32>
    %476 = arith.divf %474, %475 : vector<2x32xf32>
    %477 = arith.mulf %468, %456 : vector<2x32xf32>
    %478 = arith.mulf %462, %470 : vector<2x32xf32>
    %479 = arith.addf %477, %478 : vector<2x32xf32>
    %480 = math.tanh %479 : vector<2x32xf32>
    %481 = arith.mulf %476, %480 : vector<2x32xf32>
    %482 = tpu.concatenate %452, %479 in 1 : vector<2x32xf32>, vector<2x32xf32> -> vector<2x64xf32>
    %483 = tpu.concatenate %454, %481 in 1 : vector<2x32xf32>, vector<2x32xf32> -> vector<2x64xf32>
    %c6_i32_122 = arith.constant 6 : i32
    %c7_i32_123 = arith.constant 7 : i32
    %484 = arith.subi %c7_i32_123, %c6_i32_122 : i32
    %485 = arith.index_cast %c6_i32_122 : i32 to index
    %c0_124 = arith.constant 0 : index
    %c0_125 = arith.constant 0 : index
    %486 = vector.load %arg7[%485, %c0_124, %c0_125] : memref<8x2x256xf32, #tpu.memory_space<vmem>>, vector<1x2x128xf32>
    %487 = vector.shape_cast %486 : vector<1x2x128xf32> to vector<2x128xf32>
    %488 = arith.index_cast %484 : i32 to index
    %c0_126 = arith.constant 0 : index
    %c128_127 = arith.constant 128 : index
    %489 = vector.load %arg7[%488, %c0_126, %c128_127] : memref<8x2x256xf32, #tpu.memory_space<vmem>>, vector<1x2x128xf32>
    %490 = vector.shape_cast %489 : vector<1x2x128xf32> to vector<2x128xf32>
    %491 = tpu.concatenate %487, %490 in 1 : vector<2x128xf32>, vector<2x128xf32> -> vector<2x256xf32>
    %492 = arith.truncf %483 : vector<2x64xf32> to vector<2x64xbf16>
    %cst_128 = arith.constant dense<0.000000e+00> : vector<2x256xf32>
    %493 = tpu.matmul %492, %82, %cst_128 {dimension_numbers = #tpu.dot_dimension_numbers<[1], [0], [0], [1], [0, 0, 1, 1], [], []>} : vector<2x64xbf16>, vector<64x256xbf16>, vector<2x256xf32> -> vector<2x256xf32>
    %494 = arith.addf %491, %493 : vector<2x256xf32>
    %495 = vector.extract_strided_slice %494 {offsets = [0, 0], sizes = [2, 128], strides = [1, 1]} : vector<2x256xf32> to vector<2x128xf32>
    %496 = vector.extract_strided_slice %482 {offsets = [0, 0], sizes = [2, 32], strides = [1, 1]} : vector<2x64xf32> to vector<2x32xf32>
    %497 = vector.extract_strided_slice %495 {offsets = [0, 0], sizes = [2, 32], strides = [1, 1]} : vector<2x128xf32> to vector<2x32xf32>
    %498 = arith.negf %497 : vector<2x32xf32>
    %499 = math.exp %498 : vector<2x32xf32>
    %cst_129 = arith.constant 1.000000e+00 : f32
    %500 = vector.broadcast %cst_129 : f32 to vector<2x32xf32>
    %501 = arith.addf %500, %499 : vector<2x32xf32>
    %502 = arith.divf %500, %501 : vector<2x32xf32>
    %503 = vector.extract_strided_slice %495 {offsets = [0, 32], sizes = [2, 32], strides = [1, 1]} : vector<2x128xf32> to vector<2x32xf32>
    %504 = arith.negf %503 : vector<2x32xf32>
    %505 = math.exp %504 : vector<2x32xf32>
    %cst_130 = arith.constant 1.000000e+00 : f32
    %506 = vector.broadcast %cst_130 : f32 to vector<2x32xf32>
    %507 = arith.addf %506, %505 : vector<2x32xf32>
    %508 = arith.divf %506, %507 : vector<2x32xf32>
    %509 = vector.extract_strided_slice %495 {offsets = [0, 64], sizes = [2, 32], strides = [1, 1]} : vector<2x128xf32> to vector<2x32xf32>
    %510 = math.tanh %509 : vector<2x32xf32>
    %511 = vector.extract_strided_slice %495 {offsets = [0, 96], sizes = [2, 32], strides = [1, 1]} : vector<2x128xf32> to vector<2x32xf32>
    %512 = arith.negf %511 : vector<2x32xf32>
    %513 = math.exp %512 : vector<2x32xf32>
    %cst_131 = arith.constant 1.000000e+00 : f32
    %514 = vector.broadcast %cst_131 : f32 to vector<2x32xf32>
    %515 = arith.addf %514, %513 : vector<2x32xf32>
    %516 = arith.divf %514, %515 : vector<2x32xf32>
    %517 = arith.mulf %508, %496 : vector<2x32xf32>
    %518 = arith.mulf %502, %510 : vector<2x32xf32>
    %519 = arith.addf %517, %518 : vector<2x32xf32>
    %520 = math.tanh %519 : vector<2x32xf32>
    %521 = arith.mulf %516, %520 : vector<2x32xf32>
    %522 = vector.extract_strided_slice %494 {offsets = [0, 128], sizes = [2, 128], strides = [1, 1]} : vector<2x256xf32> to vector<2x128xf32>
    %523 = vector.extract_strided_slice %482 {offsets = [0, 32], sizes = [2, 32], strides = [1, 1]} : vector<2x64xf32> to vector<2x32xf32>
    %524 = vector.extract_strided_slice %522 {offsets = [0, 0], sizes = [2, 32], strides = [1, 1]} : vector<2x128xf32> to vector<2x32xf32>
    %525 = arith.negf %524 : vector<2x32xf32>
    %526 = math.exp %525 : vector<2x32xf32>
    %cst_132 = arith.constant 1.000000e+00 : f32
    %527 = vector.broadcast %cst_132 : f32 to vector<2x32xf32>
    %528 = arith.addf %527, %526 : vector<2x32xf32>
    %529 = arith.divf %527, %528 : vector<2x32xf32>
    %530 = vector.extract_strided_slice %522 {offsets = [0, 32], sizes = [2, 32], strides = [1, 1]} : vector<2x128xf32> to vector<2x32xf32>
    %531 = arith.negf %530 : vector<2x32xf32>
    %532 = math.exp %531 : vector<2x32xf32>
    %cst_133 = arith.constant 1.000000e+00 : f32
    %533 = vector.broadcast %cst_133 : f32 to vector<2x32xf32>
    %534 = arith.addf %533, %532 : vector<2x32xf32>
    %535 = arith.divf %533, %534 : vector<2x32xf32>
    %536 = vector.extract_strided_slice %522 {offsets = [0, 64], sizes = [2, 32], strides = [1, 1]} : vector<2x128xf32> to vector<2x32xf32>
    %537 = math.tanh %536 : vector<2x32xf32>
    %538 = vector.extract_strided_slice %522 {offsets = [0, 96], sizes = [2, 32], strides = [1, 1]} : vector<2x128xf32> to vector<2x32xf32>
    %539 = arith.negf %538 : vector<2x32xf32>
    %540 = math.exp %539 : vector<2x32xf32>
    %cst_134 = arith.constant 1.000000e+00 : f32
    %541 = vector.broadcast %cst_134 : f32 to vector<2x32xf32>
    %542 = arith.addf %541, %540 : vector<2x32xf32>
    %543 = arith.divf %541, %542 : vector<2x32xf32>
    %544 = arith.mulf %535, %523 : vector<2x32xf32>
    %545 = arith.mulf %529, %537 : vector<2x32xf32>
    %546 = arith.addf %544, %545 : vector<2x32xf32>
    %547 = math.tanh %546 : vector<2x32xf32>
    %548 = arith.mulf %543, %547 : vector<2x32xf32>
    %549 = tpu.concatenate %519, %546 in 1 : vector<2x32xf32>, vector<2x32xf32> -> vector<2x64xf32>
    %550 = tpu.concatenate %521, %548 in 1 : vector<2x32xf32>, vector<2x32xf32> -> vector<2x64xf32>
    %c7_i32_135 = arith.constant 7 : i32
    %c7_i32_136 = arith.constant 7 : i32
    %551 = arith.subi %c7_i32_136, %c7_i32_135 : i32
    %552 = arith.index_cast %c7_i32_135 : i32 to index
    %c0_137 = arith.constant 0 : index
    %c0_138 = arith.constant 0 : index
    %553 = vector.load %arg7[%552, %c0_137, %c0_138] : memref<8x2x256xf32, #tpu.memory_space<vmem>>, vector<1x2x128xf32>
    %554 = vector.shape_cast %553 : vector<1x2x128xf32> to vector<2x128xf32>
    %555 = arith.index_cast %551 : i32 to index
    %c0_139 = arith.constant 0 : index
    %c128_140 = arith.constant 128 : index
    %556 = vector.load %arg7[%555, %c0_139, %c128_140] : memref<8x2x256xf32, #tpu.memory_space<vmem>>, vector<1x2x128xf32>
    %557 = vector.shape_cast %556 : vector<1x2x128xf32> to vector<2x128xf32>
    %558 = tpu.concatenate %554, %557 in 1 : vector<2x128xf32>, vector<2x128xf32> -> vector<2x256xf32>
    %559 = arith.truncf %550 : vector<2x64xf32> to vector<2x64xbf16>
    %cst_141 = arith.constant dense<0.000000e+00> : vector<2x256xf32>
    %560 = tpu.matmul %559, %82, %cst_141 {dimension_numbers = #tpu.dot_dimension_numbers<[1], [0], [0], [1], [0, 0, 1, 1], [], []>} : vector<2x64xbf16>, vector<64x256xbf16>, vector<2x256xf32> -> vector<2x256xf32>
    %561 = arith.addf %558, %560 : vector<2x256xf32>
    %562 = vector.extract_strided_slice %561 {offsets = [0, 0], sizes = [2, 128], strides = [1, 1]} : vector<2x256xf32> to vector<2x128xf32>
    %563 = vector.extract_strided_slice %549 {offsets = [0, 0], sizes = [2, 32], strides = [1, 1]} : vector<2x64xf32> to vector<2x32xf32>
    %564 = vector.extract_strided_slice %562 {offsets = [0, 0], sizes = [2, 32], strides = [1, 1]} : vector<2x128xf32> to vector<2x32xf32>
    %565 = arith.negf %564 : vector<2x32xf32>
    %566 = math.exp %565 : vector<2x32xf32>
    %cst_142 = arith.constant 1.000000e+00 : f32
    %567 = vector.broadcast %cst_142 : f32 to vector<2x32xf32>
    %568 = arith.addf %567, %566 : vector<2x32xf32>
    %569 = arith.divf %567, %568 : vector<2x32xf32>
    %570 = vector.extract_strided_slice %562 {offsets = [0, 32], sizes = [2, 32], strides = [1, 1]} : vector<2x128xf32> to vector<2x32xf32>
    %571 = arith.negf %570 : vector<2x32xf32>
    %572 = math.exp %571 : vector<2x32xf32>
    %cst_143 = arith.constant 1.000000e+00 : f32
    %573 = vector.broadcast %cst_143 : f32 to vector<2x32xf32>
    %574 = arith.addf %573, %572 : vector<2x32xf32>
    %575 = arith.divf %573, %574 : vector<2x32xf32>
    %576 = vector.extract_strided_slice %562 {offsets = [0, 64], sizes = [2, 32], strides = [1, 1]} : vector<2x128xf32> to vector<2x32xf32>
    %577 = math.tanh %576 : vector<2x32xf32>
    %578 = vector.extract_strided_slice %562 {offsets = [0, 96], sizes = [2, 32], strides = [1, 1]} : vector<2x128xf32> to vector<2x32xf32>
    %579 = arith.negf %578 : vector<2x32xf32>
    %580 = math.exp %579 : vector<2x32xf32>
    %cst_144 = arith.constant 1.000000e+00 : f32
    %581 = vector.broadcast %cst_144 : f32 to vector<2x32xf32>
    %582 = arith.addf %581, %580 : vector<2x32xf32>
    %583 = arith.divf %581, %582 : vector<2x32xf32>
    %584 = arith.mulf %575, %563 : vector<2x32xf32>
    %585 = arith.mulf %569, %577 : vector<2x32xf32>
    %586 = arith.addf %584, %585 : vector<2x32xf32>
    %587 = math.tanh %586 : vector<2x32xf32>
    %588 = arith.mulf %583, %587 : vector<2x32xf32>
    %589 = vector.extract_strided_slice %561 {offsets = [0, 128], sizes = [2, 128], strides = [1, 1]} : vector<2x256xf32> to vector<2x128xf32>
    %590 = vector.extract_strided_slice %549 {offsets = [0, 32], sizes = [2, 32], strides = [1, 1]} : vector<2x64xf32> to vector<2x32xf32>
    %591 = vector.extract_strided_slice %589 {offsets = [0, 0], sizes = [2, 32], strides = [1, 1]} : vector<2x128xf32> to vector<2x32xf32>
    %592 = arith.negf %591 : vector<2x32xf32>
    %593 = math.exp %592 : vector<2x32xf32>
    %cst_145 = arith.constant 1.000000e+00 : f32
    %594 = vector.broadcast %cst_145 : f32 to vector<2x32xf32>
    %595 = arith.addf %594, %593 : vector<2x32xf32>
    %596 = arith.divf %594, %595 : vector<2x32xf32>
    %597 = vector.extract_strided_slice %589 {offsets = [0, 32], sizes = [2, 32], strides = [1, 1]} : vector<2x128xf32> to vector<2x32xf32>
    %598 = arith.negf %597 : vector<2x32xf32>
    %599 = math.exp %598 : vector<2x32xf32>
    %cst_146 = arith.constant 1.000000e+00 : f32
    %600 = vector.broadcast %cst_146 : f32 to vector<2x32xf32>
    %601 = arith.addf %600, %599 : vector<2x32xf32>
    %602 = arith.divf %600, %601 : vector<2x32xf32>
    %603 = vector.extract_strided_slice %589 {offsets = [0, 64], sizes = [2, 32], strides = [1, 1]} : vector<2x128xf32> to vector<2x32xf32>
    %604 = math.tanh %603 : vector<2x32xf32>
    %605 = vector.extract_strided_slice %589 {offsets = [0, 96], sizes = [2, 32], strides = [1, 1]} : vector<2x128xf32> to vector<2x32xf32>
    %606 = arith.negf %605 : vector<2x32xf32>
    %607 = math.exp %606 : vector<2x32xf32>
    %cst_147 = arith.constant 1.000000e+00 : f32
    %608 = vector.broadcast %cst_147 : f32 to vector<2x32xf32>
    %609 = arith.addf %608, %607 : vector<2x32xf32>
    %610 = arith.divf %608, %609 : vector<2x32xf32>
    %611 = arith.mulf %602, %590 : vector<2x32xf32>
    %612 = arith.mulf %596, %604 : vector<2x32xf32>
    %613 = arith.addf %611, %612 : vector<2x32xf32>
    %614 = math.tanh %613 : vector<2x32xf32>
    %615 = arith.mulf %610, %614 : vector<2x32xf32>
    %616 = tpu.concatenate %586, %613 in 1 : vector<2x32xf32>, vector<2x32xf32> -> vector<2x64xf32>
    %617 = tpu.concatenate %588, %615 in 1 : vector<2x32xf32>, vector<2x32xf32> -> vector<2x64xf32>
    %c7_i32_148 = arith.constant 7 : i32
    %618 = vector.extract_strided_slice %617 {offsets = [0, 32], sizes = [2, 32], strides = [1, 1]} : vector<2x64xf32> to vector<2x32xf32>
    %619 = vector.extract_strided_slice %617 {offsets = [0, 0], sizes = [2, 32], strides = [1, 1]} : vector<2x64xf32> to vector<2x32xf32>
    %620 = tpu.concatenate %119, %618, %619, %146 in 1 : vector<2x32xf32>, vector<2x32xf32>, vector<2x32xf32>, vector<2x32xf32> -> vector<2x128xf32>
    %621 = arith.truncf %620 : vector<2x128xf32> to vector<2x128xbf16>
    %c0_149 = arith.constant 0 : index
    %c0_150 = arith.constant 0 : index
    %622 = vector.load %arg4[%c0_149, %c0_150] : memref<128x128xbf16, #tpu.memory_space<vmem>>, vector<128x128xbf16>
    %cst_151 = arith.constant dense<0.000000e+00> : vector<2x128xf32>
    %623 = tpu.matmul %621, %622, %cst_151 {dimension_numbers = #tpu.dot_dimension_numbers<[1], [0], [0], [1], [0, 0, 1, 1], [], []>} : vector<2x128xbf16>, vector<128x128xbf16>, vector<2x128xf32> -> vector<2x128xf32>
    %c0_152 = arith.constant 0 : index
    %c0_153 = arith.constant 0 : index
    %624 = vector.load %arg5[%c0_152, %c0_153] : memref<1x128xf32, #tpu.memory_space<vmem>>, vector<1x128xf32>
    %625 = vector.broadcast %624 : vector<1x128xf32> to vector<2x128xf32>
    %626 = arith.addf %623, %625 : vector<2x128xf32>
    %c0_154 = arith.constant 0 : index
    %c0_155 = arith.constant 0 : index
    %627 = vector.load %arg6[%c0_154, %c0_155] : memref<2x128xf32, #tpu.memory_space<vmem>>, vector<2x128xf32>
    tpu.vector_store %arg6[%c0_154, %c0_155], %626 {strides = array<i32>} : memref<2x128xf32, #tpu.memory_space<vmem>>, vector<2x128xf32>,
    return
  }
}

module attributes {stable_mosaic.version = 11 : i64} {
  func.func @bilstm_layer_kernel(%arg0: memref<8x2x16xbf16, #tpu.memory_space<vmem>>, %arg1: memref<16x256xbf16, #tpu.memory_space<vmem>>, %arg2: memref<64x256xbf16, #tpu.memory_space<vmem>>, %arg3: memref<1x256xf32, #tpu.memory_space<vmem>>, %arg4: memref<8x2x64xbf16, #tpu.memory_space<vmem>>, %arg5: memref<8x2x256xf32, #tpu.memory_space<vmem>>) attributes {dimension_semantics = [], scalar_prefetch = 0 : i64, scratch_operands = 1 : i64, tpu.core_type = #tpu.core_type<tc>} {
    %c0 = arith.constant 0 : index
    %c0_0 = arith.constant 0 : index
    %0 = vector.load %arg1[%c0, %c0_0] : memref<16x256xbf16, #tpu.memory_space<vmem>>, vector<16x256xbf16>
    %c0_1 = arith.constant 0 : index
    %c0_2 = arith.constant 0 : index
    %1 = vector.load %arg3[%c0_1, %c0_2] : memref<1x256xf32, #tpu.memory_space<vmem>>, vector<1x256xf32>
    %c0_i32 = arith.constant 0 : i32
    %2 = arith.index_cast %c0_i32 : i32 to index
    %c0_3 = arith.constant 0 : index
    %c0_4 = arith.constant 0 : index
    %3 = vector.load %arg0[%2, %c0_3, %c0_4] : memref<8x2x16xbf16, #tpu.memory_space<vmem>>, vector<1x2x16xbf16>
    %4 = vector.shape_cast %3 : vector<1x2x16xbf16> to vector<2x16xbf16>
    %cst = arith.constant dense<0.000000e+00> : vector<2x256xf32>
    %5 = tpu.matmul %4, %0, %cst {dimension_numbers = #tpu.dot_dimension_numbers<[1], [0], [0], [1], [0, 0, 1, 1], [], []>} : vector<2x16xbf16>, vector<16x256xbf16>, vector<2x256xf32> -> vector<2x256xf32>
    %6 = vector.broadcast %1 : vector<1x256xf32> to vector<2x256xf32>
    %7 = arith.addf %5, %6 : vector<2x256xf32>
    %8 = arith.index_cast %c0_i32 : i32 to index
    %c0_5 = arith.constant 0 : index
    %c0_6 = arith.constant 0 : index
    %9 = vector.load %arg5[%8, %c0_5, %c0_6] : memref<8x2x256xf32, #tpu.memory_space<vmem>>, vector<1x2x256xf32>
    %10 = vector.shape_cast %9 : vector<1x2x256xf32> to vector<2x256xf32>
    %11 = vector.shape_cast %7 : vector<2x256xf32> to vector<1x2x256xf32>
    tpu.vector_store %arg5[%8, %c0_5, %c0_6], %11 {strides = array<i32>} : memref<8x2x256xf32, #tpu.memory_space<vmem>>, vector<1x2x256xf32>,
    %c1_i32 = arith.constant 1 : i32
    %12 = arith.index_cast %c1_i32 : i32 to index
    %c0_7 = arith.constant 0 : index
    %c0_8 = arith.constant 0 : index
    %13 = vector.load %arg0[%12, %c0_7, %c0_8] : memref<8x2x16xbf16, #tpu.memory_space<vmem>>, vector<1x2x16xbf16>
    %14 = vector.shape_cast %13 : vector<1x2x16xbf16> to vector<2x16xbf16>
    %cst_9 = arith.constant dense<0.000000e+00> : vector<2x256xf32>
    %15 = tpu.matmul %14, %0, %cst_9 {dimension_numbers = #tpu.dot_dimension_numbers<[1], [0], [0], [1], [0, 0, 1, 1], [], []>} : vector<2x16xbf16>, vector<16x256xbf16>, vector<2x256xf32> -> vector<2x256xf32>
    %16 = vector.broadcast %1 : vector<1x256xf32> to vector<2x256xf32>
    %17 = arith.addf %15, %16 : vector<2x256xf32>
    %18 = arith.index_cast %c1_i32 : i32 to index
    %c0_10 = arith.constant 0 : index
    %c0_11 = arith.constant 0 : index
    %19 = vector.load %arg5[%18, %c0_10, %c0_11] : memref<8x2x256xf32, #tpu.memory_space<vmem>>, vector<1x2x256xf32>
    %20 = vector.shape_cast %19 : vector<1x2x256xf32> to vector<2x256xf32>
    %21 = vector.shape_cast %17 : vector<2x256xf32> to vector<1x2x256xf32>
    tpu.vector_store %arg5[%18, %c0_10, %c0_11], %21 {strides = array<i32>} : memref<8x2x256xf32, #tpu.memory_space<vmem>>, vector<1x2x256xf32>,
    %c2_i32 = arith.constant 2 : i32
    %22 = arith.index_cast %c2_i32 : i32 to index
    %c0_12 = arith.constant 0 : index
    %c0_13 = arith.constant 0 : index
    %23 = vector.load %arg0[%22, %c0_12, %c0_13] : memref<8x2x16xbf16, #tpu.memory_space<vmem>>, vector<1x2x16xbf16>
    %24 = vector.shape_cast %23 : vector<1x2x16xbf16> to vector<2x16xbf16>
    %cst_14 = arith.constant dense<0.000000e+00> : vector<2x256xf32>
    %25 = tpu.matmul %24, %0, %cst_14 {dimension_numbers = #tpu.dot_dimension_numbers<[1], [0], [0], [1], [0, 0, 1, 1], [], []>} : vector<2x16xbf16>, vector<16x256xbf16>, vector<2x256xf32> -> vector<2x256xf32>
    %26 = vector.broadcast %1 : vector<1x256xf32> to vector<2x256xf32>
    %27 = arith.addf %25, %26 : vector<2x256xf32>
    %28 = arith.index_cast %c2_i32 : i32 to index
    %c0_15 = arith.constant 0 : index
    %c0_16 = arith.constant 0 : index
    %29 = vector.load %arg5[%28, %c0_15, %c0_16] : memref<8x2x256xf32, #tpu.memory_space<vmem>>, vector<1x2x256xf32>
    %30 = vector.shape_cast %29 : vector<1x2x256xf32> to vector<2x256xf32>
    %31 = vector.shape_cast %27 : vector<2x256xf32> to vector<1x2x256xf32>
    tpu.vector_store %arg5[%28, %c0_15, %c0_16], %31 {strides = array<i32>} : memref<8x2x256xf32, #tpu.memory_space<vmem>>, vector<1x2x256xf32>,
    %c3_i32 = arith.constant 3 : i32
    %32 = arith.index_cast %c3_i32 : i32 to index
    %c0_17 = arith.constant 0 : index
    %c0_18 = arith.constant 0 : index
    %33 = vector.load %arg0[%32, %c0_17, %c0_18] : memref<8x2x16xbf16, #tpu.memory_space<vmem>>, vector<1x2x16xbf16>
    %34 = vector.shape_cast %33 : vector<1x2x16xbf16> to vector<2x16xbf16>
    %cst_19 = arith.constant dense<0.000000e+00> : vector<2x256xf32>
    %35 = tpu.matmul %34, %0, %cst_19 {dimension_numbers = #tpu.dot_dimension_numbers<[1], [0], [0], [1], [0, 0, 1, 1], [], []>} : vector<2x16xbf16>, vector<16x256xbf16>, vector<2x256xf32> -> vector<2x256xf32>
    %36 = vector.broadcast %1 : vector<1x256xf32> to vector<2x256xf32>
    %37 = arith.addf %35, %36 : vector<2x256xf32>
    %38 = arith.index_cast %c3_i32 : i32 to index
    %c0_20 = arith.constant 0 : index
    %c0_21 = arith.constant 0 : index
    %39 = vector.load %arg5[%38, %c0_20, %c0_21] : memref<8x2x256xf32, #tpu.memory_space<vmem>>, vector<1x2x256xf32>
    %40 = vector.shape_cast %39 : vector<1x2x256xf32> to vector<2x256xf32>
    %41 = vector.shape_cast %37 : vector<2x256xf32> to vector<1x2x256xf32>
    tpu.vector_store %arg5[%38, %c0_20, %c0_21], %41 {strides = array<i32>} : memref<8x2x256xf32, #tpu.memory_space<vmem>>, vector<1x2x256xf32>,
    %c4_i32 = arith.constant 4 : i32
    %42 = arith.index_cast %c4_i32 : i32 to index
    %c0_22 = arith.constant 0 : index
    %c0_23 = arith.constant 0 : index
    %43 = vector.load %arg0[%42, %c0_22, %c0_23] : memref<8x2x16xbf16, #tpu.memory_space<vmem>>, vector<1x2x16xbf16>
    %44 = vector.shape_cast %43 : vector<1x2x16xbf16> to vector<2x16xbf16>
    %cst_24 = arith.constant dense<0.000000e+00> : vector<2x256xf32>
    %45 = tpu.matmul %44, %0, %cst_24 {dimension_numbers = #tpu.dot_dimension_numbers<[1], [0], [0], [1], [0, 0, 1, 1], [], []>} : vector<2x16xbf16>, vector<16x256xbf16>, vector<2x256xf32> -> vector<2x256xf32>
    %46 = vector.broadcast %1 : vector<1x256xf32> to vector<2x256xf32>
    %47 = arith.addf %45, %46 : vector<2x256xf32>
    %48 = arith.index_cast %c4_i32 : i32 to index
    %c0_25 = arith.constant 0 : index
    %c0_26 = arith.constant 0 : index
    %49 = vector.load %arg5[%48, %c0_25, %c0_26] : memref<8x2x256xf32, #tpu.memory_space<vmem>>, vector<1x2x256xf32>
    %50 = vector.shape_cast %49 : vector<1x2x256xf32> to vector<2x256xf32>
    %51 = vector.shape_cast %47 : vector<2x256xf32> to vector<1x2x256xf32>
    tpu.vector_store %arg5[%48, %c0_25, %c0_26], %51 {strides = array<i32>} : memref<8x2x256xf32, #tpu.memory_space<vmem>>, vector<1x2x256xf32>,
    %c5_i32 = arith.constant 5 : i32
    %52 = arith.index_cast %c5_i32 : i32 to index
    %c0_27 = arith.constant 0 : index
    %c0_28 = arith.constant 0 : index
    %53 = vector.load %arg0[%52, %c0_27, %c0_28] : memref<8x2x16xbf16, #tpu.memory_space<vmem>>, vector<1x2x16xbf16>
    %54 = vector.shape_cast %53 : vector<1x2x16xbf16> to vector<2x16xbf16>
    %cst_29 = arith.constant dense<0.000000e+00> : vector<2x256xf32>
    %55 = tpu.matmul %54, %0, %cst_29 {dimension_numbers = #tpu.dot_dimension_numbers<[1], [0], [0], [1], [0, 0, 1, 1], [], []>} : vector<2x16xbf16>, vector<16x256xbf16>, vector<2x256xf32> -> vector<2x256xf32>
    %56 = vector.broadcast %1 : vector<1x256xf32> to vector<2x256xf32>
    %57 = arith.addf %55, %56 : vector<2x256xf32>
    %58 = arith.index_cast %c5_i32 : i32 to index
    %c0_30 = arith.constant 0 : index
    %c0_31 = arith.constant 0 : index
    %59 = vector.load %arg5[%58, %c0_30, %c0_31] : memref<8x2x256xf32, #tpu.memory_space<vmem>>, vector<1x2x256xf32>
    %60 = vector.shape_cast %59 : vector<1x2x256xf32> to vector<2x256xf32>
    %61 = vector.shape_cast %57 : vector<2x256xf32> to vector<1x2x256xf32>
    tpu.vector_store %arg5[%58, %c0_30, %c0_31], %61 {strides = array<i32>} : memref<8x2x256xf32, #tpu.memory_space<vmem>>, vector<1x2x256xf32>,
    %c6_i32 = arith.constant 6 : i32
    %62 = arith.index_cast %c6_i32 : i32 to index
    %c0_32 = arith.constant 0 : index
    %c0_33 = arith.constant 0 : index
    %63 = vector.load %arg0[%62, %c0_32, %c0_33] : memref<8x2x16xbf16, #tpu.memory_space<vmem>>, vector<1x2x16xbf16>
    %64 = vector.shape_cast %63 : vector<1x2x16xbf16> to vector<2x16xbf16>
    %cst_34 = arith.constant dense<0.000000e+00> : vector<2x256xf32>
    %65 = tpu.matmul %64, %0, %cst_34 {dimension_numbers = #tpu.dot_dimension_numbers<[1], [0], [0], [1], [0, 0, 1, 1], [], []>} : vector<2x16xbf16>, vector<16x256xbf16>, vector<2x256xf32> -> vector<2x256xf32>
    %66 = vector.broadcast %1 : vector<1x256xf32> to vector<2x256xf32>
    %67 = arith.addf %65, %66 : vector<2x256xf32>
    %68 = arith.index_cast %c6_i32 : i32 to index
    %c0_35 = arith.constant 0 : index
    %c0_36 = arith.constant 0 : index
    %69 = vector.load %arg5[%68, %c0_35, %c0_36] : memref<8x2x256xf32, #tpu.memory_space<vmem>>, vector<1x2x256xf32>
    %70 = vector.shape_cast %69 : vector<1x2x256xf32> to vector<2x256xf32>
    %71 = vector.shape_cast %67 : vector<2x256xf32> to vector<1x2x256xf32>
    tpu.vector_store %arg5[%68, %c0_35, %c0_36], %71 {strides = array<i32>} : memref<8x2x256xf32, #tpu.memory_space<vmem>>, vector<1x2x256xf32>,
    %c7_i32 = arith.constant 7 : i32
    %72 = arith.index_cast %c7_i32 : i32 to index
    %c0_37 = arith.constant 0 : index
    %c0_38 = arith.constant 0 : index
    %73 = vector.load %arg0[%72, %c0_37, %c0_38] : memref<8x2x16xbf16, #tpu.memory_space<vmem>>, vector<1x2x16xbf16>
    %74 = vector.shape_cast %73 : vector<1x2x16xbf16> to vector<2x16xbf16>
    %cst_39 = arith.constant dense<0.000000e+00> : vector<2x256xf32>
    %75 = tpu.matmul %74, %0, %cst_39 {dimension_numbers = #tpu.dot_dimension_numbers<[1], [0], [0], [1], [0, 0, 1, 1], [], []>} : vector<2x16xbf16>, vector<16x256xbf16>, vector<2x256xf32> -> vector<2x256xf32>
    %76 = vector.broadcast %1 : vector<1x256xf32> to vector<2x256xf32>
    %77 = arith.addf %75, %76 : vector<2x256xf32>
    %78 = arith.index_cast %c7_i32 : i32 to index
    %c0_40 = arith.constant 0 : index
    %c0_41 = arith.constant 0 : index
    %79 = vector.load %arg5[%78, %c0_40, %c0_41] : memref<8x2x256xf32, #tpu.memory_space<vmem>>, vector<1x2x256xf32>
    %80 = vector.shape_cast %79 : vector<1x2x256xf32> to vector<2x256xf32>
    %81 = vector.shape_cast %77 : vector<2x256xf32> to vector<1x2x256xf32>
    tpu.vector_store %arg5[%78, %c0_40, %c0_41], %81 {strides = array<i32>} : memref<8x2x256xf32, #tpu.memory_space<vmem>>, vector<1x2x256xf32>,
    %c8_i32 = arith.constant 8 : i32
    %c0_42 = arith.constant 0 : index
    %c0_43 = arith.constant 0 : index
    %82 = vector.load %arg2[%c0_42, %c0_43] : memref<64x256xbf16, #tpu.memory_space<vmem>>, vector<64x256xbf16>
    %cst_44 = arith.constant 0.000000e+00 : f32
    %83 = vector.broadcast %cst_44 : f32 to vector<2x64xf32>
    %cst_45 = arith.constant 0.000000e+00 : f32
    %84 = vector.broadcast %cst_45 : f32 to vector<2x64xf32>
    %c0_i32_46 = arith.constant 0 : i32
    %c7_i32_47 = arith.constant 7 : i32
    %85 = arith.subi %c7_i32_47, %c0_i32_46 : i32
    %86 = arith.index_cast %c0_i32_46 : i32 to index
    %c0_48 = arith.constant 0 : index
    %c0_49 = arith.constant 0 : index
    %87 = vector.load %arg5[%86, %c0_48, %c0_49] : memref<8x2x256xf32, #tpu.memory_space<vmem>>, vector<1x2x128xf32>
    %88 = vector.shape_cast %87 : vector<1x2x128xf32> to vector<2x128xf32>
    %89 = arith.index_cast %85 : i32 to index
    %c0_50 = arith.constant 0 : index
    %c128 = arith.constant 128 : index
    %90 = vector.load %arg5[%89, %c0_50, %c128] : memref<8x2x256xf32, #tpu.memory_space<vmem>>, vector<1x2x128xf32>
    %91 = vector.shape_cast %90 : vector<1x2x128xf32> to vector<2x128xf32>
    %92 = tpu.concatenate %88, %91 in 1 : vector<2x128xf32>, vector<2x128xf32> -> vector<2x256xf32>
    %93 = arith.truncf %83 : vector<2x64xf32> to vector<2x64xbf16>
    %cst_51 = arith.constant dense<0.000000e+00> : vector<2x256xf32>
    %94 = tpu.matmul %93, %82, %cst_51 {dimension_numbers = #tpu.dot_dimension_numbers<[1], [0], [0], [1], [0, 0, 1, 1], [], []>} : vector<2x64xbf16>, vector<64x256xbf16>, vector<2x256xf32> -> vector<2x256xf32>
    %95 = arith.addf %92, %94 : vector<2x256xf32>
    %96 = vector.extract_strided_slice %95 {offsets = [0, 0], sizes = [2, 128], strides = [1, 1]} : vector<2x256xf32> to vector<2x128xf32>
    %97 = vector.extract_strided_slice %84 {offsets = [0, 0], sizes = [2, 32], strides = [1, 1]} : vector<2x64xf32> to vector<2x32xf32>
    %98 = vector.extract_strided_slice %96 {offsets = [0, 0], sizes = [2, 32], strides = [1, 1]} : vector<2x128xf32> to vector<2x32xf32>
    %99 = arith.negf %98 : vector<2x32xf32>
    %100 = math.exp %99 : vector<2x32xf32>
    %cst_52 = arith.constant 1.000000e+00 : f32
    %101 = vector.broadcast %cst_52 : f32 to vector<2x32xf32>
    %102 = arith.addf %101, %100 : vector<2x32xf32>
    %103 = arith.divf %101, %102 : vector<2x32xf32>
    %104 = vector.extract_strided_slice %96 {offsets = [0, 32], sizes = [2, 32], strides = [1, 1]} : vector<2x128xf32> to vector<2x32xf32>
    %105 = arith.negf %104 : vector<2x32xf32>
    %106 = math.exp %105 : vector<2x32xf32>
    %cst_53 = arith.constant 1.000000e+00 : f32
    %107 = vector.broadcast %cst_53 : f32 to vector<2x32xf32>
    %108 = arith.addf %107, %106 : vector<2x32xf32>
    %109 = arith.divf %107, %108 : vector<2x32xf32>
    %110 = vector.extract_strided_slice %96 {offsets = [0, 64], sizes = [2, 32], strides = [1, 1]} : vector<2x128xf32> to vector<2x32xf32>
    %111 = math.tanh %110 : vector<2x32xf32>
    %112 = vector.extract_strided_slice %96 {offsets = [0, 96], sizes = [2, 32], strides = [1, 1]} : vector<2x128xf32> to vector<2x32xf32>
    %113 = arith.negf %112 : vector<2x32xf32>
    %114 = math.exp %113 : vector<2x32xf32>
    %cst_54 = arith.constant 1.000000e+00 : f32
    %115 = vector.broadcast %cst_54 : f32 to vector<2x32xf32>
    %116 = arith.addf %115, %114 : vector<2x32xf32>
    %117 = arith.divf %115, %116 : vector<2x32xf32>
    %118 = arith.mulf %109, %97 : vector<2x32xf32>
    %119 = arith.mulf %103, %111 : vector<2x32xf32>
    %120 = arith.addf %118, %119 : vector<2x32xf32>
    %121 = math.tanh %120 : vector<2x32xf32>
    %122 = arith.mulf %117, %121 : vector<2x32xf32>
    %123 = vector.extract_strided_slice %95 {offsets = [0, 128], sizes = [2, 128], strides = [1, 1]} : vector<2x256xf32> to vector<2x128xf32>
    %124 = vector.extract_strided_slice %84 {offsets = [0, 32], sizes = [2, 32], strides = [1, 1]} : vector<2x64xf32> to vector<2x32xf32>
    %125 = vector.extract_strided_slice %123 {offsets = [0, 0], sizes = [2, 32], strides = [1, 1]} : vector<2x128xf32> to vector<2x32xf32>
    %126 = arith.negf %125 : vector<2x32xf32>
    %127 = math.exp %126 : vector<2x32xf32>
    %cst_55 = arith.constant 1.000000e+00 : f32
    %128 = vector.broadcast %cst_55 : f32 to vector<2x32xf32>
    %129 = arith.addf %128, %127 : vector<2x32xf32>
    %130 = arith.divf %128, %129 : vector<2x32xf32>
    %131 = vector.extract_strided_slice %123 {offsets = [0, 32], sizes = [2, 32], strides = [1, 1]} : vector<2x128xf32> to vector<2x32xf32>
    %132 = arith.negf %131 : vector<2x32xf32>
    %133 = math.exp %132 : vector<2x32xf32>
    %cst_56 = arith.constant 1.000000e+00 : f32
    %134 = vector.broadcast %cst_56 : f32 to vector<2x32xf32>
    %135 = arith.addf %134, %133 : vector<2x32xf32>
    %136 = arith.divf %134, %135 : vector<2x32xf32>
    %137 = vector.extract_strided_slice %123 {offsets = [0, 64], sizes = [2, 32], strides = [1, 1]} : vector<2x128xf32> to vector<2x32xf32>
    %138 = math.tanh %137 : vector<2x32xf32>
    %139 = vector.extract_strided_slice %123 {offsets = [0, 96], sizes = [2, 32], strides = [1, 1]} : vector<2x128xf32> to vector<2x32xf32>
    %140 = arith.negf %139 : vector<2x32xf32>
    %141 = math.exp %140 : vector<2x32xf32>
    %cst_57 = arith.constant 1.000000e+00 : f32
    %142 = vector.broadcast %cst_57 : f32 to vector<2x32xf32>
    %143 = arith.addf %142, %141 : vector<2x32xf32>
    %144 = arith.divf %142, %143 : vector<2x32xf32>
    %145 = arith.mulf %136, %124 : vector<2x32xf32>
    %146 = arith.mulf %130, %138 : vector<2x32xf32>
    %147 = arith.addf %145, %146 : vector<2x32xf32>
    %148 = math.tanh %147 : vector<2x32xf32>
    %149 = arith.mulf %144, %148 : vector<2x32xf32>
    %150 = tpu.concatenate %120, %147 in 1 : vector<2x32xf32>, vector<2x32xf32> -> vector<2x64xf32>
    %151 = arith.truncf %122 : vector<2x32xf32> to vector<2x32xbf16>
    %152 = arith.index_cast %c0_i32_46 : i32 to index
    %c0_58 = arith.constant 0 : index
    %c0_59 = arith.constant 0 : index
    %153 = vector.load %arg4[%152, %c0_58, %c0_59] : memref<8x2x64xbf16, #tpu.memory_space<vmem>>, vector<1x2x32xbf16>
    %154 = vector.shape_cast %153 : vector<1x2x32xbf16> to vector<2x32xbf16>
    %155 = vector.shape_cast %151 : vector<2x32xbf16> to vector<1x2x32xbf16>
    tpu.vector_store %arg4[%152, %c0_58, %c0_59], %155 {strides = array<i32>} : memref<8x2x64xbf16, #tpu.memory_space<vmem>>, vector<1x2x32xbf16>,
    %156 = arith.truncf %149 : vector<2x32xf32> to vector<2x32xbf16>
    %157 = arith.index_cast %85 : i32 to index
    %c0_60 = arith.constant 0 : index
    %c32 = arith.constant 32 : index
    %158 = vector.load %arg4[%157, %c0_60, %c32] : memref<8x2x64xbf16, #tpu.memory_space<vmem>>, vector<1x2x32xbf16>
    %159 = vector.shape_cast %158 : vector<1x2x32xbf16> to vector<2x32xbf16>
    %160 = vector.shape_cast %156 : vector<2x32xbf16> to vector<1x2x32xbf16>
    tpu.vector_store %arg4[%157, %c0_60, %c32], %160 {strides = array<i32>} : memref<8x2x64xbf16, #tpu.memory_space<vmem>>, vector<1x2x32xbf16>,
    %161 = tpu.concatenate %122, %149 in 1 : vector<2x32xf32>, vector<2x32xf32> -> vector<2x64xf32>
    %c1_i32_61 = arith.constant 1 : i32
    %c7_i32_62 = arith.constant 7 : i32
    %162 = arith.subi %c7_i32_62, %c1_i32_61 : i32
    %163 = arith.index_cast %c1_i32_61 : i32 to index
    %c0_63 = arith.constant 0 : index
    %c0_64 = arith.constant 0 : index
    %164 = vector.load %arg5[%163, %c0_63, %c0_64] : memref<8x2x256xf32, #tpu.memory_space<vmem>>, vector<1x2x128xf32>
    %165 = vector.shape_cast %164 : vector<1x2x128xf32> to vector<2x128xf32>
    %166 = arith.index_cast %162 : i32 to index
    %c0_65 = arith.constant 0 : index
    %c128_66 = arith.constant 128 : index
    %167 = vector.load %arg5[%166, %c0_65, %c128_66] : memref<8x2x256xf32, #tpu.memory_space<vmem>>, vector<1x2x128xf32>
    %168 = vector.shape_cast %167 : vector<1x2x128xf32> to vector<2x128xf32>
    %169 = tpu.concatenate %165, %168 in 1 : vector<2x128xf32>, vector<2x128xf32> -> vector<2x256xf32>
    %170 = arith.truncf %161 : vector<2x64xf32> to vector<2x64xbf16>
    %cst_67 = arith.constant dense<0.000000e+00> : vector<2x256xf32>
    %171 = tpu.matmul %170, %82, %cst_67 {dimension_numbers = #tpu.dot_dimension_numbers<[1], [0], [0], [1], [0, 0, 1, 1], [], []>} : vector<2x64xbf16>, vector<64x256xbf16>, vector<2x256xf32> -> vector<2x256xf32>
    %172 = arith.addf %169, %171 : vector<2x256xf32>
    %173 = vector.extract_strided_slice %172 {offsets = [0, 0], sizes = [2, 128], strides = [1, 1]} : vector<2x256xf32> to vector<2x128xf32>
    %174 = vector.extract_strided_slice %150 {offsets = [0, 0], sizes = [2, 32], strides = [1, 1]} : vector<2x64xf32> to vector<2x32xf32>
    %175 = vector.extract_strided_slice %173 {offsets = [0, 0], sizes = [2, 32], strides = [1, 1]} : vector<2x128xf32> to vector<2x32xf32>
    %176 = arith.negf %175 : vector<2x32xf32>
    %177 = math.exp %176 : vector<2x32xf32>
    %cst_68 = arith.constant 1.000000e+00 : f32
    %178 = vector.broadcast %cst_68 : f32 to vector<2x32xf32>
    %179 = arith.addf %178, %177 : vector<2x32xf32>
    %180 = arith.divf %178, %179 : vector<2x32xf32>
    %181 = vector.extract_strided_slice %173 {offsets = [0, 32], sizes = [2, 32], strides = [1, 1]} : vector<2x128xf32> to vector<2x32xf32>
    %182 = arith.negf %181 : vector<2x32xf32>
    %183 = math.exp %182 : vector<2x32xf32>
    %cst_69 = arith.constant 1.000000e+00 : f32
    %184 = vector.broadcast %cst_69 : f32 to vector<2x32xf32>
    %185 = arith.addf %184, %183 : vector<2x32xf32>
    %186 = arith.divf %184, %185 : vector<2x32xf32>
    %187 = vector.extract_strided_slice %173 {offsets = [0, 64], sizes = [2, 32], strides = [1, 1]} : vector<2x128xf32> to vector<2x32xf32>
    %188 = math.tanh %187 : vector<2x32xf32>
    %189 = vector.extract_strided_slice %173 {offsets = [0, 96], sizes = [2, 32], strides = [1, 1]} : vector<2x128xf32> to vector<2x32xf32>
    %190 = arith.negf %189 : vector<2x32xf32>
    %191 = math.exp %190 : vector<2x32xf32>
    %cst_70 = arith.constant 1.000000e+00 : f32
    %192 = vector.broadcast %cst_70 : f32 to vector<2x32xf32>
    %193 = arith.addf %192, %191 : vector<2x32xf32>
    %194 = arith.divf %192, %193 : vector<2x32xf32>
    %195 = arith.mulf %186, %174 : vector<2x32xf32>
    %196 = arith.mulf %180, %188 : vector<2x32xf32>
    %197 = arith.addf %195, %196 : vector<2x32xf32>
    %198 = math.tanh %197 : vector<2x32xf32>
    %199 = arith.mulf %194, %198 : vector<2x32xf32>
    %200 = vector.extract_strided_slice %172 {offsets = [0, 128], sizes = [2, 128], strides = [1, 1]} : vector<2x256xf32> to vector<2x128xf32>
    %201 = vector.extract_strided_slice %150 {offsets = [0, 32], sizes = [2, 32], strides = [1, 1]} : vector<2x64xf32> to vector<2x32xf32>
    %202 = vector.extract_strided_slice %200 {offsets = [0, 0], sizes = [2, 32], strides = [1, 1]} : vector<2x128xf32> to vector<2x32xf32>
    %203 = arith.negf %202 : vector<2x32xf32>
    %204 = math.exp %203 : vector<2x32xf32>
    %cst_71 = arith.constant 1.000000e+00 : f32
    %205 = vector.broadcast %cst_71 : f32 to vector<2x32xf32>
    %206 = arith.addf %205, %204 : vector<2x32xf32>
    %207 = arith.divf %205, %206 : vector<2x32xf32>
    %208 = vector.extract_strided_slice %200 {offsets = [0, 32], sizes = [2, 32], strides = [1, 1]} : vector<2x128xf32> to vector<2x32xf32>
    %209 = arith.negf %208 : vector<2x32xf32>
    %210 = math.exp %209 : vector<2x32xf32>
    %cst_72 = arith.constant 1.000000e+00 : f32
    %211 = vector.broadcast %cst_72 : f32 to vector<2x32xf32>
    %212 = arith.addf %211, %210 : vector<2x32xf32>
    %213 = arith.divf %211, %212 : vector<2x32xf32>
    %214 = vector.extract_strided_slice %200 {offsets = [0, 64], sizes = [2, 32], strides = [1, 1]} : vector<2x128xf32> to vector<2x32xf32>
    %215 = math.tanh %214 : vector<2x32xf32>
    %216 = vector.extract_strided_slice %200 {offsets = [0, 96], sizes = [2, 32], strides = [1, 1]} : vector<2x128xf32> to vector<2x32xf32>
    %217 = arith.negf %216 : vector<2x32xf32>
    %218 = math.exp %217 : vector<2x32xf32>
    %cst_73 = arith.constant 1.000000e+00 : f32
    %219 = vector.broadcast %cst_73 : f32 to vector<2x32xf32>
    %220 = arith.addf %219, %218 : vector<2x32xf32>
    %221 = arith.divf %219, %220 : vector<2x32xf32>
    %222 = arith.mulf %213, %201 : vector<2x32xf32>
    %223 = arith.mulf %207, %215 : vector<2x32xf32>
    %224 = arith.addf %222, %223 : vector<2x32xf32>
    %225 = math.tanh %224 : vector<2x32xf32>
    %226 = arith.mulf %221, %225 : vector<2x32xf32>
    %227 = tpu.concatenate %197, %224 in 1 : vector<2x32xf32>, vector<2x32xf32> -> vector<2x64xf32>
    %228 = arith.truncf %199 : vector<2x32xf32> to vector<2x32xbf16>
    %229 = arith.index_cast %c1_i32_61 : i32 to index
    %c0_74 = arith.constant 0 : index
    %c0_75 = arith.constant 0 : index
    %230 = vector.load %arg4[%229, %c0_74, %c0_75] : memref<8x2x64xbf16, #tpu.memory_space<vmem>>, vector<1x2x32xbf16>
    %231 = vector.shape_cast %230 : vector<1x2x32xbf16> to vector<2x32xbf16>
    %232 = vector.shape_cast %228 : vector<2x32xbf16> to vector<1x2x32xbf16>
    tpu.vector_store %arg4[%229, %c0_74, %c0_75], %232 {strides = array<i32>} : memref<8x2x64xbf16, #tpu.memory_space<vmem>>, vector<1x2x32xbf16>,
    %233 = arith.truncf %226 : vector<2x32xf32> to vector<2x32xbf16>
    %234 = arith.index_cast %162 : i32 to index
    %c0_76 = arith.constant 0 : index
    %c32_77 = arith.constant 32 : index
    %235 = vector.load %arg4[%234, %c0_76, %c32_77] : memref<8x2x64xbf16, #tpu.memory_space<vmem>>, vector<1x2x32xbf16>
    %236 = vector.shape_cast %235 : vector<1x2x32xbf16> to vector<2x32xbf16>
    %237 = vector.shape_cast %233 : vector<2x32xbf16> to vector<1x2x32xbf16>
    tpu.vector_store %arg4[%234, %c0_76, %c32_77], %237 {strides = array<i32>} : memref<8x2x64xbf16, #tpu.memory_space<vmem>>, vector<1x2x32xbf16>,
    %238 = tpu.concatenate %199, %226 in 1 : vector<2x32xf32>, vector<2x32xf32> -> vector<2x64xf32>
    %c2_i32_78 = arith.constant 2 : i32
    %c7_i32_79 = arith.constant 7 : i32
    %239 = arith.subi %c7_i32_79, %c2_i32_78 : i32
    %240 = arith.index_cast %c2_i32_78 : i32 to index
    %c0_80 = arith.constant 0 : index
    %c0_81 = arith.constant 0 : index
    %241 = vector.load %arg5[%240, %c0_80, %c0_81] : memref<8x2x256xf32, #tpu.memory_space<vmem>>, vector<1x2x128xf32>
    %242 = vector.shape_cast %241 : vector<1x2x128xf32> to vector<2x128xf32>
    %243 = arith.index_cast %239 : i32 to index
    %c0_82 = arith.constant 0 : index
    %c128_83 = arith.constant 128 : index
    %244 = vector.load %arg5[%243, %c0_82, %c128_83] : memref<8x2x256xf32, #tpu.memory_space<vmem>>, vector<1x2x128xf32>
    %245 = vector.shape_cast %244 : vector<1x2x128xf32> to vector<2x128xf32>
    %246 = tpu.concatenate %242, %245 in 1 : vector<2x128xf32>, vector<2x128xf32> -> vector<2x256xf32>
    %247 = arith.truncf %238 : vector<2x64xf32> to vector<2x64xbf16>
    %cst_84 = arith.constant dense<0.000000e+00> : vector<2x256xf32>
    %248 = tpu.matmul %247, %82, %cst_84 {dimension_numbers = #tpu.dot_dimension_numbers<[1], [0], [0], [1], [0, 0, 1, 1], [], []>} : vector<2x64xbf16>, vector<64x256xbf16>, vector<2x256xf32> -> vector<2x256xf32>
    %249 = arith.addf %246, %248 : vector<2x256xf32>
    %250 = vector.extract_strided_slice %249 {offsets = [0, 0], sizes = [2, 128], strides = [1, 1]} : vector<2x256xf32> to vector<2x128xf32>
    %251 = vector.extract_strided_slice %227 {offsets = [0, 0], sizes = [2, 32], strides = [1, 1]} : vector<2x64xf32> to vector<2x32xf32>
    %252 = vector.extract_strided_slice %250 {offsets = [0, 0], sizes = [2, 32], strides = [1, 1]} : vector<2x128xf32> to vector<2x32xf32>
    %253 = arith.negf %252 : vector<2x32xf32>
    %254 = math.exp %253 : vector<2x32xf32>
    %cst_85 = arith.constant 1.000000e+00 : f32
    %255 = vector.broadcast %cst_85 : f32 to vector<2x32xf32>
    %256 = arith.addf %255, %254 : vector<2x32xf32>
    %257 = arith.divf %255, %256 : vector<2x32xf32>
    %258 = vector.extract_strided_slice %250 {offsets = [0, 32], sizes = [2, 32], strides = [1, 1]} : vector<2x128xf32> to vector<2x32xf32>
    %259 = arith.negf %258 : vector<2x32xf32>
    %260 = math.exp %259 : vector<2x32xf32>
    %cst_86 = arith.constant 1.000000e+00 : f32
    %261 = vector.broadcast %cst_86 : f32 to vector<2x32xf32>
    %262 = arith.addf %261, %260 : vector<2x32xf32>
    %263 = arith.divf %261, %262 : vector<2x32xf32>
    %264 = vector.extract_strided_slice %250 {offsets = [0, 64], sizes = [2, 32], strides = [1, 1]} : vector<2x128xf32> to vector<2x32xf32>
    %265 = math.tanh %264 : vector<2x32xf32>
    %266 = vector.extract_strided_slice %250 {offsets = [0, 96], sizes = [2, 32], strides = [1, 1]} : vector<2x128xf32> to vector<2x32xf32>
    %267 = arith.negf %266 : vector<2x32xf32>
    %268 = math.exp %267 : vector<2x32xf32>
    %cst_87 = arith.constant 1.000000e+00 : f32
    %269 = vector.broadcast %cst_87 : f32 to vector<2x32xf32>
    %270 = arith.addf %269, %268 : vector<2x32xf32>
    %271 = arith.divf %269, %270 : vector<2x32xf32>
    %272 = arith.mulf %263, %251 : vector<2x32xf32>
    %273 = arith.mulf %257, %265 : vector<2x32xf32>
    %274 = arith.addf %272, %273 : vector<2x32xf32>
    %275 = math.tanh %274 : vector<2x32xf32>
    %276 = arith.mulf %271, %275 : vector<2x32xf32>
    %277 = vector.extract_strided_slice %249 {offsets = [0, 128], sizes = [2, 128], strides = [1, 1]} : vector<2x256xf32> to vector<2x128xf32>
    %278 = vector.extract_strided_slice %227 {offsets = [0, 32], sizes = [2, 32], strides = [1, 1]} : vector<2x64xf32> to vector<2x32xf32>
    %279 = vector.extract_strided_slice %277 {offsets = [0, 0], sizes = [2, 32], strides = [1, 1]} : vector<2x128xf32> to vector<2x32xf32>
    %280 = arith.negf %279 : vector<2x32xf32>
    %281 = math.exp %280 : vector<2x32xf32>
    %cst_88 = arith.constant 1.000000e+00 : f32
    %282 = vector.broadcast %cst_88 : f32 to vector<2x32xf32>
    %283 = arith.addf %282, %281 : vector<2x32xf32>
    %284 = arith.divf %282, %283 : vector<2x32xf32>
    %285 = vector.extract_strided_slice %277 {offsets = [0, 32], sizes = [2, 32], strides = [1, 1]} : vector<2x128xf32> to vector<2x32xf32>
    %286 = arith.negf %285 : vector<2x32xf32>
    %287 = math.exp %286 : vector<2x32xf32>
    %cst_89 = arith.constant 1.000000e+00 : f32
    %288 = vector.broadcast %cst_89 : f32 to vector<2x32xf32>
    %289 = arith.addf %288, %287 : vector<2x32xf32>
    %290 = arith.divf %288, %289 : vector<2x32xf32>
    %291 = vector.extract_strided_slice %277 {offsets = [0, 64], sizes = [2, 32], strides = [1, 1]} : vector<2x128xf32> to vector<2x32xf32>
    %292 = math.tanh %291 : vector<2x32xf32>
    %293 = vector.extract_strided_slice %277 {offsets = [0, 96], sizes = [2, 32], strides = [1, 1]} : vector<2x128xf32> to vector<2x32xf32>
    %294 = arith.negf %293 : vector<2x32xf32>
    %295 = math.exp %294 : vector<2x32xf32>
    %cst_90 = arith.constant 1.000000e+00 : f32
    %296 = vector.broadcast %cst_90 : f32 to vector<2x32xf32>
    %297 = arith.addf %296, %295 : vector<2x32xf32>
    %298 = arith.divf %296, %297 : vector<2x32xf32>
    %299 = arith.mulf %290, %278 : vector<2x32xf32>
    %300 = arith.mulf %284, %292 : vector<2x32xf32>
    %301 = arith.addf %299, %300 : vector<2x32xf32>
    %302 = math.tanh %301 : vector<2x32xf32>
    %303 = arith.mulf %298, %302 : vector<2x32xf32>
    %304 = tpu.concatenate %274, %301 in 1 : vector<2x32xf32>, vector<2x32xf32> -> vector<2x64xf32>
    %305 = arith.truncf %276 : vector<2x32xf32> to vector<2x32xbf16>
    %306 = arith.index_cast %c2_i32_78 : i32 to index
    %c0_91 = arith.constant 0 : index
    %c0_92 = arith.constant 0 : index
    %307 = vector.load %arg4[%306, %c0_91, %c0_92] : memref<8x2x64xbf16, #tpu.memory_space<vmem>>, vector<1x2x32xbf16>
    %308 = vector.shape_cast %307 : vector<1x2x32xbf16> to vector<2x32xbf16>
    %309 = vector.shape_cast %305 : vector<2x32xbf16> to vector<1x2x32xbf16>
    tpu.vector_store %arg4[%306, %c0_91, %c0_92], %309 {strides = array<i32>} : memref<8x2x64xbf16, #tpu.memory_space<vmem>>, vector<1x2x32xbf16>,
    %310 = arith.truncf %303 : vector<2x32xf32> to vector<2x32xbf16>
    %311 = arith.index_cast %239 : i32 to index
    %c0_93 = arith.constant 0 : index
    %c32_94 = arith.constant 32 : index
    %312 = vector.load %arg4[%311, %c0_93, %c32_94] : memref<8x2x64xbf16, #tpu.memory_space<vmem>>, vector<1x2x32xbf16>
    %313 = vector.shape_cast %312 : vector<1x2x32xbf16> to vector<2x32xbf16>
    %314 = vector.shape_cast %310 : vector<2x32xbf16> to vector<1x2x32xbf16>
    tpu.vector_store %arg4[%311, %c0_93, %c32_94], %314 {strides = array<i32>} : memref<8x2x64xbf16, #tpu.memory_space<vmem>>, vector<1x2x32xbf16>,
    %315 = tpu.concatenate %276, %303 in 1 : vector<2x32xf32>, vector<2x32xf32> -> vector<2x64xf32>
    %c3_i32_95 = arith.constant 3 : i32
    %c7_i32_96 = arith.constant 7 : i32
    %316 = arith.subi %c7_i32_96, %c3_i32_95 : i32
    %317 = arith.index_cast %c3_i32_95 : i32 to index
    %c0_97 = arith.constant 0 : index
    %c0_98 = arith.constant 0 : index
    %318 = vector.load %arg5[%317, %c0_97, %c0_98] : memref<8x2x256xf32, #tpu.memory_space<vmem>>, vector<1x2x128xf32>
    %319 = vector.shape_cast %318 : vector<1x2x128xf32> to vector<2x128xf32>
    %320 = arith.index_cast %316 : i32 to index
    %c0_99 = arith.constant 0 : index
    %c128_100 = arith.constant 128 : index
    %321 = vector.load %arg5[%320, %c0_99, %c128_100] : memref<8x2x256xf32, #tpu.memory_space<vmem>>, vector<1x2x128xf32>
    %322 = vector.shape_cast %321 : vector<1x2x128xf32> to vector<2x128xf32>
    %323 = tpu.concatenate %319, %322 in 1 : vector<2x128xf32>, vector<2x128xf32> -> vector<2x256xf32>
    %324 = arith.truncf %315 : vector<2x64xf32> to vector<2x64xbf16>
    %cst_101 = arith.constant dense<0.000000e+00> : vector<2x256xf32>
    %325 = tpu.matmul %324, %82, %cst_101 {dimension_numbers = #tpu.dot_dimension_numbers<[1], [0], [0], [1], [0, 0, 1, 1], [], []>} : vector<2x64xbf16>, vector<64x256xbf16>, vector<2x256xf32> -> vector<2x256xf32>
    %326 = arith.addf %323, %325 : vector<2x256xf32>
    %327 = vector.extract_strided_slice %326 {offsets = [0, 0], sizes = [2, 128], strides = [1, 1]} : vector<2x256xf32> to vector<2x128xf32>
    %328 = vector.extract_strided_slice %304 {offsets = [0, 0], sizes = [2, 32], strides = [1, 1]} : vector<2x64xf32> to vector<2x32xf32>
    %329 = vector.extract_strided_slice %327 {offsets = [0, 0], sizes = [2, 32], strides = [1, 1]} : vector<2x128xf32> to vector<2x32xf32>
    %330 = arith.negf %329 : vector<2x32xf32>
    %331 = math.exp %330 : vector<2x32xf32>
    %cst_102 = arith.constant 1.000000e+00 : f32
    %332 = vector.broadcast %cst_102 : f32 to vector<2x32xf32>
    %333 = arith.addf %332, %331 : vector<2x32xf32>
    %334 = arith.divf %332, %333 : vector<2x32xf32>
    %335 = vector.extract_strided_slice %327 {offsets = [0, 32], sizes = [2, 32], strides = [1, 1]} : vector<2x128xf32> to vector<2x32xf32>
    %336 = arith.negf %335 : vector<2x32xf32>
    %337 = math.exp %336 : vector<2x32xf32>
    %cst_103 = arith.constant 1.000000e+00 : f32
    %338 = vector.broadcast %cst_103 : f32 to vector<2x32xf32>
    %339 = arith.addf %338, %337 : vector<2x32xf32>
    %340 = arith.divf %338, %339 : vector<2x32xf32>
    %341 = vector.extract_strided_slice %327 {offsets = [0, 64], sizes = [2, 32], strides = [1, 1]} : vector<2x128xf32> to vector<2x32xf32>
    %342 = math.tanh %341 : vector<2x32xf32>
    %343 = vector.extract_strided_slice %327 {offsets = [0, 96], sizes = [2, 32], strides = [1, 1]} : vector<2x128xf32> to vector<2x32xf32>
    %344 = arith.negf %343 : vector<2x32xf32>
    %345 = math.exp %344 : vector<2x32xf32>
    %cst_104 = arith.constant 1.000000e+00 : f32
    %346 = vector.broadcast %cst_104 : f32 to vector<2x32xf32>
    %347 = arith.addf %346, %345 : vector<2x32xf32>
    %348 = arith.divf %346, %347 : vector<2x32xf32>
    %349 = arith.mulf %340, %328 : vector<2x32xf32>
    %350 = arith.mulf %334, %342 : vector<2x32xf32>
    %351 = arith.addf %349, %350 : vector<2x32xf32>
    %352 = math.tanh %351 : vector<2x32xf32>
    %353 = arith.mulf %348, %352 : vector<2x32xf32>
    %354 = vector.extract_strided_slice %326 {offsets = [0, 128], sizes = [2, 128], strides = [1, 1]} : vector<2x256xf32> to vector<2x128xf32>
    %355 = vector.extract_strided_slice %304 {offsets = [0, 32], sizes = [2, 32], strides = [1, 1]} : vector<2x64xf32> to vector<2x32xf32>
    %356 = vector.extract_strided_slice %354 {offsets = [0, 0], sizes = [2, 32], strides = [1, 1]} : vector<2x128xf32> to vector<2x32xf32>
    %357 = arith.negf %356 : vector<2x32xf32>
    %358 = math.exp %357 : vector<2x32xf32>
    %cst_105 = arith.constant 1.000000e+00 : f32
    %359 = vector.broadcast %cst_105 : f32 to vector<2x32xf32>
    %360 = arith.addf %359, %358 : vector<2x32xf32>
    %361 = arith.divf %359, %360 : vector<2x32xf32>
    %362 = vector.extract_strided_slice %354 {offsets = [0, 32], sizes = [2, 32], strides = [1, 1]} : vector<2x128xf32> to vector<2x32xf32>
    %363 = arith.negf %362 : vector<2x32xf32>
    %364 = math.exp %363 : vector<2x32xf32>
    %cst_106 = arith.constant 1.000000e+00 : f32
    %365 = vector.broadcast %cst_106 : f32 to vector<2x32xf32>
    %366 = arith.addf %365, %364 : vector<2x32xf32>
    %367 = arith.divf %365, %366 : vector<2x32xf32>
    %368 = vector.extract_strided_slice %354 {offsets = [0, 64], sizes = [2, 32], strides = [1, 1]} : vector<2x128xf32> to vector<2x32xf32>
    %369 = math.tanh %368 : vector<2x32xf32>
    %370 = vector.extract_strided_slice %354 {offsets = [0, 96], sizes = [2, 32], strides = [1, 1]} : vector<2x128xf32> to vector<2x32xf32>
    %371 = arith.negf %370 : vector<2x32xf32>
    %372 = math.exp %371 : vector<2x32xf32>
    %cst_107 = arith.constant 1.000000e+00 : f32
    %373 = vector.broadcast %cst_107 : f32 to vector<2x32xf32>
    %374 = arith.addf %373, %372 : vector<2x32xf32>
    %375 = arith.divf %373, %374 : vector<2x32xf32>
    %376 = arith.mulf %367, %355 : vector<2x32xf32>
    %377 = arith.mulf %361, %369 : vector<2x32xf32>
    %378 = arith.addf %376, %377 : vector<2x32xf32>
    %379 = math.tanh %378 : vector<2x32xf32>
    %380 = arith.mulf %375, %379 : vector<2x32xf32>
    %381 = tpu.concatenate %351, %378 in 1 : vector<2x32xf32>, vector<2x32xf32> -> vector<2x64xf32>
    %382 = arith.truncf %353 : vector<2x32xf32> to vector<2x32xbf16>
    %383 = arith.index_cast %c3_i32_95 : i32 to index
    %c0_108 = arith.constant 0 : index
    %c0_109 = arith.constant 0 : index
    %384 = vector.load %arg4[%383, %c0_108, %c0_109] : memref<8x2x64xbf16, #tpu.memory_space<vmem>>, vector<1x2x32xbf16>
    %385 = vector.shape_cast %384 : vector<1x2x32xbf16> to vector<2x32xbf16>
    %386 = vector.shape_cast %382 : vector<2x32xbf16> to vector<1x2x32xbf16>
    tpu.vector_store %arg4[%383, %c0_108, %c0_109], %386 {strides = array<i32>} : memref<8x2x64xbf16, #tpu.memory_space<vmem>>, vector<1x2x32xbf16>,
    %387 = arith.truncf %380 : vector<2x32xf32> to vector<2x32xbf16>
    %388 = arith.index_cast %316 : i32 to index
    %c0_110 = arith.constant 0 : index
    %c32_111 = arith.constant 32 : index
    %389 = vector.load %arg4[%388, %c0_110, %c32_111] : memref<8x2x64xbf16, #tpu.memory_space<vmem>>, vector<1x2x32xbf16>
    %390 = vector.shape_cast %389 : vector<1x2x32xbf16> to vector<2x32xbf16>
    %391 = vector.shape_cast %387 : vector<2x32xbf16> to vector<1x2x32xbf16>
    tpu.vector_store %arg4[%388, %c0_110, %c32_111], %391 {strides = array<i32>} : memref<8x2x64xbf16, #tpu.memory_space<vmem>>, vector<1x2x32xbf16>,
    %392 = tpu.concatenate %353, %380 in 1 : vector<2x32xf32>, vector<2x32xf32> -> vector<2x64xf32>
    %c4_i32_112 = arith.constant 4 : i32
    %c7_i32_113 = arith.constant 7 : i32
    %393 = arith.subi %c7_i32_113, %c4_i32_112 : i32
    %394 = arith.index_cast %c4_i32_112 : i32 to index
    %c0_114 = arith.constant 0 : index
    %c0_115 = arith.constant 0 : index
    %395 = vector.load %arg5[%394, %c0_114, %c0_115] : memref<8x2x256xf32, #tpu.memory_space<vmem>>, vector<1x2x128xf32>
    %396 = vector.shape_cast %395 : vector<1x2x128xf32> to vector<2x128xf32>
    %397 = arith.index_cast %393 : i32 to index
    %c0_116 = arith.constant 0 : index
    %c128_117 = arith.constant 128 : index
    %398 = vector.load %arg5[%397, %c0_116, %c128_117] : memref<8x2x256xf32, #tpu.memory_space<vmem>>, vector<1x2x128xf32>
    %399 = vector.shape_cast %398 : vector<1x2x128xf32> to vector<2x128xf32>
    %400 = tpu.concatenate %396, %399 in 1 : vector<2x128xf32>, vector<2x128xf32> -> vector<2x256xf32>
    %401 = arith.truncf %392 : vector<2x64xf32> to vector<2x64xbf16>
    %cst_118 = arith.constant dense<0.000000e+00> : vector<2x256xf32>
    %402 = tpu.matmul %401, %82, %cst_118 {dimension_numbers = #tpu.dot_dimension_numbers<[1], [0], [0], [1], [0, 0, 1, 1], [], []>} : vector<2x64xbf16>, vector<64x256xbf16>, vector<2x256xf32> -> vector<2x256xf32>
    %403 = arith.addf %400, %402 : vector<2x256xf32>
    %404 = vector.extract_strided_slice %403 {offsets = [0, 0], sizes = [2, 128], strides = [1, 1]} : vector<2x256xf32> to vector<2x128xf32>
    %405 = vector.extract_strided_slice %381 {offsets = [0, 0], sizes = [2, 32], strides = [1, 1]} : vector<2x64xf32> to vector<2x32xf32>
    %406 = vector.extract_strided_slice %404 {offsets = [0, 0], sizes = [2, 32], strides = [1, 1]} : vector<2x128xf32> to vector<2x32xf32>
    %407 = arith.negf %406 : vector<2x32xf32>
    %408 = math.exp %407 : vector<2x32xf32>
    %cst_119 = arith.constant 1.000000e+00 : f32
    %409 = vector.broadcast %cst_119 : f32 to vector<2x32xf32>
    %410 = arith.addf %409, %408 : vector<2x32xf32>
    %411 = arith.divf %409, %410 : vector<2x32xf32>
    %412 = vector.extract_strided_slice %404 {offsets = [0, 32], sizes = [2, 32], strides = [1, 1]} : vector<2x128xf32> to vector<2x32xf32>
    %413 = arith.negf %412 : vector<2x32xf32>
    %414 = math.exp %413 : vector<2x32xf32>
    %cst_120 = arith.constant 1.000000e+00 : f32
    %415 = vector.broadcast %cst_120 : f32 to vector<2x32xf32>
    %416 = arith.addf %415, %414 : vector<2x32xf32>
    %417 = arith.divf %415, %416 : vector<2x32xf32>
    %418 = vector.extract_strided_slice %404 {offsets = [0, 64], sizes = [2, 32], strides = [1, 1]} : vector<2x128xf32> to vector<2x32xf32>
    %419 = math.tanh %418 : vector<2x32xf32>
    %420 = vector.extract_strided_slice %404 {offsets = [0, 96], sizes = [2, 32], strides = [1, 1]} : vector<2x128xf32> to vector<2x32xf32>
    %421 = arith.negf %420 : vector<2x32xf32>
    %422 = math.exp %421 : vector<2x32xf32>
    %cst_121 = arith.constant 1.000000e+00 : f32
    %423 = vector.broadcast %cst_121 : f32 to vector<2x32xf32>
    %424 = arith.addf %423, %422 : vector<2x32xf32>
    %425 = arith.divf %423, %424 : vector<2x32xf32>
    %426 = arith.mulf %417, %405 : vector<2x32xf32>
    %427 = arith.mulf %411, %419 : vector<2x32xf32>
    %428 = arith.addf %426, %427 : vector<2x32xf32>
    %429 = math.tanh %428 : vector<2x32xf32>
    %430 = arith.mulf %425, %429 : vector<2x32xf32>
    %431 = vector.extract_strided_slice %403 {offsets = [0, 128], sizes = [2, 128], strides = [1, 1]} : vector<2x256xf32> to vector<2x128xf32>
    %432 = vector.extract_strided_slice %381 {offsets = [0, 32], sizes = [2, 32], strides = [1, 1]} : vector<2x64xf32> to vector<2x32xf32>
    %433 = vector.extract_strided_slice %431 {offsets = [0, 0], sizes = [2, 32], strides = [1, 1]} : vector<2x128xf32> to vector<2x32xf32>
    %434 = arith.negf %433 : vector<2x32xf32>
    %435 = math.exp %434 : vector<2x32xf32>
    %cst_122 = arith.constant 1.000000e+00 : f32
    %436 = vector.broadcast %cst_122 : f32 to vector<2x32xf32>
    %437 = arith.addf %436, %435 : vector<2x32xf32>
    %438 = arith.divf %436, %437 : vector<2x32xf32>
    %439 = vector.extract_strided_slice %431 {offsets = [0, 32], sizes = [2, 32], strides = [1, 1]} : vector<2x128xf32> to vector<2x32xf32>
    %440 = arith.negf %439 : vector<2x32xf32>
    %441 = math.exp %440 : vector<2x32xf32>
    %cst_123 = arith.constant 1.000000e+00 : f32
    %442 = vector.broadcast %cst_123 : f32 to vector<2x32xf32>
    %443 = arith.addf %442, %441 : vector<2x32xf32>
    %444 = arith.divf %442, %443 : vector<2x32xf32>
    %445 = vector.extract_strided_slice %431 {offsets = [0, 64], sizes = [2, 32], strides = [1, 1]} : vector<2x128xf32> to vector<2x32xf32>
    %446 = math.tanh %445 : vector<2x32xf32>
    %447 = vector.extract_strided_slice %431 {offsets = [0, 96], sizes = [2, 32], strides = [1, 1]} : vector<2x128xf32> to vector<2x32xf32>
    %448 = arith.negf %447 : vector<2x32xf32>
    %449 = math.exp %448 : vector<2x32xf32>
    %cst_124 = arith.constant 1.000000e+00 : f32
    %450 = vector.broadcast %cst_124 : f32 to vector<2x32xf32>
    %451 = arith.addf %450, %449 : vector<2x32xf32>
    %452 = arith.divf %450, %451 : vector<2x32xf32>
    %453 = arith.mulf %444, %432 : vector<2x32xf32>
    %454 = arith.mulf %438, %446 : vector<2x32xf32>
    %455 = arith.addf %453, %454 : vector<2x32xf32>
    %456 = math.tanh %455 : vector<2x32xf32>
    %457 = arith.mulf %452, %456 : vector<2x32xf32>
    %458 = tpu.concatenate %428, %455 in 1 : vector<2x32xf32>, vector<2x32xf32> -> vector<2x64xf32>
    %459 = arith.truncf %430 : vector<2x32xf32> to vector<2x32xbf16>
    %460 = arith.index_cast %c4_i32_112 : i32 to index
    %c0_125 = arith.constant 0 : index
    %c0_126 = arith.constant 0 : index
    %461 = vector.load %arg4[%460, %c0_125, %c0_126] : memref<8x2x64xbf16, #tpu.memory_space<vmem>>, vector<1x2x32xbf16>
    %462 = vector.shape_cast %461 : vector<1x2x32xbf16> to vector<2x32xbf16>
    %463 = vector.shape_cast %459 : vector<2x32xbf16> to vector<1x2x32xbf16>
    tpu.vector_store %arg4[%460, %c0_125, %c0_126], %463 {strides = array<i32>} : memref<8x2x64xbf16, #tpu.memory_space<vmem>>, vector<1x2x32xbf16>,
    %464 = arith.truncf %457 : vector<2x32xf32> to vector<2x32xbf16>
    %465 = arith.index_cast %393 : i32 to index
    %c0_127 = arith.constant 0 : index
    %c32_128 = arith.constant 32 : index
    %466 = vector.load %arg4[%465, %c0_127, %c32_128] : memref<8x2x64xbf16, #tpu.memory_space<vmem>>, vector<1x2x32xbf16>
    %467 = vector.shape_cast %466 : vector<1x2x32xbf16> to vector<2x32xbf16>
    %468 = vector.shape_cast %464 : vector<2x32xbf16> to vector<1x2x32xbf16>
    tpu.vector_store %arg4[%465, %c0_127, %c32_128], %468 {strides = array<i32>} : memref<8x2x64xbf16, #tpu.memory_space<vmem>>, vector<1x2x32xbf16>,
    %469 = tpu.concatenate %430, %457 in 1 : vector<2x32xf32>, vector<2x32xf32> -> vector<2x64xf32>
    %c5_i32_129 = arith.constant 5 : i32
    %c7_i32_130 = arith.constant 7 : i32
    %470 = arith.subi %c7_i32_130, %c5_i32_129 : i32
    %471 = arith.index_cast %c5_i32_129 : i32 to index
    %c0_131 = arith.constant 0 : index
    %c0_132 = arith.constant 0 : index
    %472 = vector.load %arg5[%471, %c0_131, %c0_132] : memref<8x2x256xf32, #tpu.memory_space<vmem>>, vector<1x2x128xf32>
    %473 = vector.shape_cast %472 : vector<1x2x128xf32> to vector<2x128xf32>
    %474 = arith.index_cast %470 : i32 to index
    %c0_133 = arith.constant 0 : index
    %c128_134 = arith.constant 128 : index
    %475 = vector.load %arg5[%474, %c0_133, %c128_134] : memref<8x2x256xf32, #tpu.memory_space<vmem>>, vector<1x2x128xf32>
    %476 = vector.shape_cast %475 : vector<1x2x128xf32> to vector<2x128xf32>
    %477 = tpu.concatenate %473, %476 in 1 : vector<2x128xf32>, vector<2x128xf32> -> vector<2x256xf32>
    %478 = arith.truncf %469 : vector<2x64xf32> to vector<2x64xbf16>
    %cst_135 = arith.constant dense<0.000000e+00> : vector<2x256xf32>
    %479 = tpu.matmul %478, %82, %cst_135 {dimension_numbers = #tpu.dot_dimension_numbers<[1], [0], [0], [1], [0, 0, 1, 1], [], []>} : vector<2x64xbf16>, vector<64x256xbf16>, vector<2x256xf32> -> vector<2x256xf32>
    %480 = arith.addf %477, %479 : vector<2x256xf32>
    %481 = vector.extract_strided_slice %480 {offsets = [0, 0], sizes = [2, 128], strides = [1, 1]} : vector<2x256xf32> to vector<2x128xf32>
    %482 = vector.extract_strided_slice %458 {offsets = [0, 0], sizes = [2, 32], strides = [1, 1]} : vector<2x64xf32> to vector<2x32xf32>
    %483 = vector.extract_strided_slice %481 {offsets = [0, 0], sizes = [2, 32], strides = [1, 1]} : vector<2x128xf32> to vector<2x32xf32>
    %484 = arith.negf %483 : vector<2x32xf32>
    %485 = math.exp %484 : vector<2x32xf32>
    %cst_136 = arith.constant 1.000000e+00 : f32
    %486 = vector.broadcast %cst_136 : f32 to vector<2x32xf32>
    %487 = arith.addf %486, %485 : vector<2x32xf32>
    %488 = arith.divf %486, %487 : vector<2x32xf32>
    %489 = vector.extract_strided_slice %481 {offsets = [0, 32], sizes = [2, 32], strides = [1, 1]} : vector<2x128xf32> to vector<2x32xf32>
    %490 = arith.negf %489 : vector<2x32xf32>
    %491 = math.exp %490 : vector<2x32xf32>
    %cst_137 = arith.constant 1.000000e+00 : f32
    %492 = vector.broadcast %cst_137 : f32 to vector<2x32xf32>
    %493 = arith.addf %492, %491 : vector<2x32xf32>
    %494 = arith.divf %492, %493 : vector<2x32xf32>
    %495 = vector.extract_strided_slice %481 {offsets = [0, 64], sizes = [2, 32], strides = [1, 1]} : vector<2x128xf32> to vector<2x32xf32>
    %496 = math.tanh %495 : vector<2x32xf32>
    %497 = vector.extract_strided_slice %481 {offsets = [0, 96], sizes = [2, 32], strides = [1, 1]} : vector<2x128xf32> to vector<2x32xf32>
    %498 = arith.negf %497 : vector<2x32xf32>
    %499 = math.exp %498 : vector<2x32xf32>
    %cst_138 = arith.constant 1.000000e+00 : f32
    %500 = vector.broadcast %cst_138 : f32 to vector<2x32xf32>
    %501 = arith.addf %500, %499 : vector<2x32xf32>
    %502 = arith.divf %500, %501 : vector<2x32xf32>
    %503 = arith.mulf %494, %482 : vector<2x32xf32>
    %504 = arith.mulf %488, %496 : vector<2x32xf32>
    %505 = arith.addf %503, %504 : vector<2x32xf32>
    %506 = math.tanh %505 : vector<2x32xf32>
    %507 = arith.mulf %502, %506 : vector<2x32xf32>
    %508 = vector.extract_strided_slice %480 {offsets = [0, 128], sizes = [2, 128], strides = [1, 1]} : vector<2x256xf32> to vector<2x128xf32>
    %509 = vector.extract_strided_slice %458 {offsets = [0, 32], sizes = [2, 32], strides = [1, 1]} : vector<2x64xf32> to vector<2x32xf32>
    %510 = vector.extract_strided_slice %508 {offsets = [0, 0], sizes = [2, 32], strides = [1, 1]} : vector<2x128xf32> to vector<2x32xf32>
    %511 = arith.negf %510 : vector<2x32xf32>
    %512 = math.exp %511 : vector<2x32xf32>
    %cst_139 = arith.constant 1.000000e+00 : f32
    %513 = vector.broadcast %cst_139 : f32 to vector<2x32xf32>
    %514 = arith.addf %513, %512 : vector<2x32xf32>
    %515 = arith.divf %513, %514 : vector<2x32xf32>
    %516 = vector.extract_strided_slice %508 {offsets = [0, 32], sizes = [2, 32], strides = [1, 1]} : vector<2x128xf32> to vector<2x32xf32>
    %517 = arith.negf %516 : vector<2x32xf32>
    %518 = math.exp %517 : vector<2x32xf32>
    %cst_140 = arith.constant 1.000000e+00 : f32
    %519 = vector.broadcast %cst_140 : f32 to vector<2x32xf32>
    %520 = arith.addf %519, %518 : vector<2x32xf32>
    %521 = arith.divf %519, %520 : vector<2x32xf32>
    %522 = vector.extract_strided_slice %508 {offsets = [0, 64], sizes = [2, 32], strides = [1, 1]} : vector<2x128xf32> to vector<2x32xf32>
    %523 = math.tanh %522 : vector<2x32xf32>
    %524 = vector.extract_strided_slice %508 {offsets = [0, 96], sizes = [2, 32], strides = [1, 1]} : vector<2x128xf32> to vector<2x32xf32>
    %525 = arith.negf %524 : vector<2x32xf32>
    %526 = math.exp %525 : vector<2x32xf32>
    %cst_141 = arith.constant 1.000000e+00 : f32
    %527 = vector.broadcast %cst_141 : f32 to vector<2x32xf32>
    %528 = arith.addf %527, %526 : vector<2x32xf32>
    %529 = arith.divf %527, %528 : vector<2x32xf32>
    %530 = arith.mulf %521, %509 : vector<2x32xf32>
    %531 = arith.mulf %515, %523 : vector<2x32xf32>
    %532 = arith.addf %530, %531 : vector<2x32xf32>
    %533 = math.tanh %532 : vector<2x32xf32>
    %534 = arith.mulf %529, %533 : vector<2x32xf32>
    %535 = tpu.concatenate %505, %532 in 1 : vector<2x32xf32>, vector<2x32xf32> -> vector<2x64xf32>
    %536 = arith.truncf %507 : vector<2x32xf32> to vector<2x32xbf16>
    %537 = arith.index_cast %c5_i32_129 : i32 to index
    %c0_142 = arith.constant 0 : index
    %c0_143 = arith.constant 0 : index
    %538 = vector.load %arg4[%537, %c0_142, %c0_143] : memref<8x2x64xbf16, #tpu.memory_space<vmem>>, vector<1x2x32xbf16>
    %539 = vector.shape_cast %538 : vector<1x2x32xbf16> to vector<2x32xbf16>
    %540 = vector.shape_cast %536 : vector<2x32xbf16> to vector<1x2x32xbf16>
    tpu.vector_store %arg4[%537, %c0_142, %c0_143], %540 {strides = array<i32>} : memref<8x2x64xbf16, #tpu.memory_space<vmem>>, vector<1x2x32xbf16>,
    %541 = arith.truncf %534 : vector<2x32xf32> to vector<2x32xbf16>
    %542 = arith.index_cast %470 : i32 to index
    %c0_144 = arith.constant 0 : index
    %c32_145 = arith.constant 32 : index
    %543 = vector.load %arg4[%542, %c0_144, %c32_145] : memref<8x2x64xbf16, #tpu.memory_space<vmem>>, vector<1x2x32xbf16>
    %544 = vector.shape_cast %543 : vector<1x2x32xbf16> to vector<2x32xbf16>
    %545 = vector.shape_cast %541 : vector<2x32xbf16> to vector<1x2x32xbf16>
    tpu.vector_store %arg4[%542, %c0_144, %c32_145], %545 {strides = array<i32>} : memref<8x2x64xbf16, #tpu.memory_space<vmem>>, vector<1x2x32xbf16>,
    %546 = tpu.concatenate %507, %534 in 1 : vector<2x32xf32>, vector<2x32xf32> -> vector<2x64xf32>
    %c6_i32_146 = arith.constant 6 : i32
    %c7_i32_147 = arith.constant 7 : i32
    %547 = arith.subi %c7_i32_147, %c6_i32_146 : i32
    %548 = arith.index_cast %c6_i32_146 : i32 to index
    %c0_148 = arith.constant 0 : index
    %c0_149 = arith.constant 0 : index
    %549 = vector.load %arg5[%548, %c0_148, %c0_149] : memref<8x2x256xf32, #tpu.memory_space<vmem>>, vector<1x2x128xf32>
    %550 = vector.shape_cast %549 : vector<1x2x128xf32> to vector<2x128xf32>
    %551 = arith.index_cast %547 : i32 to index
    %c0_150 = arith.constant 0 : index
    %c128_151 = arith.constant 128 : index
    %552 = vector.load %arg5[%551, %c0_150, %c128_151] : memref<8x2x256xf32, #tpu.memory_space<vmem>>, vector<1x2x128xf32>
    %553 = vector.shape_cast %552 : vector<1x2x128xf32> to vector<2x128xf32>
    %554 = tpu.concatenate %550, %553 in 1 : vector<2x128xf32>, vector<2x128xf32> -> vector<2x256xf32>
    %555 = arith.truncf %546 : vector<2x64xf32> to vector<2x64xbf16>
    %cst_152 = arith.constant dense<0.000000e+00> : vector<2x256xf32>
    %556 = tpu.matmul %555, %82, %cst_152 {dimension_numbers = #tpu.dot_dimension_numbers<[1], [0], [0], [1], [0, 0, 1, 1], [], []>} : vector<2x64xbf16>, vector<64x256xbf16>, vector<2x256xf32> -> vector<2x256xf32>
    %557 = arith.addf %554, %556 : vector<2x256xf32>
    %558 = vector.extract_strided_slice %557 {offsets = [0, 0], sizes = [2, 128], strides = [1, 1]} : vector<2x256xf32> to vector<2x128xf32>
    %559 = vector.extract_strided_slice %535 {offsets = [0, 0], sizes = [2, 32], strides = [1, 1]} : vector<2x64xf32> to vector<2x32xf32>
    %560 = vector.extract_strided_slice %558 {offsets = [0, 0], sizes = [2, 32], strides = [1, 1]} : vector<2x128xf32> to vector<2x32xf32>
    %561 = arith.negf %560 : vector<2x32xf32>
    %562 = math.exp %561 : vector<2x32xf32>
    %cst_153 = arith.constant 1.000000e+00 : f32
    %563 = vector.broadcast %cst_153 : f32 to vector<2x32xf32>
    %564 = arith.addf %563, %562 : vector<2x32xf32>
    %565 = arith.divf %563, %564 : vector<2x32xf32>
    %566 = vector.extract_strided_slice %558 {offsets = [0, 32], sizes = [2, 32], strides = [1, 1]} : vector<2x128xf32> to vector<2x32xf32>
    %567 = arith.negf %566 : vector<2x32xf32>
    %568 = math.exp %567 : vector<2x32xf32>
    %cst_154 = arith.constant 1.000000e+00 : f32
    %569 = vector.broadcast %cst_154 : f32 to vector<2x32xf32>
    %570 = arith.addf %569, %568 : vector<2x32xf32>
    %571 = arith.divf %569, %570 : vector<2x32xf32>
    %572 = vector.extract_strided_slice %558 {offsets = [0, 64], sizes = [2, 32], strides = [1, 1]} : vector<2x128xf32> to vector<2x32xf32>
    %573 = math.tanh %572 : vector<2x32xf32>
    %574 = vector.extract_strided_slice %558 {offsets = [0, 96], sizes = [2, 32], strides = [1, 1]} : vector<2x128xf32> to vector<2x32xf32>
    %575 = arith.negf %574 : vector<2x32xf32>
    %576 = math.exp %575 : vector<2x32xf32>
    %cst_155 = arith.constant 1.000000e+00 : f32
    %577 = vector.broadcast %cst_155 : f32 to vector<2x32xf32>
    %578 = arith.addf %577, %576 : vector<2x32xf32>
    %579 = arith.divf %577, %578 : vector<2x32xf32>
    %580 = arith.mulf %571, %559 : vector<2x32xf32>
    %581 = arith.mulf %565, %573 : vector<2x32xf32>
    %582 = arith.addf %580, %581 : vector<2x32xf32>
    %583 = math.tanh %582 : vector<2x32xf32>
    %584 = arith.mulf %579, %583 : vector<2x32xf32>
    %585 = vector.extract_strided_slice %557 {offsets = [0, 128], sizes = [2, 128], strides = [1, 1]} : vector<2x256xf32> to vector<2x128xf32>
    %586 = vector.extract_strided_slice %535 {offsets = [0, 32], sizes = [2, 32], strides = [1, 1]} : vector<2x64xf32> to vector<2x32xf32>
    %587 = vector.extract_strided_slice %585 {offsets = [0, 0], sizes = [2, 32], strides = [1, 1]} : vector<2x128xf32> to vector<2x32xf32>
    %588 = arith.negf %587 : vector<2x32xf32>
    %589 = math.exp %588 : vector<2x32xf32>
    %cst_156 = arith.constant 1.000000e+00 : f32
    %590 = vector.broadcast %cst_156 : f32 to vector<2x32xf32>
    %591 = arith.addf %590, %589 : vector<2x32xf32>
    %592 = arith.divf %590, %591 : vector<2x32xf32>
    %593 = vector.extract_strided_slice %585 {offsets = [0, 32], sizes = [2, 32], strides = [1, 1]} : vector<2x128xf32> to vector<2x32xf32>
    %594 = arith.negf %593 : vector<2x32xf32>
    %595 = math.exp %594 : vector<2x32xf32>
    %cst_157 = arith.constant 1.000000e+00 : f32
    %596 = vector.broadcast %cst_157 : f32 to vector<2x32xf32>
    %597 = arith.addf %596, %595 : vector<2x32xf32>
    %598 = arith.divf %596, %597 : vector<2x32xf32>
    %599 = vector.extract_strided_slice %585 {offsets = [0, 64], sizes = [2, 32], strides = [1, 1]} : vector<2x128xf32> to vector<2x32xf32>
    %600 = math.tanh %599 : vector<2x32xf32>
    %601 = vector.extract_strided_slice %585 {offsets = [0, 96], sizes = [2, 32], strides = [1, 1]} : vector<2x128xf32> to vector<2x32xf32>
    %602 = arith.negf %601 : vector<2x32xf32>
    %603 = math.exp %602 : vector<2x32xf32>
    %cst_158 = arith.constant 1.000000e+00 : f32
    %604 = vector.broadcast %cst_158 : f32 to vector<2x32xf32>
    %605 = arith.addf %604, %603 : vector<2x32xf32>
    %606 = arith.divf %604, %605 : vector<2x32xf32>
    %607 = arith.mulf %598, %586 : vector<2x32xf32>
    %608 = arith.mulf %592, %600 : vector<2x32xf32>
    %609 = arith.addf %607, %608 : vector<2x32xf32>
    %610 = math.tanh %609 : vector<2x32xf32>
    %611 = arith.mulf %606, %610 : vector<2x32xf32>
    %612 = tpu.concatenate %582, %609 in 1 : vector<2x32xf32>, vector<2x32xf32> -> vector<2x64xf32>
    %613 = arith.truncf %584 : vector<2x32xf32> to vector<2x32xbf16>
    %614 = arith.index_cast %c6_i32_146 : i32 to index
    %c0_159 = arith.constant 0 : index
    %c0_160 = arith.constant 0 : index
    %615 = vector.load %arg4[%614, %c0_159, %c0_160] : memref<8x2x64xbf16, #tpu.memory_space<vmem>>, vector<1x2x32xbf16>
    %616 = vector.shape_cast %615 : vector<1x2x32xbf16> to vector<2x32xbf16>
    %617 = vector.shape_cast %613 : vector<2x32xbf16> to vector<1x2x32xbf16>
    tpu.vector_store %arg4[%614, %c0_159, %c0_160], %617 {strides = array<i32>} : memref<8x2x64xbf16, #tpu.memory_space<vmem>>, vector<1x2x32xbf16>,
    %618 = arith.truncf %611 : vector<2x32xf32> to vector<2x32xbf16>
    %619 = arith.index_cast %547 : i32 to index
    %c0_161 = arith.constant 0 : index
    %c32_162 = arith.constant 32 : index
    %620 = vector.load %arg4[%619, %c0_161, %c32_162] : memref<8x2x64xbf16, #tpu.memory_space<vmem>>, vector<1x2x32xbf16>
    %621 = vector.shape_cast %620 : vector<1x2x32xbf16> to vector<2x32xbf16>
    %622 = vector.shape_cast %618 : vector<2x32xbf16> to vector<1x2x32xbf16>
    tpu.vector_store %arg4[%619, %c0_161, %c32_162], %622 {strides = array<i32>} : memref<8x2x64xbf16, #tpu.memory_space<vmem>>, vector<1x2x32xbf16>,
    %623 = tpu.concatenate %584, %611 in 1 : vector<2x32xf32>, vector<2x32xf32> -> vector<2x64xf32>
    %c7_i32_163 = arith.constant 7 : i32
    %c7_i32_164 = arith.constant 7 : i32
    %624 = arith.subi %c7_i32_164, %c7_i32_163 : i32
    %625 = arith.index_cast %c7_i32_163 : i32 to index
    %c0_165 = arith.constant 0 : index
    %c0_166 = arith.constant 0 : index
    %626 = vector.load %arg5[%625, %c0_165, %c0_166] : memref<8x2x256xf32, #tpu.memory_space<vmem>>, vector<1x2x128xf32>
    %627 = vector.shape_cast %626 : vector<1x2x128xf32> to vector<2x128xf32>
    %628 = arith.index_cast %624 : i32 to index
    %c0_167 = arith.constant 0 : index
    %c128_168 = arith.constant 128 : index
    %629 = vector.load %arg5[%628, %c0_167, %c128_168] : memref<8x2x256xf32, #tpu.memory_space<vmem>>, vector<1x2x128xf32>
    %630 = vector.shape_cast %629 : vector<1x2x128xf32> to vector<2x128xf32>
    %631 = tpu.concatenate %627, %630 in 1 : vector<2x128xf32>, vector<2x128xf32> -> vector<2x256xf32>
    %632 = arith.truncf %623 : vector<2x64xf32> to vector<2x64xbf16>
    %cst_169 = arith.constant dense<0.000000e+00> : vector<2x256xf32>
    %633 = tpu.matmul %632, %82, %cst_169 {dimension_numbers = #tpu.dot_dimension_numbers<[1], [0], [0], [1], [0, 0, 1, 1], [], []>} : vector<2x64xbf16>, vector<64x256xbf16>, vector<2x256xf32> -> vector<2x256xf32>
    %634 = arith.addf %631, %633 : vector<2x256xf32>
    %635 = vector.extract_strided_slice %634 {offsets = [0, 0], sizes = [2, 128], strides = [1, 1]} : vector<2x256xf32> to vector<2x128xf32>
    %636 = vector.extract_strided_slice %612 {offsets = [0, 0], sizes = [2, 32], strides = [1, 1]} : vector<2x64xf32> to vector<2x32xf32>
    %637 = vector.extract_strided_slice %635 {offsets = [0, 0], sizes = [2, 32], strides = [1, 1]} : vector<2x128xf32> to vector<2x32xf32>
    %638 = arith.negf %637 : vector<2x32xf32>
    %639 = math.exp %638 : vector<2x32xf32>
    %cst_170 = arith.constant 1.000000e+00 : f32
    %640 = vector.broadcast %cst_170 : f32 to vector<2x32xf32>
    %641 = arith.addf %640, %639 : vector<2x32xf32>
    %642 = arith.divf %640, %641 : vector<2x32xf32>
    %643 = vector.extract_strided_slice %635 {offsets = [0, 32], sizes = [2, 32], strides = [1, 1]} : vector<2x128xf32> to vector<2x32xf32>
    %644 = arith.negf %643 : vector<2x32xf32>
    %645 = math.exp %644 : vector<2x32xf32>
    %cst_171 = arith.constant 1.000000e+00 : f32
    %646 = vector.broadcast %cst_171 : f32 to vector<2x32xf32>
    %647 = arith.addf %646, %645 : vector<2x32xf32>
    %648 = arith.divf %646, %647 : vector<2x32xf32>
    %649 = vector.extract_strided_slice %635 {offsets = [0, 64], sizes = [2, 32], strides = [1, 1]} : vector<2x128xf32> to vector<2x32xf32>
    %650 = math.tanh %649 : vector<2x32xf32>
    %651 = vector.extract_strided_slice %635 {offsets = [0, 96], sizes = [2, 32], strides = [1, 1]} : vector<2x128xf32> to vector<2x32xf32>
    %652 = arith.negf %651 : vector<2x32xf32>
    %653 = math.exp %652 : vector<2x32xf32>
    %cst_172 = arith.constant 1.000000e+00 : f32
    %654 = vector.broadcast %cst_172 : f32 to vector<2x32xf32>
    %655 = arith.addf %654, %653 : vector<2x32xf32>
    %656 = arith.divf %654, %655 : vector<2x32xf32>
    %657 = arith.mulf %648, %636 : vector<2x32xf32>
    %658 = arith.mulf %642, %650 : vector<2x32xf32>
    %659 = arith.addf %657, %658 : vector<2x32xf32>
    %660 = math.tanh %659 : vector<2x32xf32>
    %661 = arith.mulf %656, %660 : vector<2x32xf32>
    %662 = vector.extract_strided_slice %634 {offsets = [0, 128], sizes = [2, 128], strides = [1, 1]} : vector<2x256xf32> to vector<2x128xf32>
    %663 = vector.extract_strided_slice %612 {offsets = [0, 32], sizes = [2, 32], strides = [1, 1]} : vector<2x64xf32> to vector<2x32xf32>
    %664 = vector.extract_strided_slice %662 {offsets = [0, 0], sizes = [2, 32], strides = [1, 1]} : vector<2x128xf32> to vector<2x32xf32>
    %665 = arith.negf %664 : vector<2x32xf32>
    %666 = math.exp %665 : vector<2x32xf32>
    %cst_173 = arith.constant 1.000000e+00 : f32
    %667 = vector.broadcast %cst_173 : f32 to vector<2x32xf32>
    %668 = arith.addf %667, %666 : vector<2x32xf32>
    %669 = arith.divf %667, %668 : vector<2x32xf32>
    %670 = vector.extract_strided_slice %662 {offsets = [0, 32], sizes = [2, 32], strides = [1, 1]} : vector<2x128xf32> to vector<2x32xf32>
    %671 = arith.negf %670 : vector<2x32xf32>
    %672 = math.exp %671 : vector<2x32xf32>
    %cst_174 = arith.constant 1.000000e+00 : f32
    %673 = vector.broadcast %cst_174 : f32 to vector<2x32xf32>
    %674 = arith.addf %673, %672 : vector<2x32xf32>
    %675 = arith.divf %673, %674 : vector<2x32xf32>
    %676 = vector.extract_strided_slice %662 {offsets = [0, 64], sizes = [2, 32], strides = [1, 1]} : vector<2x128xf32> to vector<2x32xf32>
    %677 = math.tanh %676 : vector<2x32xf32>
    %678 = vector.extract_strided_slice %662 {offsets = [0, 96], sizes = [2, 32], strides = [1, 1]} : vector<2x128xf32> to vector<2x32xf32>
    %679 = arith.negf %678 : vector<2x32xf32>
    %680 = math.exp %679 : vector<2x32xf32>
    %cst_175 = arith.constant 1.000000e+00 : f32
    %681 = vector.broadcast %cst_175 : f32 to vector<2x32xf32>
    %682 = arith.addf %681, %680 : vector<2x32xf32>
    %683 = arith.divf %681, %682 : vector<2x32xf32>
    %684 = arith.mulf %675, %663 : vector<2x32xf32>
    %685 = arith.mulf %669, %677 : vector<2x32xf32>
    %686 = arith.addf %684, %685 : vector<2x32xf32>
    %687 = math.tanh %686 : vector<2x32xf32>
    %688 = arith.mulf %683, %687 : vector<2x32xf32>
    %689 = tpu.concatenate %659, %686 in 1 : vector<2x32xf32>, vector<2x32xf32> -> vector<2x64xf32>
    %690 = arith.truncf %661 : vector<2x32xf32> to vector<2x32xbf16>
    %691 = arith.index_cast %c7_i32_163 : i32 to index
    %c0_176 = arith.constant 0 : index
    %c0_177 = arith.constant 0 : index
    %692 = vector.load %arg4[%691, %c0_176, %c0_177] : memref<8x2x64xbf16, #tpu.memory_space<vmem>>, vector<1x2x32xbf16>
    %693 = vector.shape_cast %692 : vector<1x2x32xbf16> to vector<2x32xbf16>
    %694 = vector.shape_cast %690 : vector<2x32xbf16> to vector<1x2x32xbf16>
    tpu.vector_store %arg4[%691, %c0_176, %c0_177], %694 {strides = array<i32>} : memref<8x2x64xbf16, #tpu.memory_space<vmem>>, vector<1x2x32xbf16>,
    %695 = arith.truncf %688 : vector<2x32xf32> to vector<2x32xbf16>
    %696 = arith.index_cast %624 : i32 to index
    %c0_178 = arith.constant 0 : index
    %c32_179 = arith.constant 32 : index
    %697 = vector.load %arg4[%696, %c0_178, %c32_179] : memref<8x2x64xbf16, #tpu.memory_space<vmem>>, vector<1x2x32xbf16>
    %698 = vector.shape_cast %697 : vector<1x2x32xbf16> to vector<2x32xbf16>
    %699 = vector.shape_cast %695 : vector<2x32xbf16> to vector<1x2x32xbf16>
    tpu.vector_store %arg4[%696, %c0_178, %c32_179], %699 {strides = array<i32>} : memref<8x2x64xbf16, #tpu.memory_space<vmem>>, vector<1x2x32xbf16>,
    %700 = tpu.concatenate %661, %688 in 1 : vector<2x32xf32>, vector<2x32xf32> -> vector<2x64xf32>
    %c8_i32_180 = arith.constant 8 : i32
    return
  }
}

</mosaic_0001>

<llo_original>
// kernel: bilstm_forward.3
$region0: #{bilstm_forward.3}
  #allocation0 [shape = 'u32[]', space=smem, size = 0x4, offset = 0x4, fixed_abs, tag = 'smem constant byte address 0x4 - core index']
  #allocation1 [shape = 'u32[72,128]{1,0:T(1,128)}', space=vmem, size = 0x9000, scoped, tag = 'internal scratch']
  #allocation2 [shape = 'f32[8,2,256]{2,1,0:T(2,128)}', space=vmem, size = 0x4000, scoped, tag = 'scratch operand']
  %s0 = inlined_call_operand.vmem [shape: bf16[8,2,64], index: 0, kind: input, shape index: {}]
  %s1 = inlined_call_operand.vmem [shape: bf16[64,256], index: 1, kind: input, shape index: {}]
  %s2 = inlined_call_operand.hbm [shape: bf16[64,256], index: 2, kind: input, shape index: {}]
  %s3 = inlined_call_operand.vmem [shape: f32[1,256], index: 3, kind: input, shape index: {}]
  %s4 = inlined_call_operand.hbm [shape: bf16[128,128], index: 4, kind: input, shape index: {}]
  %s5 = inlined_call_operand.vmem [shape: f32[1,128], index: 5, kind: input, shape index: {}]
  %s6 = inlined_call_operand.hbm [shape: f32[2,128], index: 6, kind: output, shape index: {}]
  %s7 = sld [smem:[#allocation0]]
  $region42: #{bilstm_forward.3} parent=0
    _
  %s9 = ssub.s32 1, %s7
  %s10 = scalar_select 0, %s9, %s7
  $region1: #{bilstm_forward.3} parent=0
    #allocation3 [shape = 'u8[32768]{0}', space=vmem, size = 0x8000, scoped, tag = 'input window, operand 2, single buffered']
    #allocation4 [shape = 's32[1]{0}', space=sflag, size = 0x4, scoped, tag = 'scoped memory for bilstm_forward.3']
    #allocation5 [shape = 's32[1]{0}', space=sflag, size = 0x4, scoped, tag = 'scoped memory for bilstm_forward.3']
    #allocation6 [shape = 'u8[32768]{0}', space=vmem, size = 0x8000, scoped, tag = 'input window, operand 4, single buffered']
    #allocation7 [shape = 's32[1]{0}', space=sflag, size = 0x4, scoped, tag = 'scoped memory for bilstm_forward.3']
    #allocation8 [shape = 'u8[1024]{0}', space=vmem, size = 0x400, scoped, tag = 'output window, operand 0, single buffered']
    %11 = vsyncpa [#allocation4], 0
    %12 = vsyncpa [#allocation7], 0
    %13 = vsyncpa [#allocation5], 0
    // Predicated region
    $region2: #{bilstm_forward.3} parent=1 // pred_check
      _
    $region3: #{bilstm_forward.3} parent=1 // pred_check_branch
      %15 = sbr.rel (0) target = $region5
    $region4: #{bilstm_forward.3} parent=1 // pred_region
      _
    $region5: #{bilstm_forward.3} parent=1 // pred_fallthru
      _
    // Predicated region
    $region6: #{bilstm_forward.3} parent=1 // pred_check
      _
    $region7: #{bilstm_forward.3} parent=1 // pred_check_branch
      %17 = sbr.rel (0) target = $region9
    $region8: #{bilstm_forward.3} parent=1 // pred_region
      _
    $region9: #{bilstm_forward.3} parent=1 // pred_fallthru
      _
    // Predicated region
    $region10: #{bilstm_forward.3} parent=1 // pred_check
      _
    $region11: #{bilstm_forward.3} parent=1 // pred_check_branch
      %19 = sbr.rel (0) target = $region13
    $region12: #{bilstm_forward.3} parent=1 // pred_region
      %21 = vsyncadd [#allocation4], 0
      %s22 = sshll.u32 %s2, 4
      %s23 = int_to_ptr.hbm [resolvable:$true] %s22
      %s24 = sshll.u32 [#allocation3], 4
      %s25 = int_to_ptr.vmem [resolvable:$true] %s24
      %30 = dma.hbm_to_vmem [thread:$0]  %s23, 1024, %s25, [#allocation4], 128, 128, 8
    $region13: #{bilstm_forward.3} parent=1 // pred_fallthru
      _
    // Predicated region
    $region14: #{bilstm_forward.3} parent=1 // pred_check
      _
    $region15: #{bilstm_forward.3} parent=1 // pred_check_branch
      %32 = sbr.rel (0) target = $region17
    $region16: #{bilstm_forward.3} parent=1 // pred_region
      _
    $region17: #{bilstm_forward.3} parent=1 // pred_fallthru
      _
    // Predicated region
    $region18: #{bilstm_forward.3} parent=1 // pred_check
      _
    $region19: #{bilstm_forward.3} parent=1 // pred_check_branch
      %34 = sbr.rel (0) target = $region21
    $region20: #{bilstm_forward.3} parent=1 // pred_region
      %36 = vsyncadd [#allocation7], 0
      %s37 = sshll.u32 %s4, 4
      %s38 = int_to_ptr.hbm [resolvable:$true] %s37
      %s39 = sshll.u32 [#allocation6], 4
      %s40 = int_to_ptr.vmem [resolvable:$true] %s39
      %45 = dma.hbm_to_vmem [thread:$0]  %s38, 1024, %s40, [#allocation7], 64, 64, 4
    $region21: #{bilstm_forward.3} parent=1 // pred_fallthru
      _
    // Predicated region
    $region22: #{bilstm_forward.3} parent=1 // pred_check
      _
    $region23: #{bilstm_forward.3} parent=1 // pred_check_branch
      %47 = sbr.rel (0) target = $region25
    $region24: #{bilstm_forward.3} parent=1 // pred_region
      _
    $region25: #{bilstm_forward.3} parent=1 // pred_fallthru
      _
    // Predicated region
    $region26: #{bilstm_forward.3} parent=1 // pred_check
      _
    $region27: #{bilstm_forward.3} parent=1 // pred_check_branch
      %49 = sbr.rel (0) target = $region29
    $region28: #{bilstm_forward.3} parent=1 // pred_region
      %51 = dma.done [#allocation4], 1024
    $region29: #{bilstm_forward.3} parent=1 // pred_fallthru
      _
    // Predicated region
    $region30: #{bilstm_forward.3} parent=1 // pred_check
      _
    $region31: #{bilstm_forward.3} parent=1 // pred_check_branch
      %53 = sbr.rel (0) target = $region33
    $region32: #{bilstm_forward.3} parent=1 // pred_region
      %55 = dma.done [#allocation7], 1024
    $region33: #{bilstm_forward.3} parent=1 // pred_fallthru
      _
    %v57 = vld [vmem:[%s1] sm:$0xff]
    %v58 = vld [vmem:[%s1 + $0x8] sm:$0xff]
    %v59 = vld [vmem:[%s1 + $0x10] sm:$0xff]
    %v60 = vld [vmem:[%s1 + $0x18] sm:$0xff]
    %v61 = vld [vmem:[%s1 + $0x20] sm:$0xff]
    %v62 = vld [vmem:[%s1 + $0x28] sm:$0xff]
    %v63 = vld [vmem:[%s1 + $0x30] sm:$0xff]
    %v64 = vld [vmem:[%s1 + $0x38] sm:$0xff]
    %v65 = vld [vmem:[%s3] sm:$0x3]
    %v66 = vld [vmem:[%s0] sm:$0x1]
    %v68 = vperm.slane %v65, 0
    %v69 = vperm.slane %v65, 1
    %v80 = vunpack.c.l.b16 %v57
    %v81 = vunpack.c.h.b16 %v57
    %v82 = vunpack.c.l.b16 %v58
    %v83 = vunpack.c.h.b16 %v58
    %v84 = vunpack.c.l.b16 %v59
    %v85 = vunpack.c.h.b16 %v59
    %v86 = vunpack.c.l.b16 %v60
    %v87 = vunpack.c.h.b16 %v60
    %v88 = vunpack.c.l.b16 %v61
    %v89 = vunpack.c.h.b16 %v61
    %v90 = vunpack.c.l.b16 %v62
    %v91 = vunpack.c.h.b16 %v62
    %v92 = vunpack.c.l.b16 %v63
    %v93 = vunpack.c.h.b16 %v63
    %v94 = vunpack.c.l.b16 %v64
    %v95 = vunpack.c.h.b16 %v64
    %v96 = vpack.c.b16 %v82, %v80
    %v97 = vpack.c.b16 %v83, %v81
    %v98 = vpack.c.b16 %v86, %v84
    %v99 = vpack.c.b16 %v87, %v85
    %v100 = vpack.c.b16 %v90, %v88
    %v101 = vpack.c.b16 %v91, %v89
    %v102 = vpack.c.b16 %v94, %v92
    %v103 = vpack.c.b16 %v95, %v93
    %vm112 = vcmask 523264
    %v114 = vsel %vm112, %v66, 0
    %116 = vmatpush.bf16.msra.mxu0 0
    %117 = vmatpush.bf16.msra.mxu0 0
    %118 = vmatpush.bf16.msra.mxu0 0
    %119 = vmatpush.bf16.msra.mxu0 0
    %120 = vmatpush.bf16.msra.mxu0 %v102
    %121 = vmatpush.bf16.msra.mxu0 %v100
    %122 = vmatpush.bf16.msra.mxu0 %v98
    %123 = vmatpush.bf16.msra.mxu0 %v96
    %124 = vmatmul.bf16.gmra.mxu0 %v114
    %v125 = vpop.f32.mrf.mxu0
    %v126 = vadd.f32 %v68, %v125
    %v127 = vpop.f32.mrf.mxu0
    %128 = vdwg.mxu0
    %129 = vmatpush.bf16.msra.mxu0 0
    %130 = vmatpush.bf16.msra.mxu0 0
    %131 = vmatpush.bf16.msra.mxu0 0
    %132 = vmatpush.bf16.msra.mxu0 0
    %133 = vmatpush.bf16.msra.mxu0 %v103
    %134 = vmatpush.bf16.msra.mxu0 %v101
    %135 = vmatpush.bf16.msra.mxu0 %v99
    %136 = vmatpush.bf16.msra.mxu0 %v97
    %137 = vmatmul.bf16.gmra.mxu0 %v114
    %v138 = vpop.f32.mrf.mxu0
    %v139 = vadd.f32 %v69, %v138
    %v140 = vpop.f32.mrf.mxu0
    %141 = vdwg.mxu0
    %v144 = vrot.slane %v139, 6
    %vm145 = vcmask 1041408
    %v146 = vsel %vm145, %v126, %v144
    %148 = vst [vmem:[#allocation2] sm:$0xf] %v146
    %s149 = scalar_lea.vmem %s0, 1
    %v150 = vld [vmem:[%s149] sm:$0x1]
    %v152 = vsel %vm112, %v150, 0
    %154 = vmatpush.bf16.msra.mxu0 0
    %155 = vmatpush.bf16.msra.mxu0 0
    %156 = vmatpush.bf16.msra.mxu0 0
    %157 = vmatpush.bf16.msra.mxu0 0
    %158 = vmatpush.bf16.msra.mxu0 %v102
    %159 = vmatpush.bf16.msra.mxu0 %v100
    %160 = vmatpush.bf16.msra.mxu0 %v98
    %161 = vmatpush.bf16.msra.mxu0 %v96
    %162 = vmatmul.bf16.gmra.mxu0 %v152
    %v163 = vpop.f32.mrf.mxu0
    %v164 = vadd.f32 %v68, %v163
    %v165 = vpop.f32.mrf.mxu0
    %166 = vdwg.mxu0
    %167 = vmatpush.bf16.msra.mxu0 0
    %168 = vmatpush.bf16.msra.mxu0 0
    %169 = vmatpush.bf16.msra.mxu0 0
    %170 = vmatpush.bf16.msra.mxu0 0
    %171 = vmatpush.bf16.msra.mxu0 %v103
    %172 = vmatpush.bf16.msra.mxu0 %v101
    %173 = vmatpush.bf16.msra.mxu0 %v99
    %174 = vmatpush.bf16.msra.mxu0 %v97
    %175 = vmatmul.bf16.gmra.mxu0 %v152
    %v176 = vpop.f32.mrf.mxu0
    %v177 = vadd.f32 %v69, %v176
    %v178 = vpop.f32.mrf.mxu0
    %179 = vdwg.mxu0
    %v182 = vrot.slane %v177, 6
    %v183 = vsel %vm145, %v164, %v182
    %s185 = scalar_lea.vmem [#allocation2], 4
    %186 = vst [vmem:[%s185] sm:$0xf] %v183
    %s187 = scalar_lea.vmem %s0, 2
    %v188 = vld [vmem:[%s187] sm:$0x1]
    %v190 = vsel %vm112, %v188, 0
    %192 = vmatpush.bf16.msra.mxu0 0
    %193 = vmatpush.bf16.msra.mxu0 0
    %194 = vmatpush.bf16.msra.mxu0 0
    %195 = vmatpush.bf16.msra.mxu0 0
    %196 = vmatpush.bf16.msra.mxu0 %v102
    %197 = vmatpush.bf16.msra.mxu0 %v100
    %198 = vmatpush.bf16.msra.mxu0 %v98
    %199 = vmatpush.bf16.msra.mxu0 %v96
    %200 = vmatmul.bf16.gmra.mxu0 %v190
    %v201 = vpop.f32.mrf.mxu0
    %v202 = vadd.f32 %v68, %v201
    %v203 = vpop.f32.mrf.mxu0
    %204 = vdwg.mxu0
    %205 = vmatpush.bf16.msra.mxu0 0
    %206 = vmatpush.bf16.msra.mxu0 0
    %207 = vmatpush.bf16.msra.mxu0 0
    %208 = vmatpush.bf16.msra.mxu0 0
    %209 = vmatpush.bf16.msra.mxu0 %v103
    %210 = vmatpush.bf16.msra.mxu0 %v101
    %211 = vmatpush.bf16.msra.mxu0 %v99
    %212 = vmatpush.bf16.msra.mxu0 %v97
    %213 = vmatmul.bf16.gmra.mxu0 %v190
    %v214 = vpop.f32.mrf.mxu0
    %v215 = vadd.f32 %v69, %v214
    %v216 = vpop.f32.mrf.mxu0
    %217 = vdwg.mxu0
    %v220 = vrot.slane %v215, 6
    %v221 = vsel %vm145, %v202, %v220
    %s223 = scalar_lea.vmem [#allocation2], 8
    %224 = vst [vmem:[%s223] sm:$0xf] %v221
    %s225 = scalar_lea.vmem %s0, 3
    %v226 = vld [vmem:[%s225] sm:$0x1]
    %v228 = vsel %vm112, %v226, 0
    %230 = vmatpush.bf16.msra.mxu0 0
    %231 = vmatpush.bf16.msra.mxu0 0
    %232 = vmatpush.bf16.msra.mxu0 0
    %233 = vmatpush.bf16.msra.mxu0 0
    %234 = vmatpush.bf16.msra.mxu0 %v102
    %235 = vmatpush.bf16.msra.mxu0 %v100
    %236 = vmatpush.bf16.msra.mxu0 %v98
    %237 = vmatpush.bf16.msra.mxu0 %v96
    %238 = vmatmul.bf16.gmra.mxu0 %v228
    %v239 = vpop.f32.mrf.mxu0
    %v240 = vadd.f32 %v68, %v239
    %v241 = vpop.f32.mrf.mxu0
    %242 = vdwg.mxu0
    %243 = vmatpush.bf16.msra.mxu0 0
    %244 = vmatpush.bf16.msra.mxu0 0
    %245 = vmatpush.bf16.msra.mxu0 0
    %246 = vmatpush.bf16.msra.mxu0 0
    %247 = vmatpush.bf16.msra.mxu0 %v103
    %248 = vmatpush.bf16.msra.mxu0 %v101
    %249 = vmatpush.bf16.msra.mxu0 %v99
    %250 = vmatpush.bf16.msra.mxu0 %v97
    %251 = vmatmul.bf16.gmra.mxu0 %v228
    %v252 = vpop.f32.mrf.mxu0
    %v253 = vadd.f32 %v69, %v252
    %v254 = vpop.f32.mrf.mxu0
    %255 = vdwg.mxu0
    %v258 = vrot.slane %v253, 6
    %v259 = vsel %vm145, %v240, %v258
    %s261 = scalar_lea.vmem [#allocation2], 12
    %262 = vst [vmem:[%s261] sm:$0xf] %v259
    %s263 = scalar_lea.vmem %s0, 4
    %v264 = vld [vmem:[%s263] sm:$0x1]
    %v266 = vsel %vm112, %v264, 0
    %268 = vmatpush.bf16.msra.mxu0 0
    %269 = vmatpush.bf16.msra.mxu0 0
    %270 = vmatpush.bf16.msra.mxu0 0
    %271 = vmatpush.bf16.msra.mxu0 0
    %272 = vmatpush.bf16.msra.mxu0 %v102
    %273 = vmatpush.bf16.msra.mxu0 %v100
    %274 = vmatpush.bf16.msra.mxu0 %v98
    %275 = vmatpush.bf16.msra.mxu0 %v96
    %276 = vmatmul.bf16.gmra.mxu0 %v266
    %v277 = vpop.f32.mrf.mxu0
    %v278 = vadd.f32 %v68, %v277
    %v279 = vpop.f32.mrf.mxu0
    %280 = vdwg.mxu0
    %281 = vmatpush.bf16.msra.mxu0 0
    %282 = vmatpush.bf16.msra.mxu0 0
    %283 = vmatpush.bf16.msra.mxu0 0
    %284 = vmatpush.bf16.msra.mxu0 0
    %285 = vmatpush.bf16.msra.mxu0 %v103
    %286 = vmatpush.bf16.msra.mxu0 %v101
    %287 = vmatpush.bf16.msra.mxu0 %v99
    %288 = vmatpush.bf16.msra.mxu0 %v97
    %289 = vmatmul.bf16.gmra.mxu0 %v266
    %v290 = vpop.f32.mrf.mxu0
    %v291 = vadd.f32 %v69, %v290
    %v292 = vpop.f32.mrf.mxu0
    %293 = vdwg.mxu0
    %v296 = vrot.slane %v291, 6
    %v297 = vsel %vm145, %v278, %v296
    %s299 = scalar_lea.vmem [#allocation2], 16
    %300 = vst [vmem:[%s299] sm:$0xf] %v297
    %s301 = scalar_lea.vmem %s0, 5
    %v302 = vld [vmem:[%s301] sm:$0x1]
    %v304 = vsel %vm112, %v302, 0
    %306 = vmatpush.bf16.msra.mxu0 0
    %307 = vmatpush.bf16.msra.mxu0 0
    %308 = vmatpush.bf16.msra.mxu0 0
    %309 = vmatpush.bf16.msra.mxu0 0
    %310 = vmatpush.bf16.msra.mxu0 %v102
    %311 = vmatpush.bf16.msra.mxu0 %v100
    %312 = vmatpush.bf16.msra.mxu0 %v98
    %313 = vmatpush.bf16.msra.mxu0 %v96
    %314 = vmatmul.bf16.gmra.mxu0 %v304
    %v315 = vpop.f32.mrf.mxu0
    %v316 = vadd.f32 %v68, %v315
    %v317 = vpop.f32.mrf.mxu0
    %318 = vdwg.mxu0
    %319 = vmatpush.bf16.msra.mxu0 0
    %320 = vmatpush.bf16.msra.mxu0 0
    %321 = vmatpush.bf16.msra.mxu0 0
    %322 = vmatpush.bf16.msra.mxu0 0
    %323 = vmatpush.bf16.msra.mxu0 %v103
    %324 = vmatpush.bf16.msra.mxu0 %v101
    %325 = vmatpush.bf16.msra.mxu0 %v99
    %326 = vmatpush.bf16.msra.mxu0 %v97
    %327 = vmatmul.bf16.gmra.mxu0 %v304
    %v328 = vpop.f32.mrf.mxu0
    %v329 = vadd.f32 %v69, %v328
    %v330 = vpop.f32.mrf.mxu0
    %331 = vdwg.mxu0
    %v334 = vrot.slane %v329, 6
    %v335 = vsel %vm145, %v316, %v334
    %s337 = scalar_lea.vmem [#allocation2], 20
    %338 = vst [vmem:[%s337] sm:$0xf] %v335
    %s339 = scalar_lea.vmem %s0, 6
    %v340 = vld [vmem:[%s339] sm:$0x1]
    %v342 = vsel %vm112, %v340, 0
    %344 = vmatpush.bf16.msra.mxu0 0
    %345 = vmatpush.bf16.msra.mxu0 0
    %346 = vmatpush.bf16.msra.mxu0 0
    %347 = vmatpush.bf16.msra.mxu0 0
    %348 = vmatpush.bf16.msra.mxu0 %v102
    %349 = vmatpush.bf16.msra.mxu0 %v100
    %350 = vmatpush.bf16.msra.mxu0 %v98
    %351 = vmatpush.bf16.msra.mxu0 %v96
    %352 = vmatmul.bf16.gmra.mxu0 %v342
    %v353 = vpop.f32.mrf.mxu0
    %v354 = vadd.f32 %v68, %v353
    %v355 = vpop.f32.mrf.mxu0
    %356 = vdwg.mxu0
    %357 = vmatpush.bf16.msra.mxu0 0
    %358 = vmatpush.bf16.msra.mxu0 0
    %359 = vmatpush.bf16.msra.mxu0 0
    %360 = vmatpush.bf16.msra.mxu0 0
    %361 = vmatpush.bf16.msra.mxu0 %v103
    %362 = vmatpush.bf16.msra.mxu0 %v101
    %363 = vmatpush.bf16.msra.mxu0 %v99
    %364 = vmatpush.bf16.msra.mxu0 %v97
    %365 = vmatmul.bf16.gmra.mxu0 %v342
    %v366 = vpop.f32.mrf.mxu0
    %v367 = vadd.f32 %v69, %v366
    %v368 = vpop.f32.mrf.mxu0
    %369 = vdwg.mxu0
    %v372 = vrot.slane %v367, 6
    %v373 = vsel %vm145, %v354, %v372
    %s375 = scalar_lea.vmem [#allocation2], 24
    %376 = vst [vmem:[%s375] sm:$0xf] %v373
    %s377 = scalar_lea.vmem %s0, 7
    %v378 = vld [vmem:[%s377] sm:$0x1]
    %v380 = vsel %vm112, %v378, 0
    %382 = vmatpush.bf16.msra.mxu0 0
    %383 = vmatpush.bf16.msra.mxu0 0
    %384 = vmatpush.bf16.msra.mxu0 0
    %385 = vmatpush.bf16.msra.mxu0 0
    %386 = vmatpush.bf16.msra.mxu0 %v102
    %387 = vmatpush.bf16.msra.mxu0 %v100
    %388 = vmatpush.bf16.msra.mxu0 %v98
    %389 = vmatpush.bf16.msra.mxu0 %v96
    %390 = vmatmul.bf16.gmra.mxu0 %v380
    %v391 = vpop.f32.mrf.mxu0
    %v392 = vadd.f32 %v68, %v391
    %v393 = vpop.f32.mrf.mxu0
    %394 = vdwg.mxu0
    %395 = vmatpush.bf16.msra.mxu0 0
    %396 = vmatpush.bf16.msra.mxu0 0
    %397 = vmatpush.bf16.msra.mxu0 0
    %398 = vmatpush.bf16.msra.mxu0 0
    %399 = vmatpush.bf16.msra.mxu0 %v103
    %400 = vmatpush.bf16.msra.mxu0 %v101
    %401 = vmatpush.bf16.msra.mxu0 %v99
    %402 = vmatpush.bf16.msra.mxu0 %v97
    %403 = vmatmul.bf16.gmra.mxu0 %v380
    %v404 = vpop.f32.mrf.mxu0
    %v405 = vadd.f32 %v69, %v404
    %v406 = vpop.f32.mrf.mxu0
    %407 = vdwg.mxu0
    %v410 = vrot.slane %v405, 6
    %v411 = vsel %vm145, %v392, %v410
    %s413 = scalar_lea.vmem [#allocation2], 28
    %414 = vst [vmem:[%s413] sm:$0xf] %v411
    %v415 = vld [vmem:[#allocation3] sm:$0xff]
    %v416 = vld [vmem:[#allocation3 + $0x8] sm:$0xff]
    %v417 = vld [vmem:[#allocation3 + $0x10] sm:$0xff]
    %v418 = vld [vmem:[#allocation3 + $0x18] sm:$0xff]
    %v419 = vld [vmem:[#allocation3 + $0x20] sm:$0xff]
    %v420 = vld [vmem:[#allocation3 + $0x28] sm:$0xff]
    %v421 = vld [vmem:[#allocation3 + $0x30] sm:$0xff]
    %v422 = vld [vmem:[#allocation3 + $0x38] sm:$0xff]
    %v423 = vld [vmem:[#allocation2] sm:$0x3]
    %v424 = vld [vmem:[%s413 + $0x2] sm:$0x3]
    %v433 = vunpack.c.l.b16 %v415
    %v434 = vunpack.c.h.b16 %v415
    %v435 = vunpack.c.l.b16 %v416
    %v436 = vunpack.c.h.b16 %v416
    %v437 = vunpack.c.l.b16 %v417
    %v438 = vunpack.c.h.b16 %v417
    %v439 = vunpack.c.l.b16 %v418
    %v440 = vunpack.c.h.b16 %v418
    %v441 = vunpack.c.l.b16 %v419
    %v442 = vunpack.c.h.b16 %v419
    %v443 = vunpack.c.l.b16 %v420
    %v444 = vunpack.c.h.b16 %v420
    %v445 = vunpack.c.l.b16 %v421
    %v446 = vunpack.c.h.b16 %v421
    %v447 = vunpack.c.l.b16 %v422
    %v448 = vunpack.c.h.b16 %v422
    %v449 = vpack.c.b16 %v435, %v433
    %v450 = vpack.c.b16 %v436, %v434
    %v451 = vpack.c.b16 %v439, %v437
    %v452 = vpack.c.b16 %v440, %v438
    %v453 = vpack.c.b16 %v443, %v441
    %v454 = vpack.c.b16 %v444, %v442
    %v455 = vpack.c.b16 %v447, %v445
    %v456 = vpack.c.b16 %v448, %v446
    %v466 = vsel %vm112, 0, 0
    %468 = vmatpush.bf16.msra.mxu0 0
    %469 = vmatpush.bf16.msra.mxu0 0
    %470 = vmatpush.bf16.msra.mxu0 0
    %471 = vmatpush.bf16.msra.mxu0 0
    %472 = vmatpush.bf16.msra.mxu0 %v455
    %473 = vmatpush.bf16.msra.mxu0 %v453
    %474 = vmatpush.bf16.msra.mxu0 %v451
    %475 = vmatpush.bf16.msra.mxu0 %v449
    %476 = vmatmul.bf16.gmra.mxu0 %v466
    %v477 = vpop.f32.mrf.mxu0
    %v478 = vadd.f32 0.0, %v477
    %v479 = vpop.f32.mrf.mxu0
    %480 = vdwg.mxu0
    %481 = vmatpush.bf16.msra.mxu0 0
    %482 = vmatpush.bf16.msra.mxu0 0
    %483 = vmatpush.bf16.msra.mxu0 0
    %484 = vmatpush.bf16.msra.mxu0 0
    %485 = vmatpush.bf16.msra.mxu0 %v456
    %486 = vmatpush.bf16.msra.mxu0 %v454
    %487 = vmatpush.bf16.msra.mxu0 %v452
    %488 = vmatpush.bf16.msra.mxu0 %v450
    %489 = vmatmul.bf16.gmra.mxu0 %v466
    %v490 = vpop.f32.mrf.mxu0
    %v491 = vadd.f32 0.0, %v490
    %v492 = vpop.f32.mrf.mxu0
    %493 = vdwg.mxu0
    %v494 = vadd.f32 %v423, %v478
    %v495 = vadd.f32 %v424, %v491
    %v496 = vxor.u32 %v494, 2147483648
    %v497 = vmul.f32 %v496, 1.442695
    %v498 = vpow.pop %v497
    %v499 = vadd.f32 %v498, 1.0
    %v500 = vrcp.pop %v499
    %v501 = vmul.f32 %v499, %v500
    %v502 = vsub.f32 1.0, %v501
    %v503 = vmul.f32 %v500, %v502
    %v504 = vadd.f32 %v500, %v503
    %vm505 = vweird.f32 %v499
    %vm506 = vweird.f32 %v500
    %vm507 = vmor %vm505, %vm506
    %v508 = vsel %vm507, %v500, %v504
    %v509 = vand.u32 2147483647, %v499
    %vm510 = vcmp.eq.f32.partialorder %v509, 8.507059e+37
    %v511 = vand.u32 %v499, 2147483648
    %v512 = vor.u32 1.1754944e-38, %v511
    %v513 = vsel %vm510, %v512, %v508
    %v514 = vmul.f32 1.0, %v513
    %v515 = vtanh.pop %v494
    %v516 = vmul.f32 %v514, 0.0
    %518 = vrot.lane.b32.xlu0 %v515, 64
    %v519 = vpop.permute.xlu0 %518
    %v521 = vmul.f32 %v514, %v519
    %523 = vrot.lane.b32.xlu0 %v521, 32
    %v524 = vpop.permute.xlu0 %523
    %v526 = vadd.f32 %v516, %v524
    %v527 = vtanh.pop %v526
    %529 = vrot.lane.b32.xlu0 %v527, 64
    %v530 = vpop.permute.xlu0 %529
    %v532 = vmul.f32 %v514, %v530
    %v533 = vxor.u32 %v495, 2147483648
    %v534 = vmul.f32 %v533, 1.442695
    %v535 = vpow.pop %v534
    %v536 = vadd.f32 %v535, 1.0
    %v537 = vrcp.pop %v536
    %v538 = vmul.f32 %v536, %v537
    %v539 = vsub.f32 1.0, %v538
    %v540 = vmul.f32 %v537, %v539
    %v541 = vadd.f32 %v537, %v540
    %vm542 = vweird.f32 %v536
    %vm543 = vweird.f32 %v537
    %vm544 = vmor %vm542, %vm543
    %v545 = vsel %vm544, %v537, %v541
    %v546 = vand.u32 2147483647, %v536
    %vm547 = vcmp.eq.f32.partialorder %v546, 8.507059e+37
    %v548 = vand.u32 %v536, 2147483648
    %v549 = vor.u32 1.1754944e-38, %v548
    %v550 = vsel %vm547, %v549, %v545
    %v551 = vmul.f32 1.0, %v550
    %v552 = vtanh.pop %v495
    %v553 = vmul.f32 %v551, 0.0
    %555 = vrot.lane.b32.xlu0 %v552, 64
    %v556 = vpop.permute.xlu0 %555
    %v558 = vmul.f32 %v551, %v556
    %560 = vrot.lane.b32.xlu0 %v558, 32
    %v561 = vpop.permute.xlu0 %560
    %v563 = vadd.f32 %v553, %v561
    %v564 = vtanh.pop %v563
    %566 = vrot.lane.b32.xlu0 %v564, 64
    %v567 = vpop.permute.xlu0 %566
    %v569 = vmul.f32 %v551, %v567
    %571 = vrot.lane.b32.xlu0 %v526, 96
    %v572 = vpop.permute.xlu0 %571
    %vm574 = vcmask 261120
    %v575 = vsel %vm574, %v572, %v563
    %577 = vrot.lane.b32.xlu0 %v532, 32
    %v578 = vpop.permute.xlu0 %577
    %581 = vrot.lane.b32.xlu0 %v569, 64
    %v582 = vpop.permute.xlu0 %581
    %v584 = vsel %vm574, %v578, %v582
    %v585 = vld [vmem:[%s185] sm:$0x3]
    %v586 = vld [vmem:[%s375 + $0x2] sm:$0x3]
    %v587 = vpack.c.bf16 %v584, %v584
    %v589 = vsel %vm112, %v587, 0
    %591 = vmatpush.bf16.msra.mxu0 0
    %592 = vmatpush.bf16.msra.mxu0 0
    %593 = vmatpush.bf16.msra.mxu0 0
    %594 = vmatpush.bf16.msra.mxu0 0
    %595 = vmatpush.bf16.msra.mxu0 %v455
    %596 = vmatpush.bf16.msra.mxu0 %v453
    %597 = vmatpush.bf16.msra.mxu0 %v451
    %598 = vmatpush.bf16.msra.mxu0 %v449
    %599 = vmatmul.bf16.gmra.mxu0 %v589
    %v600 = vpop.f32.mrf.mxu0
    %v601 = vadd.f32 0.0, %v600
    %v602 = vpop.f32.mrf.mxu0
    %603 = vdwg.mxu0
    %604 = vmatpush.bf16.msra.mxu0 0
    %605 = vmatpush.bf16.msra.mxu0 0
    %606 = vmatpush.bf16.msra.mxu0 0
    %607 = vmatpush.bf16.msra.mxu0 0
    %608 = vmatpush.bf16.msra.mxu0 %v456
    %609 = vmatpush.bf16.msra.mxu0 %v454
    %610 = vmatpush.bf16.msra.mxu0 %v452
    %611 = vmatpush.bf16.msra.mxu0 %v450
    %612 = vmatmul.bf16.gmra.mxu0 %v589
    %v613 = vpop.f32.mrf.mxu0
    %v614 = vadd.f32 0.0, %v613
    %v615 = vpop.f32.mrf.mxu0
    %616 = vdwg.mxu0
    %v617 = vadd.f32 %v585, %v601
    %v618 = vadd.f32 %v586, %v614
    %v619 = vxor.u32 %v617, 2147483648
    %v620 = vmul.f32 %v619, 1.442695
    %v621 = vpow.pop %v620
    %v622 = vadd.f32 %v621, 1.0
    %v623 = vrcp.pop %v622
    %v624 = vmul.f32 %v622, %v623
    %v625 = vsub.f32 1.0, %v624
    %v626 = vmul.f32 %v623, %v625
    %v627 = vadd.f32 %v623, %v626
    %vm628 = vweird.f32 %v622
    %vm629 = vweird.f32 %v623
    %vm630 = vmor %vm628, %vm629
    %v631 = vsel %vm630, %v623, %v627
    %v632 = vand.u32 2147483647, %v622
    %vm633 = vcmp.eq.f32.partialorder %v632, 8.507059e+37
    %v634 = vand.u32 %v622, 2147483648
    %v635 = vor.u32 1.1754944e-38, %v634
    %v636 = vsel %vm633, %v635, %v631
    %v637 = vmul.f32 1.0, %v636
    %v638 = vtanh.pop %v617
    %640 = vrot.lane.b32.xlu0 %v575, 32
    %v641 = vpop.permute.xlu0 %640
    %v643 = vmul.f32 %v637, %v641
    %645 = vrot.lane.b32.xlu0 %v638, 64
    %v646 = vpop.permute.xlu0 %645
    %v648 = vmul.f32 %v637, %v646
    %650 = vrot.lane.b32.xlu0 %v648, 32
    %v651 = vpop.permute.xlu0 %650
    %v653 = vadd.f32 %v643, %v651
    %v654 = vtanh.pop %v653
    %656 = vrot.lane.b32.xlu0 %v654, 64
    %v657 = vpop.permute.xlu0 %656
    %v659 = vmul.f32 %v637, %v657
    %v660 = vxor.u32 %v618, 2147483648
    %v661 = vmul.f32 %v660, 1.442695
    %v662 = vpow.pop %v661
    %v663 = vadd.f32 %v662, 1.0
    %v664 = vrcp.pop %v663
    %v665 = vmul.f32 %v663, %v664
    %v666 = vsub.f32 1.0, %v665
    %v667 = vmul.f32 %v664, %v666
    %v668 = vadd.f32 %v664, %v667
    %vm669 = vweird.f32 %v663
    %vm670 = vweird.f32 %v664
    %vm671 = vmor %vm669, %vm670
    %v672 = vsel %vm671, %v664, %v668
    %v673 = vand.u32 2147483647, %v663
    %vm674 = vcmp.eq.f32.partialorder %v673, 8.507059e+37
    %v675 = vand.u32 %v663, 2147483648
    %v676 = vor.u32 1.1754944e-38, %v675
    %v677 = vsel %vm674, %v676, %v672
    %v678 = vmul.f32 1.0, %v677
    %v679 = vtanh.pop %v618
    %v680 = vmul.f32 %v678, %v575
    %682 = vrot.lane.b32.xlu0 %v679, 64
    %v683 = vpop.permute.xlu0 %682
    %v685 = vmul.f32 %v678, %v683
    %687 = vrot.lane.b32.xlu0 %v685, 32
    %v688 = vpop.permute.xlu0 %687
    %v690 = vadd.f32 %v680, %v688
    %v691 = vtanh.pop %v690
    %693 = vrot.lane.b32.xlu0 %v691, 64
    %v694 = vpop.permute.xlu0 %693
    %v696 = vmul.f32 %v678, %v694
    %698 = vrot.lane.b32.xlu0 %v653, 96
    %v699 = vpop.permute.xlu0 %698
    %v701 = vsel %vm574, %v699, %v690
    %703 = vrot.lane.b32.xlu0 %v659, 32
    %v704 = vpop.permute.xlu0 %703
    %707 = vrot.lane.b32.xlu0 %v696, 64
    %v708 = vpop.permute.xlu0 %707
    %v710 = vsel %vm574, %v704, %v708
    %v711 = vld [vmem:[%s223] sm:$0x3]
    %v712 = vld [vmem:[%s337 + $0x2] sm:$0x3]
    %v713 = vpack.c.bf16 %v710, %v710
    %v715 = vsel %vm112, %v713, 0
    %717 = vmatpush.bf16.msra.mxu0 0
    %718 = vmatpush.bf16.msra.mxu0 0
    %719 = vmatpush.bf16.msra.mxu0 0
    %720 = vmatpush.bf16.msra.mxu0 0
    %721 = vmatpush.bf16.msra.mxu0 %v455
    %722 = vmatpush.bf16.msra.mxu0 %v453
    %723 = vmatpush.bf16.msra.mxu0 %v451
    %724 = vmatpush.bf16.msra.mxu0 %v449
    %725 = vmatmul.bf16.gmra.mxu0 %v715
    %v726 = vpop.f32.mrf.mxu0
    %v727 = vadd.f32 0.0, %v726
    %v728 = vpop.f32.mrf.mxu0
    %729 = vdwg.mxu0
    %730 = vmatpush.bf16.msra.mxu0 0
    %731 = vmatpush.bf16.msra.mxu0 0
    %732 = vmatpush.bf16.msra.mxu0 0
    %733 = vmatpush.bf16.msra.mxu0 0
    %734 = vmatpush.bf16.msra.mxu0 %v456
    %735 = vmatpush.bf16.msra.mxu0 %v454
    %736 = vmatpush.bf16.msra.mxu0 %v452
    %737 = vmatpush.bf16.msra.mxu0 %v450
    %738 = vmatmul.bf16.gmra.mxu0 %v715
    %v739 = vpop.f32.mrf.mxu0
    %v740 = vadd.f32 0.0, %v739
    %v741 = vpop.f32.mrf.mxu0
    %742 = vdwg.mxu0
    %v743 = vadd.f32 %v711, %v727
    %v744 = vadd.f32 %v712, %v740
    %v745 = vxor.u32 %v743, 2147483648
    %v746 = vmul.f32 %v745, 1.442695
    %v747 = vpow.pop %v746
    %v748 = vadd.f32 %v747, 1.0
    %v749 = vrcp.pop %v748
    %v750 = vmul.f32 %v748, %v749
    %v751 = vsub.f32 1.0, %v750
    %v752 = vmul.f32 %v749, %v751
    %v753 = vadd.f32 %v749, %v752
    %vm754 = vweird.f32 %v748
    %vm755 = vweird.f32 %v749
    %vm756 = vmor %vm754, %vm755
    %v757 = vsel %vm756, %v749, %v753
    %v758 = vand.u32 2147483647, %v748
    %vm759 = vcmp.eq.f32.partialorder %v758, 8.507059e+37
    %v760 = vand.u32 %v748, 2147483648
    %v761 = vor.u32 1.1754944e-38, %v760
    %v762 = vsel %vm759, %v761, %v757
    %v763 = vmul.f32 1.0, %v762
    %v764 = vtanh.pop %v743
    %766 = vrot.lane.b32.xlu0 %v701, 32
    %v767 = vpop.permute.xlu0 %766
    %v769 = vmul.f32 %v763, %v767
    %771 = vrot.lane.b32.xlu0 %v764, 64
    %v772 = vpop.permute.xlu0 %771
    %v774 = vmul.f32 %v763, %v772
    %776 = vrot.lane.b32.xlu0 %v774, 32
    %v777 = vpop.permute.xlu0 %776
    %v779 = vadd.f32 %v769, %v777
    %v780 = vtanh.pop %v779
    %782 = vrot.lane.b32.xlu0 %v780, 64
    %v783 = vpop.permute.xlu0 %782
    %v785 = vmul.f32 %v763, %v783
    %v786 = vxor.u32 %v744, 2147483648
    %v787 = vmul.f32 %v786, 1.442695
    %v788 = vpow.pop %v787
    %v789 = vadd.f32 %v788, 1.0
    %v790 = vrcp.pop %v789
    %v791 = vmul.f32 %v789, %v790
    %v792 = vsub.f32 1.0, %v791
    %v793 = vmul.f32 %v790, %v792
    %v794 = vadd.f32 %v790, %v793
    %vm795 = vweird.f32 %v789
    %vm796 = vweird.f32 %v790
    %vm797 = vmor %vm795, %vm796
    %v798 = vsel %vm797, %v790, %v794
    %v799 = vand.u32 2147483647, %v789
    %vm800 = vcmp.eq.f32.partialorder %v799, 8.507059e+37
    %v801 = vand.u32 %v789, 2147483648
    %v802 = vor.u32 1.1754944e-38, %v801
    %v803 = vsel %vm800, %v802, %v798
    %v804 = vmul.f32 1.0, %v803
    %v805 = vtanh.pop %v744
    %v806 = vmul.f32 %v804, %v701
    %808 = vrot.lane.b32.xlu0 %v805, 64
    %v809 = vpop.permute.xlu0 %808
    %v811 = vmul.f32 %v804, %v809
    %813 = vrot.lane.b32.xlu0 %v811, 32
    %v814 = vpop.permute.xlu0 %813
    %v816 = vadd.f32 %v806, %v814
    %v817 = vtanh.pop %v816
    %819 = vrot.lane.b32.xlu0 %v817, 64
    %v820 = vpop.permute.xlu0 %819
    %v822 = vmul.f32 %v804, %v820
    %824 = vrot.lane.b32.xlu0 %v779, 96
    %v825 = vpop.permute.xlu0 %824
    %v827 = vsel %vm574, %v825, %v816
    %829 = vrot.lane.b32.xlu0 %v785, 32
    %v830 = vpop.permute.xlu0 %829
    %833 = vrot.lane.b32.xlu0 %v822, 64
    %v834 = vpop.permute.xlu0 %833
    %v836 = vsel %vm574, %v830, %v834
    %v837 = vld [vmem:[%s261] sm:$0x3]
    %v838 = vld [vmem:[%s299 + $0x2] sm:$0x3]
    %v839 = vpack.c.bf16 %v836, %v836
    %v841 = vsel %vm112, %v839, 0
    %843 = vmatpush.bf16.msra.mxu0 0
    %844 = vmatpush.bf16.msra.mxu0 0
    %845 = vmatpush.bf16.msra.mxu0 0
    %846 = vmatpush.bf16.msra.mxu0 0
    %847 = vmatpush.bf16.msra.mxu0 %v455
    %848 = vmatpush.bf16.msra.mxu0 %v453
    %849 = vmatpush.bf16.msra.mxu0 %v451
    %850 = vmatpush.bf16.msra.mxu0 %v449
    %851 = vmatmul.bf16.gmra.mxu0 %v841
    %v852 = vpop.f32.mrf.mxu0
    %v853 = vadd.f32 0.0, %v852
    %v854 = vpop.f32.mrf.mxu0
    %855 = vdwg.mxu0
    %856 = vmatpush.bf16.msra.mxu0 0
    %857 = vmatpush.bf16.msra.mxu0 0
    %858 = vmatpush.bf16.msra.mxu0 0
    %859 = vmatpush.bf16.msra.mxu0 0
    %860 = vmatpush.bf16.msra.mxu0 %v456
    %861 = vmatpush.bf16.msra.mxu0 %v454
    %862 = vmatpush.bf16.msra.mxu0 %v452
    %863 = vmatpush.bf16.msra.mxu0 %v450
    %864 = vmatmul.bf16.gmra.mxu0 %v841
    %v865 = vpop.f32.mrf.mxu0
    %v866 = vadd.f32 0.0, %v865
    %v867 = vpop.f32.mrf.mxu0
    %868 = vdwg.mxu0
    %v869 = vadd.f32 %v837, %v853
    %v870 = vadd.f32 %v838, %v866
    %v871 = vxor.u32 %v869, 2147483648
    %v872 = vmul.f32 %v871, 1.442695
    %v873 = vpow.pop %v872
    %v874 = vadd.f32 %v873, 1.0
    %v875 = vrcp.pop %v874
    %v876 = vmul.f32 %v874, %v875
    %v877 = vsub.f32 1.0, %v876
    %v878 = vmul.f32 %v875, %v877
    %v879 = vadd.f32 %v875, %v878
    %vm880 = vweird.f32 %v874
    %vm881 = vweird.f32 %v875
    %vm882 = vmor %vm880, %vm881
    %v883 = vsel %vm882, %v875, %v879
    %v884 = vand.u32 2147483647, %v874
    %vm885 = vcmp.eq.f32.partialorder %v884, 8.507059e+37
    %v886 = vand.u32 %v874, 2147483648
    %v887 = vor.u32 1.1754944e-38, %v886
    %v888 = vsel %vm885, %v887, %v883
    %v889 = vmul.f32 1.0, %v888
    %v890 = vtanh.pop %v869
    %892 = vrot.lane.b32.xlu0 %v827, 32
    %v893 = vpop.permute.xlu0 %892
    %v895 = vmul.f32 %v889, %v893
    %897 = vrot.lane.b32.xlu0 %v890, 64
    %v898 = vpop.permute.xlu0 %897
    %v900 = vmul.f32 %v889, %v898
    %902 = vrot.lane.b32.xlu0 %v900, 32
    %v903 = vpop.permute.xlu0 %902
    %v905 = vadd.f32 %v895, %v903
    %v906 = vtanh.pop %v905
    %908 = vrot.lane.b32.xlu0 %v906, 64
    %v909 = vpop.permute.xlu0 %908
    %v911 = vmul.f32 %v889, %v909
    %v912 = vxor.u32 %v870, 2147483648
    %v913 = vmul.f32 %v912, 1.442695
    %v914 = vpow.pop %v913
    %v915 = vadd.f32 %v914, 1.0
    %v916 = vrcp.pop %v915
    %v917 = vmul.f32 %v915, %v916
    %v918 = vsub.f32 1.0, %v917
    %v919 = vmul.f32 %v916, %v918
    %v920 = vadd.f32 %v916, %v919
    %vm921 = vweird.f32 %v915
    %vm922 = vweird.f32 %v916
    %vm923 = vmor %vm921, %vm922
    %v924 = vsel %vm923, %v916, %v920
    %v925 = vand.u32 2147483647, %v915
    %vm926 = vcmp.eq.f32.partialorder %v925, 8.507059e+37
    %v927 = vand.u32 %v915, 2147483648
    %v928 = vor.u32 1.1754944e-38, %v927
    %v929 = vsel %vm926, %v928, %v924
    %v930 = vmul.f32 1.0, %v929
    %v931 = vtanh.pop %v870
    %v932 = vmul.f32 %v930, %v827
    %934 = vrot.lane.b32.xlu0 %v931, 64
    %v935 = vpop.permute.xlu0 %934
    %v937 = vmul.f32 %v930, %v935
    %939 = vrot.lane.b32.xlu0 %v937, 32
    %v940 = vpop.permute.xlu0 %939
    %v942 = vadd.f32 %v932, %v940
    %v943 = vtanh.pop %v942
    %945 = vrot.lane.b32.xlu0 %v943, 64
    %v946 = vpop.permute.xlu0 %945
    %v948 = vmul.f32 %v930, %v946
    %950 = vrot.lane.b32.xlu0 %v905, 96
    %v951 = vpop.permute.xlu0 %950
    %v953 = vsel %vm574, %v951, %v942
    %955 = vrot.lane.b32.xlu0 %v911, 32
    %v956 = vpop.permute.xlu0 %955
    %959 = vrot.lane.b32.xlu0 %v948, 64
    %v960 = vpop.permute.xlu0 %959
    %v962 = vsel %vm574, %v956, %v960
    %v963 = vld [vmem:[%s299] sm:$0x3]
    %v964 = vld [vmem:[%s261 + $0x2] sm:$0x3]
    %v965 = vpack.c.bf16 %v962, %v962
    %v967 = vsel %vm112, %v965, 0
    %969 = vmatpush.bf16.msra.mxu0 0
    %970 = vmatpush.bf16.msra.mxu0 0
    %971 = vmatpush.bf16.msra.mxu0 0
    %972 = vmatpush.bf16.msra.mxu0 0
    %973 = vmatpush.bf16.msra.mxu0 %v455
    %974 = vmatpush.bf16.msra.mxu0 %v453
    %975 = vmatpush.bf16.msra.mxu0 %v451
    %976 = vmatpush.bf16.msra.mxu0 %v449
    %977 = vmatmul.bf16.gmra.mxu0 %v967
    %v978 = vpop.f32.mrf.mxu0
    %v979 = vadd.f32 0.0, %v978
    %v980 = vpop.f32.mrf.mxu0
    %981 = vdwg.mxu0
    %982 = vmatpush.bf16.msra.mxu0 0
    %983 = vmatpush.bf16.msra.mxu0 0
    %984 = vmatpush.bf16.msra.mxu0 0
    %985 = vmatpush.bf16.msra.mxu0 0
    %986 = vmatpush.bf16.msra.mxu0 %v456
    %987 = vmatpush.bf16.msra.mxu0 %v454
    %988 = vmatpush.bf16.msra.mxu0 %v452
    %989 = vmatpush.bf16.msra.mxu0 %v450
    %990 = vmatmul.bf16.gmra.mxu0 %v967
    %v991 = vpop.f32.mrf.mxu0
    %v992 = vadd.f32 0.0, %v991
    %v993 = vpop.f32.mrf.mxu0
    %994 = vdwg.mxu0
    %v995 = vadd.f32 %v963, %v979
    %v996 = vadd.f32 %v964, %v992
    %v997 = vxor.u32 %v995, 2147483648
    %v998 = vmul.f32 %v997, 1.442695
    %v999 = vpow.pop %v998
    %v1000 = vadd.f32 %v999, 1.0
    %v1001 = vrcp.pop %v1000
    %v1002 = vmul.f32 %v1000, %v1001
    %v1003 = vsub.f32 1.0, %v1002
    %v1004 = vmul.f32 %v1001, %v1003
    %v1005 = vadd.f32 %v1001, %v1004
    %vm1006 = vweird.f32 %v1000
    %vm1007 = vweird.f32 %v1001
    %vm1008 = vmor %vm1006, %vm1007
    %v1009 = vsel %vm1008, %v1001, %v1005
    %v1010 = vand.u32 2147483647, %v1000
    %vm1011 = vcmp.eq.f32.partialorder %v1010, 8.507059e+37
    %v1012 = vand.u32 %v1000, 2147483648
    %v1013 = vor.u32 1.1754944e-38, %v1012
    %v1014 = vsel %vm1011, %v1013, %v1009
    %v1015 = vmul.f32 1.0, %v1014
    %v1016 = vtanh.pop %v995
    %1018 = vrot.lane.b32.xlu0 %v953, 32
    %v1019 = vpop.permute.xlu0 %1018
    %v1021 = vmul.f32 %v1015, %v1019
    %1023 = vrot.lane.b32.xlu0 %v1016, 64
    %v1024 = vpop.permute.xlu0 %1023
    %v1026 = vmul.f32 %v1015, %v1024
    %1028 = vrot.lane.b32.xlu0 %v1026, 32
    %v1029 = vpop.permute.xlu0 %1028
    %v1031 = vadd.f32 %v1021, %v1029
    %v1032 = vtanh.pop %v1031
    %1034 = vrot.lane.b32.xlu0 %v1032, 64
    %v1035 = vpop.permute.xlu0 %1034
    %v1037 = vmul.f32 %v1015, %v1035
    %v1038 = vxor.u32 %v996, 2147483648
    %v1039 = vmul.f32 %v1038, 1.442695
    %v1040 = vpow.pop %v1039
    %v1041 = vadd.f32 %v1040, 1.0
    %v1042 = vrcp.pop %v1041
    %v1043 = vmul.f32 %v1041, %v1042
    %v1044 = vsub.f32 1.0, %v1043
    %v1045 = vmul.f32 %v1042, %v1044
    %v1046 = vadd.f32 %v1042, %v1045
    %vm1047 = vweird.f32 %v1041
    %vm1048 = vweird.f32 %v1042
    %vm1049 = vmor %vm1047, %vm1048
    %v1050 = vsel %vm1049, %v1042, %v1046
    %v1051 = vand.u32 2147483647, %v1041
    %vm1052 = vcmp.eq.f32.partialorder %v1051, 8.507059e+37
    %v1053 = vand.u32 %v1041, 2147483648
    %v1054 = vor.u32 1.1754944e-38, %v1053
    %v1055 = vsel %vm1052, %v1054, %v1050
    %v1056 = vmul.f32 1.0, %v1055
    %v1057 = vtanh.pop %v996
    %v1058 = vmul.f32 %v1056, %v953
    %1060 = vrot.lane.b32.xlu0 %v1057, 64
    %v1061 = vpop.permute.xlu0 %1060
    %v1063 = vmul.f32 %v1056, %v1061
    %1065 = vrot.lane.b32.xlu0 %v1063, 32
    %v1066 = vpop.permute.xlu0 %1065
    %v1068 = vadd.f32 %v1058, %v1066
    %v1069 = vtanh.pop %v1068
    %1071 = vrot.lane.b32.xlu0 %v1069, 64
    %v1072 = vpop.permute.xlu0 %1071
    %v1074 = vmul.f32 %v1056, %v1072
    %1076 = vrot.lane.b32.xlu0 %v1031, 96
    %v1077 = vpop.permute.xlu0 %1076
    %v1079 = vsel %vm574, %v1077, %v1068
    %1081 = vrot.lane.b32.xlu0 %v1037, 32
    %v1082 = vpop.permute.xlu0 %1081
    %1085 = vrot.lane.b32.xlu0 %v1074, 64
    %v1086 = vpop.permute.xlu0 %1085
    %v1088 = vsel %vm574, %v1082, %v1086
    %v1089 = vld [vmem:[%s337] sm:$0x3]
    %v1090 = vld [vmem:[%s223 + $0x2] sm:$0x3]
    %v1091 = vpack.c.bf16 %v1088, %v1088
    %v1093 = vsel %vm112, %v1091, 0
    %1095 = vmatpush.bf16.msra.mxu0 0
    %1096 = vmatpush.bf16.msra.mxu0 0
    %1097 = vmatpush.bf16.msra.mxu0 0
    %1098 = vmatpush.bf16.msra.mxu0 0
    %1099 = vmatpush.bf16.msra.mxu0 %v455
    %1100 = vmatpush.bf16.msra.mxu0 %v453
    %1101 = vmatpush.bf16.msra.mxu0 %v451
    %1102 = vmatpush.bf16.msra.mxu0 %v449
    %1103 = vmatmul.bf16.gmra.mxu0 %v1093
    %v1104 = vpop.f32.mrf.mxu0
    %v1105 = vadd.f32 0.0, %v1104
    %v1106 = vpop.f32.mrf.mxu0
    %1107 = vdwg.mxu0
    %1108 = vmatpush.bf16.msra.mxu0 0
    %1109 = vmatpush.bf16.msra.mxu0 0
    %1110 = vmatpush.bf16.msra.mxu0 0
    %1111 = vmatpush.bf16.msra.mxu0 0
    %1112 = vmatpush.bf16.msra.mxu0 %v456
    %1113 = vmatpush.bf16.msra.mxu0 %v454
    %1114 = vmatpush.bf16.msra.mxu0 %v452
    %1115 = vmatpush.bf16.msra.mxu0 %v450
    %1116 = vmatmul.bf16.gmra.mxu0 %v1093
    %v1117 = vpop.f32.mrf.mxu0
    %v1118 = vadd.f32 0.0, %v1117
    %v1119 = vpop.f32.mrf.mxu0
    %1120 = vdwg.mxu0
    %v1121 = vadd.f32 %v1089, %v1105
    %v1122 = vadd.f32 %v1090, %v1118
    %v1123 = vxor.u32 %v1121, 2147483648
    %v1124 = vmul.f32 %v1123, 1.442695
    %v1125 = vpow.pop %v1124
    %v1126 = vadd.f32 %v1125, 1.0
    %v1127 = vrcp.pop %v1126
    %v1128 = vmul.f32 %v1126, %v1127
    %v1129 = vsub.f32 1.0, %v1128
    %v1130 = vmul.f32 %v1127, %v1129
    %v1131 = vadd.f32 %v1127, %v1130
    %vm1132 = vweird.f32 %v1126
    %vm1133 = vweird.f32 %v1127
    %vm1134 = vmor %vm1132, %vm1133
    %v1135 = vsel %vm1134, %v1127, %v1131
    %v1136 = vand.u32 2147483647, %v1126
    %vm1137 = vcmp.eq.f32.partialorder %v1136, 8.507059e+37
    %v1138 = vand.u32 %v1126, 2147483648
    %v1139 = vor.u32 1.1754944e-38, %v1138
    %v1140 = vsel %vm1137, %v1139, %v1135
    %v1141 = vmul.f32 1.0, %v1140
    %v1142 = vtanh.pop %v1121
    %1144 = vrot.lane.b32.xlu0 %v1079, 32
    %v1145 = vpop.permute.xlu0 %1144
    %v1147 = vmul.f32 %v1141, %v1145
    %1149 = vrot.lane.b32.xlu0 %v1142, 64
    %v1150 = vpop.permute.xlu0 %1149
    %v1152 = vmul.f32 %v1141, %v1150
    %1154 = vrot.lane.b32.xlu0 %v1152, 32
    %v1155 = vpop.permute.xlu0 %1154
    %v1157 = vadd.f32 %v1147, %v1155
    %v1158 = vtanh.pop %v1157
    %1160 = vrot.lane.b32.xlu0 %v1158, 64
    %v1161 = vpop.permute.xlu0 %1160
    %v1163 = vmul.f32 %v1141, %v1161
    %v1164 = vxor.u32 %v1122, 2147483648
    %v1165 = vmul.f32 %v1164, 1.442695
    %v1166 = vpow.pop %v1165
    %v1167 = vadd.f32 %v1166, 1.0
    %v1168 = vrcp.pop %v1167
    %v1169 = vmul.f32 %v1167, %v1168
    %v1170 = vsub.f32 1.0, %v1169
    %v1171 = vmul.f32 %v1168, %v1170
    %v1172 = vadd.f32 %v1168, %v1171
    %vm1173 = vweird.f32 %v1167
    %vm1174 = vweird.f32 %v1168
    %vm1175 = vmor %vm1173, %vm1174
    %v1176 = vsel %vm1175, %v1168, %v1172
    %v1177 = vand.u32 2147483647, %v1167
    %vm1178 = vcmp.eq.f32.partialorder %v1177, 8.507059e+37
    %v1179 = vand.u32 %v1167, 2147483648
    %v1180 = vor.u32 1.1754944e-38, %v1179
    %v1181 = vsel %vm1178, %v1180, %v1176
    %v1182 = vmul.f32 1.0, %v1181
    %v1183 = vtanh.pop %v1122
    %v1184 = vmul.f32 %v1182, %v1079
    %1186 = vrot.lane.b32.xlu0 %v1183, 64
    %v1187 = vpop.permute.xlu0 %1186
    %v1189 = vmul.f32 %v1182, %v1187
    %1191 = vrot.lane.b32.xlu0 %v1189, 32
    %v1192 = vpop.permute.xlu0 %1191
    %v1194 = vadd.f32 %v1184, %v1192
    %v1195 = vtanh.pop %v1194
    %1197 = vrot.lane.b32.xlu0 %v1195, 64
    %v1198 = vpop.permute.xlu0 %1197
    %v1200 = vmul.f32 %v1182, %v1198
    %1202 = vrot.lane.b32.xlu0 %v1157, 96
    %v1203 = vpop.permute.xlu0 %1202
    %v1205 = vsel %vm574, %v1203, %v1194
    %1207 = vrot.lane.b32.xlu0 %v1163, 32
    %v1208 = vpop.permute.xlu0 %1207
    %1211 = vrot.lane.b32.xlu0 %v1200, 64
    %v1212 = vpop.permute.xlu0 %1211
    %v1214 = vsel %vm574, %v1208, %v1212
    %v1215 = vld [vmem:[%s375] sm:$0x3]
    %v1216 = vld [vmem:[%s185 + $0x2] sm:$0x3]
    %v1217 = vpack.c.bf16 %v1214, %v1214
    %v1219 = vsel %vm112, %v1217, 0
    %1221 = vmatpush.bf16.msra.mxu0 0
    %1222 = vmatpush.bf16.msra.mxu0 0
    %1223 = vmatpush.bf16.msra.mxu0 0
    %1224 = vmatpush.bf16.msra.mxu0 0
    %1225 = vmatpush.bf16.msra.mxu0 %v455
    %1226 = vmatpush.bf16.msra.mxu0 %v453
    %1227 = vmatpush.bf16.msra.mxu0 %v451
    %1228 = vmatpush.bf16.msra.mxu0 %v449
    %1229 = vmatmul.bf16.gmra.mxu0 %v1219
    %v1230 = vpop.f32.mrf.mxu0
    %v1231 = vadd.f32 0.0, %v1230
    %v1232 = vpop.f32.mrf.mxu0
    %1233 = vdwg.mxu0
    %1234 = vmatpush.bf16.msra.mxu0 0
    %1235 = vmatpush.bf16.msra.mxu0 0
    %1236 = vmatpush.bf16.msra.mxu0 0
    %1237 = vmatpush.bf16.msra.mxu0 0
    %1238 = vmatpush.bf16.msra.mxu0 %v456
    %1239 = vmatpush.bf16.msra.mxu0 %v454
    %1240 = vmatpush.bf16.msra.mxu0 %v452
    %1241 = vmatpush.bf16.msra.mxu0 %v450
    %1242 = vmatmul.bf16.gmra.mxu0 %v1219
    %v1243 = vpop.f32.mrf.mxu0
    %v1244 = vadd.f32 0.0, %v1243
    %v1245 = vpop.f32.mrf.mxu0
    %1246 = vdwg.mxu0
    %v1247 = vadd.f32 %v1215, %v1231
    %v1248 = vadd.f32 %v1216, %v1244
    %v1249 = vxor.u32 %v1247, 2147483648
    %v1250 = vmul.f32 %v1249, 1.442695
    %v1251 = vpow.pop %v1250
    %v1252 = vadd.f32 %v1251, 1.0
    %v1253 = vrcp.pop %v1252
    %v1254 = vmul.f32 %v1252, %v1253
    %v1255 = vsub.f32 1.0, %v1254
    %v1256 = vmul.f32 %v1253, %v1255
    %v1257 = vadd.f32 %v1253, %v1256
    %vm1258 = vweird.f32 %v1252
    %vm1259 = vweird.f32 %v1253
    %vm1260 = vmor %vm1258, %vm1259
    %v1261 = vsel %vm1260, %v1253, %v1257
    %v1262 = vand.u32 2147483647, %v1252
    %vm1263 = vcmp.eq.f32.partialorder %v1262, 8.507059e+37
    %v1264 = vand.u32 %v1252, 2147483648
    %v1265 = vor.u32 1.1754944e-38, %v1264
    %v1266 = vsel %vm1263, %v1265, %v1261
    %v1267 = vmul.f32 1.0, %v1266
    %v1268 = vtanh.pop %v1247
    %1270 = vrot.lane.b32.xlu0 %v1205, 32
    %v1271 = vpop.permute.xlu0 %1270
    %v1273 = vmul.f32 %v1267, %v1271
    %1275 = vrot.lane.b32.xlu0 %v1268, 64
    %v1276 = vpop.permute.xlu0 %1275
    %v1278 = vmul.f32 %v1267, %v1276
    %1280 = vrot.lane.b32.xlu0 %v1278, 32
    %v1281 = vpop.permute.xlu0 %1280
    %v1283 = vadd.f32 %v1273, %v1281
    %v1284 = vtanh.pop %v1283
    %1286 = vrot.lane.b32.xlu0 %v1284, 64
    %v1287 = vpop.permute.xlu0 %1286
    %v1289 = vmul.f32 %v1267, %v1287
    %v1290 = vxor.u32 %v1248, 2147483648
    %v1291 = vmul.f32 %v1290, 1.442695
    %v1292 = vpow.pop %v1291
    %v1293 = vadd.f32 %v1292, 1.0
    %v1294 = vrcp.pop %v1293
    %v1295 = vmul.f32 %v1293, %v1294
    %v1296 = vsub.f32 1.0, %v1295
    %v1297 = vmul.f32 %v1294, %v1296
    %v1298 = vadd.f32 %v1294, %v1297
    %vm1299 = vweird.f32 %v1293
    %vm1300 = vweird.f32 %v1294
    %vm1301 = vmor %vm1299, %vm1300
    %v1302 = vsel %vm1301, %v1294, %v1298
    %v1303 = vand.u32 2147483647, %v1293
    %vm1304 = vcmp.eq.f32.partialorder %v1303, 8.507059e+37
    %v1305 = vand.u32 %v1293, 2147483648
    %v1306 = vor.u32 1.1754944e-38, %v1305
    %v1307 = vsel %vm1304, %v1306, %v1302
    %v1308 = vmul.f32 1.0, %v1307
    %v1309 = vtanh.pop %v1248
    %v1310 = vmul.f32 %v1308, %v1205
    %1312 = vrot.lane.b32.xlu0 %v1309, 64
    %v1313 = vpop.permute.xlu0 %1312
    %v1315 = vmul.f32 %v1308, %v1313
    %1317 = vrot.lane.b32.xlu0 %v1315, 32
    %v1318 = vpop.permute.xlu0 %1317
    %v1320 = vadd.f32 %v1310, %v1318
    %v1321 = vtanh.pop %v1320
    %1323 = vrot.lane.b32.xlu0 %v1321, 64
    %v1324 = vpop.permute.xlu0 %1323
    %v1326 = vmul.f32 %v1308, %v1324
    %1328 = vrot.lane.b32.xlu0 %v1283, 96
    %v1329 = vpop.permute.xlu0 %1328
    %v1331 = vsel %vm574, %v1329, %v1320
    %1333 = vrot.lane.b32.xlu0 %v1289, 32
    %v1334 = vpop.permute.xlu0 %1333
    %1337 = vrot.lane.b32.xlu0 %v1326, 64
    %v1338 = vpop.permute.xlu0 %1337
    %v1340 = vsel %vm574, %v1334, %v1338
    %v1341 = vld [vmem:[%s413] sm:$0x3]
    %v1342 = vld [vmem:[#allocation2 + $0x2] sm:$0x3]
    %v1343 = vpack.c.bf16 %v1340, %v1340
    %v1345 = vsel %vm112, %v1343, 0
    %1347 = vmatpush.bf16.msra.mxu0 0
    %1348 = vmatpush.bf16.msra.mxu0 0
    %1349 = vmatpush.bf16.msra.mxu0 0
    %1350 = vmatpush.bf16.msra.mxu0 0
    %1351 = vmatpush.bf16.msra.mxu0 %v455
    %1352 = vmatpush.bf16.msra.mxu0 %v453
    %1353 = vmatpush.bf16.msra.mxu0 %v451
    %1354 = vmatpush.bf16.msra.mxu0 %v449
    %1355 = vmatmul.bf16.gmra.mxu0 %v1345
    %v1356 = vpop.f32.mrf.mxu0
    %v1357 = vadd.f32 0.0, %v1356
    %v1358 = vpop.f32.mrf.mxu0
    %1359 = vdwg.mxu0
    %1360 = vmatpush.bf16.msra.mxu0 0
    %1361 = vmatpush.bf16.msra.mxu0 0
    %1362 = vmatpush.bf16.msra.mxu0 0
    %1363 = vmatpush.bf16.msra.mxu0 0
    %1364 = vmatpush.bf16.msra.mxu0 %v456
    %1365 = vmatpush.bf16.msra.mxu0 %v454
    %1366 = vmatpush.bf16.msra.mxu0 %v452
    %1367 = vmatpush.bf16.msra.mxu0 %v450
    %1368 = vmatmul.bf16.gmra.mxu0 %v1345
    %v1369 = vpop.f32.mrf.mxu0
    %v1370 = vadd.f32 0.0, %v1369
    %v1371 = vpop.f32.mrf.mxu0
    %1372 = vdwg.mxu0
    %v1373 = vadd.f32 %v1341, %v1357
    %v1374 = vadd.f32 %v1342, %v1370
    %v1375 = vxor.u32 %v1373, 2147483648
    %v1376 = vmul.f32 %v1375, 1.442695
    %v1377 = vpow.pop %v1376
    %v1378 = vadd.f32 %v1377, 1.0
    %v1379 = vrcp.pop %v1378
    %v1380 = vmul.f32 %v1378, %v1379
    %v1381 = vsub.f32 1.0, %v1380
    %v1382 = vmul.f32 %v1379, %v1381
    %v1383 = vadd.f32 %v1379, %v1382
    %vm1384 = vweird.f32 %v1378
    %vm1385 = vweird.f32 %v1379
    %vm1386 = vmor %vm1384, %vm1385
    %v1387 = vsel %vm1386, %v1379, %v1383
    %v1388 = vand.u32 2147483647, %v1378
    %vm1389 = vcmp.eq.f32.partialorder %v1388, 8.507059e+37
    %v1390 = vand.u32 %v1378, 2147483648
    %v1391 = vor.u32 1.1754944e-38, %v1390
    %v1392 = vsel %vm1389, %v1391, %v1387
    %v1393 = vmul.f32 1.0, %v1392
    %v1394 = vtanh.pop %v1373
    %1396 = vrot.lane.b32.xlu0 %v1331, 32
    %v1397 = vpop.permute.xlu0 %1396
    %v1399 = vmul.f32 %v1393, %v1397
    %1401 = vrot.lane.b32.xlu0 %v1394, 64
    %v1402 = vpop.permute.xlu0 %1401
    %v1404 = vmul.f32 %v1393, %v1402
    %1406 = vrot.lane.b32.xlu0 %v1404, 32
    %v1407 = vpop.permute.xlu0 %1406
    %v1409 = vadd.f32 %v1399, %v1407
    %v1410 = vtanh.pop %v1409
    %1412 = vrot.lane.b32.xlu0 %v1410, 64
    %v1413 = vpop.permute.xlu0 %1412
    %v1415 = vmul.f32 %v1393, %v1413
    %v1416 = vxor.u32 %v1374, 2147483648
    %v1417 = vmul.f32 %v1416, 1.442695
    %v1418 = vpow.pop %v1417
    %v1419 = vadd.f32 %v1418, 1.0
    %v1420 = vrcp.pop %v1419
    %v1421 = vmul.f32 %v1419, %v1420
    %v1422 = vsub.f32 1.0, %v1421
    %v1423 = vmul.f32 %v1420, %v1422
    %v1424 = vadd.f32 %v1420, %v1423
    %vm1425 = vweird.f32 %v1419
    %vm1426 = vweird.f32 %v1420
    %vm1427 = vmor %vm1425, %vm1426
    %v1428 = vsel %vm1427, %v1420, %v1424
    %v1429 = vand.u32 2147483647, %v1419
    %vm1430 = vcmp.eq.f32.partialorder %v1429, 8.507059e+37
    %v1431 = vand.u32 %v1419, 2147483648
    %v1432 = vor.u32 1.1754944e-38, %v1431
    %v1433 = vsel %vm1430, %v1432, %v1428
    %v1434 = vmul.f32 1.0, %v1433
    %v1435 = vtanh.pop %v1374
    %v1436 = vmul.f32 %v1434, %v1331
    %1438 = vrot.lane.b32.xlu0 %v1435, 64
    %v1439 = vpop.permute.xlu0 %1438
    %v1441 = vmul.f32 %v1434, %v1439
    %1443 = vrot.lane.b32.xlu0 %v1441, 32
    %v1444 = vpop.permute.xlu0 %1443
    %v1446 = vadd.f32 %v1436, %v1444
    %v1447 = vtanh.pop %v1446
    %1449 = vrot.lane.b32.xlu0 %v1447, 64
    %v1450 = vpop.permute.xlu0 %1449
    %v1452 = vmul.f32 %v1434, %v1450
    %1454 = vrot.lane.b32.xlu0 %v1415, 32
    %v1455 = vpop.permute.xlu0 %1454
    %1458 = vrot.lane.b32.xlu0 %v1452, 64
    %v1459 = vpop.permute.xlu0 %1458
    %v1461 = vsel %vm574, %v1455, %v1459
    %1463 = vrot.lane.b32.xlu0 %v1461, 64
    %v1464 = vpop.permute.xlu0 %1463
    %v1466 = vsel %vm574, %v578, %v1461
    %v1467 = vsel %vm112, %v1466, %v1464
    %vm1468 = vcmask 785408
    %v1469 = vsel %vm1468, %v1467, %v569
    %v1470 = vpack.c.bf16 %v1469, %v1469
    %v1471 = vld [vmem:[#allocation6] sm:$0xf]
    %v1472 = vld [vmem:[#allocation6 + $0x4] sm:$0xf]
    %v1473 = vld [vmem:[#allocation6 + $0x8] sm:$0xf]
    %v1474 = vld [vmem:[#allocation6 + $0xc] sm:$0xf]
    %v1475 = vld [vmem:[#allocation6 + $0x10] sm:$0xf]
    %v1476 = vld [vmem:[#allocation6 + $0x14] sm:$0xf]
    %v1477 = vld [vmem:[#allocation6 + $0x18] sm:$0xf]
    %v1478 = vld [vmem:[#allocation6 + $0x1c] sm:$0xf]
    %v1479 = vld [vmem:[#allocation6 + $0x20] sm:$0xf]
    %v1480 = vld [vmem:[#allocation6 + $0x24] sm:$0xf]
    %v1481 = vld [vmem:[#allocation6 + $0x28] sm:$0xf]
    %v1482 = vld [vmem:[#allocation6 + $0x2c] sm:$0xf]
    %v1483 = vld [vmem:[#allocation6 + $0x30] sm:$0xf]
    %v1484 = vld [vmem:[#allocation6 + $0x34] sm:$0xf]
    %v1485 = vld [vmem:[#allocation6 + $0x38] sm:$0xf]
    %v1486 = vld [vmem:[#allocation6 + $0x3c] sm:$0xf]
    %v1487 = vld [vmem:[%s5] sm:$0x1]
    %v1489 = vperm.slane %v1487, 0
    %v1507 = vunpack.c.l.b16 %v1471
    %v1508 = vunpack.c.l.b16 %v1472
    %v1509 = vunpack.c.l.b16 %v1473
    %v1510 = vunpack.c.l.b16 %v1474
    %v1511 = vunpack.c.l.b16 %v1475
    %v1512 = vunpack.c.l.b16 %v1476
    %v1513 = vunpack.c.l.b16 %v1477
    %v1514 = vunpack.c.l.b16 %v1478
    %v1515 = vunpack.c.l.b16 %v1479
    %v1516 = vunpack.c.l.b16 %v1480
    %v1517 = vunpack.c.l.b16 %v1481
    %v1518 = vunpack.c.l.b16 %v1482
    %v1519 = vunpack.c.l.b16 %v1483
    %v1520 = vunpack.c.l.b16 %v1484
    %v1521 = vunpack.c.l.b16 %v1485
    %v1522 = vunpack.c.l.b16 %v1486
    %v1523 = vpack.c.b16 %v1508, %v1507
    %v1524 = vpack.c.b16 %v1510, %v1509
    %v1525 = vpack.c.b16 %v1512, %v1511
    %v1526 = vpack.c.b16 %v1514, %v1513
    %v1527 = vpack.c.b16 %v1516, %v1515
    %v1528 = vpack.c.b16 %v1518, %v1517
    %v1529 = vpack.c.b16 %v1520, %v1519
    %v1530 = vpack.c.b16 %v1522, %v1521
    %1539 = vmatpush.bf16.msra.mxu0 %v1530
    %1540 = vmatpush.bf16.msra.mxu0 %v1529
    %1541 = vmatpush.bf16.msra.mxu0 %v1528
    %1542 = vmatpush.bf16.msra.mxu0 %v1527
    %1543 = vmatpush.bf16.msra.mxu0 %v1526
    %1544 = vmatpush.bf16.msra.mxu0 %v1525
    %1545 = vmatpush.bf16.msra.mxu0 %v1524
    %1546 = vmatpush.bf16.msra.mxu0 %v1523
    %1547 = vmatmul.bf16.gmra.mxu0 %v1470
    %v1548 = vpop.f32.mrf.mxu0
    %v1549 = vadd.f32 %v1489, %v1548
    %v1550 = vpop.f32.mrf.mxu0
    %1551 = vdwg.mxu0
    %1552 = vst [vmem:[#allocation8] sm:$0x3] %v1549
    // Predicated region
    $region34: #{bilstm_forward.3} parent=1 // pred_check
      _
    $region35: #{bilstm_forward.3} parent=1 // pred_check_branch
      %1554 = sbr.rel (0) target = $region37
    $region36: #{bilstm_forward.3} parent=1 // pred_region
      %1556 = vsyncadd [#allocation5], 0
      %s1558 = sshll.u32 [#allocation8], 4
      %s1559 = int_to_ptr.vmem [resolvable:$true] %s1558
      %s1560 = sshll.u32 %s6, 4
      %s1561 = int_to_ptr.hbm [resolvable:$true] %s1560
      %1563 = dma.vmem_to_hbm [thread:$0]  %s1559, 32, %s1561, [#allocation5]
    $region37: #{bilstm_forward.3} parent=1 // pred_fallthru
      _
    // Predicated region
    $region38: #{bilstm_forward.3} parent=1 // pred_check
      _
    $region39: #{bilstm_forward.3} parent=1 // pred_check_branch
      %1565 = sbr.rel (0) target = $region41
    $region40: #{bilstm_forward.3} parent=1 // pred_region
      %1567 = dma.done [#allocation5], 32
    $region41: #{bilstm_forward.3} parent=1 // pred_fallthru
      _
    %1568 = vsyncpa [#allocation4], 1
    %1569 = vsyncpa [#allocation7], 1
    %1570 = vsyncpa [#allocation5], 1

// kernel: bilstm_forward.2
$region0: #{bilstm_forward.2}
  #allocation0 [shape = 'u32[]', space=smem, size = 0x4, offset = 0x4, fixed_abs, tag = 'smem constant byte address 0x4 - core index']
  #allocation1 [shape = 'u32[72,128]{1,0:T(1,128)}', space=vmem, size = 0x9000, scoped, tag = 'internal scratch']
  #allocation2 [shape = 'f32[8,2,256]{2,1,0:T(2,128)}', space=vmem, size = 0x4000, scoped, tag = 'scratch operand']
  %s0 = inlined_call_operand.vmem [shape: bf16[8,2,16], index: 0, kind: input, shape index: {}]
  %s1 = inlined_call_operand.vmem [shape: bf16[16,256], index: 1, kind: input, shape index: {}]
  %s2 = inlined_call_operand.vmem [shape: bf16[64,256], index: 2, kind: input, shape index: {}]
  %s3 = inlined_call_operand.vmem [shape: f32[1,256], index: 3, kind: input, shape index: {}]
  %s4 = inlined_call_operand.vmem [shape: bf16[8,2,64], index: 4, kind: output, shape index: {}]
  %s5 = sld [smem:[#allocation0]]
  $region26: #{bilstm_forward.2} parent=0
    _
  %s7 = ssub.s32 1, %s5
  %s8 = scalar_select 0, %s7, %s5
  // Predicated region
  $region2: #{bilstm_forward.2} parent=0 // pred_check
    _
  $region3: #{bilstm_forward.2} parent=0 // pred_check_branch
    %10 = sbr.rel (0) target = $region5
  $region4: #{bilstm_forward.2} parent=0 // pred_region
    _
  $region5: #{bilstm_forward.2} parent=0 // pred_fallthru
    _
  // Predicated region
  $region6: #{bilstm_forward.2} parent=0 // pred_check
    _
  $region7: #{bilstm_forward.2} parent=0 // pred_check_branch
    %12 = sbr.rel (0) target = $region9
  $region8: #{bilstm_forward.2} parent=0 // pred_region
    _
  $region9: #{bilstm_forward.2} parent=0 // pred_fallthru
    _
  // Predicated region
  $region10: #{bilstm_forward.2} parent=0 // pred_check
    _
  $region11: #{bilstm_forward.2} parent=0 // pred_check_branch
    %14 = sbr.rel (0) target = $region13
  $region12: #{bilstm_forward.2} parent=0 // pred_region
    _
  $region13: #{bilstm_forward.2} parent=0 // pred_fallthru
    _
  // Predicated region
  $region14: #{bilstm_forward.2} parent=0 // pred_check
    _
  $region15: #{bilstm_forward.2} parent=0 // pred_check_branch
    %16 = sbr.rel (0) target = $region17
  $region16: #{bilstm_forward.2} parent=0 // pred_region
    _
  $region17: #{bilstm_forward.2} parent=0 // pred_fallthru
    _
  %v18 = vld [vmem:[%s1] sm:$0xff]
  %v19 = vld [vmem:[%s1 + $0x8] sm:$0xff]
  %v20 = vld [vmem:[%s3] sm:$0x3]
  %v21 = vld [vmem:[%s0] sm:$0x1]
  %v23 = vperm.slane %v20, 0
  %v24 = vperm.slane %v20, 1
  %v29 = vunpack.c.l.b16 %v18
  %v30 = vunpack.c.h.b16 %v18
  %v31 = vunpack.c.l.b16 %v19
  %v32 = vunpack.c.h.b16 %v19
  %v33 = vpack.c.b16 %v31, %v29
  %v34 = vpack.c.b16 %v32, %v30
  %vm37 = vcmask 130048
  %v39 = vsel %vm37, %v21, 0
  %41 = vmatpush.bf16.msra.mxu0 0
  %42 = vmatpush.bf16.msra.mxu0 0
  %43 = vmatpush.bf16.msra.mxu0 0
  %44 = vmatpush.bf16.msra.mxu0 0
  %45 = vmatpush.bf16.msra.mxu0 0
  %46 = vmatpush.bf16.msra.mxu0 0
  %47 = vmatpush.bf16.msra.mxu0 0
  %48 = vmatpush.bf16.msra.mxu0 %v33
  %49 = vmatmul.bf16.gmra.mxu0 %v39
  %v50 = vpop.f32.mrf.mxu0
  %v51 = vadd.f32 %v23, %v50
  %v52 = vpop.f32.mrf.mxu0
  %53 = vdwg.mxu0
  %54 = vmatpush.bf16.msra.mxu0 0
  %55 = vmatpush.bf16.msra.mxu0 0
  %56 = vmatpush.bf16.msra.mxu0 0
  %57 = vmatpush.bf16.msra.mxu0 0
  %58 = vmatpush.bf16.msra.mxu0 0
  %59 = vmatpush.bf16.msra.mxu0 0
  %60 = vmatpush.bf16.msra.mxu0 0
  %61 = vmatpush.bf16.msra.mxu0 %v34
  %62 = vmatmul.bf16.gmra.mxu0 %v39
  %v63 = vpop.f32.mrf.mxu0
  %v64 = vadd.f32 %v24, %v63
  %v65 = vpop.f32.mrf.mxu0
  %66 = vdwg.mxu0
  %v69 = vrot.slane %v64, 6
  %vm70 = vcmask 1041408
  %v71 = vsel %vm70, %v51, %v69
  %73 = vst [vmem:[#allocation2] sm:$0xf] %v71
  %s74 = scalar_lea.vmem %s0, 1
  %v75 = vld [vmem:[%s74] sm:$0x1]
  %v77 = vsel %vm37, %v75, 0
  %79 = vmatpush.bf16.msra.mxu0 0
  %80 = vmatpush.bf16.msra.mxu0 0
  %81 = vmatpush.bf16.msra.mxu0 0
  %82 = vmatpush.bf16.msra.mxu0 0
  %83 = vmatpush.bf16.msra.mxu0 0
  %84 = vmatpush.bf16.msra.mxu0 0
  %85 = vmatpush.bf16.msra.mxu0 0
  %86 = vmatpush.bf16.msra.mxu0 %v33
  %87 = vmatmul.bf16.gmra.mxu0 %v77
  %v88 = vpop.f32.mrf.mxu0
  %v89 = vadd.f32 %v23, %v88
  %v90 = vpop.f32.mrf.mxu0
  %91 = vdwg.mxu0
  %92 = vmatpush.bf16.msra.mxu0 0
  %93 = vmatpush.bf16.msra.mxu0 0
  %94 = vmatpush.bf16.msra.mxu0 0
  %95 = vmatpush.bf16.msra.mxu0 0
  %96 = vmatpush.bf16.msra.mxu0 0
  %97 = vmatpush.bf16.msra.mxu0 0
  %98 = vmatpush.bf16.msra.mxu0 0
  %99 = vmatpush.bf16.msra.mxu0 %v34
  %100 = vmatmul.bf16.gmra.mxu0 %v77
  %v101 = vpop.f32.mrf.mxu0
  %v102 = vadd.f32 %v24, %v101
  %v103 = vpop.f32.mrf.mxu0
  %104 = vdwg.mxu0
  %v107 = vrot.slane %v102, 6
  %v108 = vsel %vm70, %v89, %v107
  %s110 = scalar_lea.vmem [#allocation2], 4
  %111 = vst [vmem:[%s110] sm:$0xf] %v108
  %s112 = scalar_lea.vmem %s0, 2
  %v113 = vld [vmem:[%s112] sm:$0x1]
  %v115 = vsel %vm37, %v113, 0
  %117 = vmatpush.bf16.msra.mxu0 0
  %118 = vmatpush.bf16.msra.mxu0 0
  %119 = vmatpush.bf16.msra.mxu0 0
  %120 = vmatpush.bf16.msra.mxu0 0
  %121 = vmatpush.bf16.msra.mxu0 0
  %122 = vmatpush.bf16.msra.mxu0 0
  %123 = vmatpush.bf16.msra.mxu0 0
  %124 = vmatpush.bf16.msra.mxu0 %v33
  %125 = vmatmul.bf16.gmra.mxu0 %v115
  %v126 = vpop.f32.mrf.mxu0
  %v127 = vadd.f32 %v23, %v126
  %v128 = vpop.f32.mrf.mxu0
  %129 = vdwg.mxu0
  %130 = vmatpush.bf16.msra.mxu0 0
  %131 = vmatpush.bf16.msra.mxu0 0
  %132 = vmatpush.bf16.msra.mxu0 0
  %133 = vmatpush.bf16.msra.mxu0 0
  %134 = vmatpush.bf16.msra.mxu0 0
  %135 = vmatpush.bf16.msra.mxu0 0
  %136 = vmatpush.bf16.msra.mxu0 0
  %137 = vmatpush.bf16.msra.mxu0 %v34
  %138 = vmatmul.bf16.gmra.mxu0 %v115
  %v139 = vpop.f32.mrf.mxu0
  %v140 = vadd.f32 %v24, %v139
  %v141 = vpop.f32.mrf.mxu0
  %142 = vdwg.mxu0
  %v145 = vrot.slane %v140, 6
  %v146 = vsel %vm70, %v127, %v145
  %s148 = scalar_lea.vmem [#allocation2], 8
  %149 = vst [vmem:[%s148] sm:$0xf] %v146
  %s150 = scalar_lea.vmem %s0, 3
  %v151 = vld [vmem:[%s150] sm:$0x1]
  %v153 = vsel %vm37, %v151, 0
  %155 = vmatpush.bf16.msra.mxu0 0
  %156 = vmatpush.bf16.msra.mxu0 0
  %157 = vmatpush.bf16.msra.mxu0 0
  %158 = vmatpush.bf16.msra.mxu0 0
  %159 = vmatpush.bf16.msra.mxu0 0
  %160 = vmatpush.bf16.msra.mxu0 0
  %161 = vmatpush.bf16.msra.mxu0 0
  %162 = vmatpush.bf16.msra.mxu0 %v33
  %163 = vmatmul.bf16.gmra.mxu0 %v153
  %v164 = vpop.f32.mrf.mxu0
  %v165 = vadd.f32 %v23, %v164
  %v166 = vpop.f32.mrf.mxu0
  %167 = vdwg.mxu0
  %168 = vmatpush.bf16.msra.mxu0 0
  %169 = vmatpush.bf16.msra.mxu0 0
  %170 = vmatpush.bf16.msra.mxu0 0
  %171 = vmatpush.bf16.msra.mxu0 0
  %172 = vmatpush.bf16.msra.mxu0 0
  %173 = vmatpush.bf16.msra.mxu0 0
  %174 = vmatpush.bf16.msra.mxu0 0
  %175 = vmatpush.bf16.msra.mxu0 %v34
  %176 = vmatmul.bf16.gmra.mxu0 %v153
  %v177 = vpop.f32.mrf.mxu0
  %v178 = vadd.f32 %v24, %v177
  %v179 = vpop.f32.mrf.mxu0
  %180 = vdwg.mxu0
  %v183 = vrot.slane %v178, 6
  %v184 = vsel %vm70, %v165, %v183
  %s186 = scalar_lea.vmem [#allocation2], 12
  %187 = vst [vmem:[%s186] sm:$0xf] %v184
  %s188 = scalar_lea.vmem %s0, 4
  %v189 = vld [vmem:[%s188] sm:$0x1]
  %v191 = vsel %vm37, %v189, 0
  %193 = vmatpush.bf16.msra.mxu0 0
  %194 = vmatpush.bf16.msra.mxu0 0
  %195 = vmatpush.bf16.msra.mxu0 0
  %196 = vmatpush.bf16.msra.mxu0 0
  %197 = vmatpush.bf16.msra.mxu0 0
  %198 = vmatpush.bf16.msra.mxu0 0
  %199 = vmatpush.bf16.msra.mxu0 0
  %200 = vmatpush.bf16.msra.mxu0 %v33
  %201 = vmatmul.bf16.gmra.mxu0 %v191
  %v202 = vpop.f32.mrf.mxu0
  %v203 = vadd.f32 %v23, %v202
  %v204 = vpop.f32.mrf.mxu0
  %205 = vdwg.mxu0
  %206 = vmatpush.bf16.msra.mxu0 0
  %207 = vmatpush.bf16.msra.mxu0 0
  %208 = vmatpush.bf16.msra.mxu0 0
  %209 = vmatpush.bf16.msra.mxu0 0
  %210 = vmatpush.bf16.msra.mxu0 0
  %211 = vmatpush.bf16.msra.mxu0 0
  %212 = vmatpush.bf16.msra.mxu0 0
  %213 = vmatpush.bf16.msra.mxu0 %v34
  %214 = vmatmul.bf16.gmra.mxu0 %v191
  %v215 = vpop.f32.mrf.mxu0
  %v216 = vadd.f32 %v24, %v215
  %v217 = vpop.f32.mrf.mxu0
  %218 = vdwg.mxu0
  %v221 = vrot.slane %v216, 6
  %v222 = vsel %vm70, %v203, %v221
  %s224 = scalar_lea.vmem [#allocation2], 16
  %225 = vst [vmem:[%s224] sm:$0xf] %v222
  %s226 = scalar_lea.vmem %s0, 5
  %v227 = vld [vmem:[%s226] sm:$0x1]
  %v229 = vsel %vm37, %v227, 0
  %231 = vmatpush.bf16.msra.mxu0 0
  %232 = vmatpush.bf16.msra.mxu0 0
  %233 = vmatpush.bf16.msra.mxu0 0
  %234 = vmatpush.bf16.msra.mxu0 0
  %235 = vmatpush.bf16.msra.mxu0 0
  %236 = vmatpush.bf16.msra.mxu0 0
  %237 = vmatpush.bf16.msra.mxu0 0
  %238 = vmatpush.bf16.msra.mxu0 %v33
  %239 = vmatmul.bf16.gmra.mxu0 %v229
  %v240 = vpop.f32.mrf.mxu0
  %v241 = vadd.f32 %v23, %v240
  %v242 = vpop.f32.mrf.mxu0
  %243 = vdwg.mxu0
  %244 = vmatpush.bf16.msra.mxu0 0
  %245 = vmatpush.bf16.msra.mxu0 0
  %246 = vmatpush.bf16.msra.mxu0 0
  %247 = vmatpush.bf16.msra.mxu0 0
  %248 = vmatpush.bf16.msra.mxu0 0
  %249 = vmatpush.bf16.msra.mxu0 0
  %250 = vmatpush.bf16.msra.mxu0 0
  %251 = vmatpush.bf16.msra.mxu0 %v34
  %252 = vmatmul.bf16.gmra.mxu0 %v229
  %v253 = vpop.f32.mrf.mxu0
  %v254 = vadd.f32 %v24, %v253
  %v255 = vpop.f32.mrf.mxu0
  %256 = vdwg.mxu0
  %v259 = vrot.slane %v254, 6
  %v260 = vsel %vm70, %v241, %v259
  %s262 = scalar_lea.vmem [#allocation2], 20
  %263 = vst [vmem:[%s262] sm:$0xf] %v260
  %s264 = scalar_lea.vmem %s0, 6
  %v265 = vld [vmem:[%s264] sm:$0x1]
  %v267 = vsel %vm37, %v265, 0
  %269 = vmatpush.bf16.msra.mxu0 0
  %270 = vmatpush.bf16.msra.mxu0 0
  %271 = vmatpush.bf16.msra.mxu0 0
  %272 = vmatpush.bf16.msra.mxu0 0
  %273 = vmatpush.bf16.msra.mxu0 0
  %274 = vmatpush.bf16.msra.mxu0 0
  %275 = vmatpush.bf16.msra.mxu0 0
  %276 = vmatpush.bf16.msra.mxu0 %v33
  %277 = vmatmul.bf16.gmra.mxu0 %v267
  %v278 = vpop.f32.mrf.mxu0
  %v279 = vadd.f32 %v23, %v278
  %v280 = vpop.f32.mrf.mxu0
  %281 = vdwg.mxu0
  %282 = vmatpush.bf16.msra.mxu0 0
  %283 = vmatpush.bf16.msra.mxu0 0
  %284 = vmatpush.bf16.msra.mxu0 0
  %285 = vmatpush.bf16.msra.mxu0 0
  %286 = vmatpush.bf16.msra.mxu0 0
  %287 = vmatpush.bf16.msra.mxu0 0
  %288 = vmatpush.bf16.msra.mxu0 0
  %289 = vmatpush.bf16.msra.mxu0 %v34
  %290 = vmatmul.bf16.gmra.mxu0 %v267
  %v291 = vpop.f32.mrf.mxu0
  %v292 = vadd.f32 %v24, %v291
  %v293 = vpop.f32.mrf.mxu0
  %294 = vdwg.mxu0
  %v297 = vrot.slane %v292, 6
  %v298 = vsel %vm70, %v279, %v297
  %s300 = scalar_lea.vmem [#allocation2], 24
  %301 = vst [vmem:[%s300] sm:$0xf] %v298
  %s302 = scalar_lea.vmem %s0, 7
  %v303 = vld [vmem:[%s302] sm:$0x1]
  %v305 = vsel %vm37, %v303, 0
  %307 = vmatpush.bf16.msra.mxu0 0
  %308 = vmatpush.bf16.msra.mxu0 0
  %309 = vmatpush.bf16.msra.mxu0 0
  %310 = vmatpush.bf16.msra.mxu0 0
  %311 = vmatpush.bf16.msra.mxu0 0
  %312 = vmatpush.bf16.msra.mxu0 0
  %313 = vmatpush.bf16.msra.mxu0 0
  %314 = vmatpush.bf16.msra.mxu0 %v33
  %315 = vmatmul.bf16.gmra.mxu0 %v305
  %v316 = vpop.f32.mrf.mxu0
  %v317 = vadd.f32 %v23, %v316
  %v318 = vpop.f32.mrf.mxu0
  %319 = vdwg.mxu0
  %320 = vmatpush.bf16.msra.mxu0 0
  %321 = vmatpush.bf16.msra.mxu0 0
  %322 = vmatpush.bf16.msra.mxu0 0
  %323 = vmatpush.bf16.msra.mxu0 0
  %324 = vmatpush.bf16.msra.mxu0 0
  %325 = vmatpush.bf16.msra.mxu0 0
  %326 = vmatpush.bf16.msra.mxu0 0
  %327 = vmatpush.bf16.msra.mxu0 %v34
  %328 = vmatmul.bf16.gmra.mxu0 %v305
  %v329 = vpop.f32.mrf.mxu0
  %v330 = vadd.f32 %v24, %v329
  %v331 = vpop.f32.mrf.mxu0
  %332 = vdwg.mxu0
  %v335 = vrot.slane %v330, 6
  %v336 = vsel %vm70, %v317, %v335
  %s338 = scalar_lea.vmem [#allocation2], 28
  %339 = vst [vmem:[%s338] sm:$0xf] %v336
  %v340 = vld [vmem:[%s2] sm:$0xff]
  %v341 = vld [vmem:[%s2 + $0x8] sm:$0xff]
  %v342 = vld [vmem:[%s2 + $0x10] sm:$0xff]
  %v343 = vld [vmem:[%s2 + $0x18] sm:$0xff]
  %v344 = vld [vmem:[%s2 + $0x20] sm:$0xff]
  %v345 = vld [vmem:[%s2 + $0x28] sm:$0xff]
  %v346 = vld [vmem:[%s2 + $0x30] sm:$0xff]
  %v347 = vld [vmem:[%s2 + $0x38] sm:$0xff]
  %v348 = vld [vmem:[#allocation2] sm:$0x3]
  %v349 = vld [vmem:[%s338 + $0x2] sm:$0x3]
  %v358 = vunpack.c.l.b16 %v340
  %v359 = vunpack.c.h.b16 %v340
  %v360 = vunpack.c.l.b16 %v341
  %v361 = vunpack.c.h.b16 %v341
  %v362 = vunpack.c.l.b16 %v342
  %v363 = vunpack.c.h.b16 %v342
  %v364 = vunpack.c.l.b16 %v343
  %v365 = vunpack.c.h.b16 %v343
  %v366 = vunpack.c.l.b16 %v344
  %v367 = vunpack.c.h.b16 %v344
  %v368 = vunpack.c.l.b16 %v345
  %v369 = vunpack.c.h.b16 %v345
  %v370 = vunpack.c.l.b16 %v346
  %v371 = vunpack.c.h.b16 %v346
  %v372 = vunpack.c.l.b16 %v347
  %v373 = vunpack.c.h.b16 %v347
  %v374 = vpack.c.b16 %v360, %v358
  %v375 = vpack.c.b16 %v361, %v359
  %v376 = vpack.c.b16 %v364, %v362
  %v377 = vpack.c.b16 %v365, %v363
  %v378 = vpack.c.b16 %v368, %v366
  %v379 = vpack.c.b16 %v369, %v367
  %v380 = vpack.c.b16 %v372, %v370
  %v381 = vpack.c.b16 %v373, %v371
  %vm390 = vcmask 523264
  %v392 = vsel %vm390, 0, 0
  %394 = vmatpush.bf16.msra.mxu0 0
  %395 = vmatpush.bf16.msra.mxu0 0
  %396 = vmatpush.bf16.msra.mxu0 0
  %397 = vmatpush.bf16.msra.mxu0 0
  %398 = vmatpush.bf16.msra.mxu0 %v380
  %399 = vmatpush.bf16.msra.mxu0 %v378
  %400 = vmatpush.bf16.msra.mxu0 %v376
  %401 = vmatpush.bf16.msra.mxu0 %v374
  %402 = vmatmul.bf16.gmra.mxu0 %v392
  %v403 = vpop.f32.mrf.mxu0
  %v404 = vadd.f32 0.0, %v403
  %v405 = vpop.f32.mrf.mxu0
  %406 = vdwg.mxu0
  %407 = vmatpush.bf16.msra.mxu0 0
  %408 = vmatpush.bf16.msra.mxu0 0
  %409 = vmatpush.bf16.msra.mxu0 0
  %410 = vmatpush.bf16.msra.mxu0 0
  %411 = vmatpush.bf16.msra.mxu0 %v381
  %412 = vmatpush.bf16.msra.mxu0 %v379
  %413 = vmatpush.bf16.msra.mxu0 %v377
  %414 = vmatpush.bf16.msra.mxu0 %v375
  %415 = vmatmul.bf16.gmra.mxu0 %v392
  %v416 = vpop.f32.mrf.mxu0
  %v417 = vadd.f32 0.0, %v416
  %v418 = vpop.f32.mrf.mxu0
  %419 = vdwg.mxu0
  %v420 = vadd.f32 %v348, %v404
  %v421 = vadd.f32 %v349, %v417
  %v422 = vxor.u32 %v420, 2147483648
  %v423 = vmul.f32 %v422, 1.442695
  %v424 = vpow.pop %v423
  %v425 = vadd.f32 %v424, 1.0
  %v426 = vrcp.pop %v425
  %v427 = vmul.f32 %v425, %v426
  %v428 = vsub.f32 1.0, %v427
  %v429 = vmul.f32 %v426, %v428
  %v430 = vadd.f32 %v426, %v429
  %vm431 = vweird.f32 %v425
  %vm432 = vweird.f32 %v426
  %vm433 = vmor %vm431, %vm432
  %v434 = vsel %vm433, %v426, %v430
  %v435 = vand.u32 2147483647, %v425
  %vm436 = vcmp.eq.f32.partialorder %v435, 8.507059e+37
  %v437 = vand.u32 %v425, 2147483648
  %v438 = vor.u32 1.1754944e-38, %v437
  %v439 = vsel %vm436, %v438, %v434
  %v440 = vmul.f32 1.0, %v439
  %v441 = vtanh.pop %v420
  %v442 = vmul.f32 %v440, 0.0
  %444 = vrot.lane.b32.xlu0 %v441, 64
  %v445 = vpop.permute.xlu0 %444
  %v447 = vmul.f32 %v440, %v445
  %449 = vrot.lane.b32.xlu0 %v447, 32
  %v450 = vpop.permute.xlu0 %449
  %v452 = vadd.f32 %v442, %v450
  %v453 = vtanh.pop %v452
  %455 = vrot.lane.b32.xlu0 %v453, 64
  %v456 = vpop.permute.xlu0 %455
  %v458 = vmul.f32 %v440, %v456
  %v459 = vxor.u32 %v421, 2147483648
  %v460 = vmul.f32 %v459, 1.442695
  %v461 = vpow.pop %v460
  %v462 = vadd.f32 %v461, 1.0
  %v463 = vrcp.pop %v462
  %v464 = vmul.f32 %v462, %v463
  %v465 = vsub.f32 1.0, %v464
  %v466 = vmul.f32 %v463, %v465
  %v467 = vadd.f32 %v463, %v466
  %vm468 = vweird.f32 %v462
  %vm469 = vweird.f32 %v463
  %vm470 = vmor %vm468, %vm469
  %v471 = vsel %vm470, %v463, %v467
  %v472 = vand.u32 2147483647, %v462
  %vm473 = vcmp.eq.f32.partialorder %v472, 8.507059e+37
  %v474 = vand.u32 %v462, 2147483648
  %v475 = vor.u32 1.1754944e-38, %v474
  %v476 = vsel %vm473, %v475, %v471
  %v477 = vmul.f32 1.0, %v476
  %v478 = vtanh.pop %v421
  %v479 = vmul.f32 %v477, 0.0
  %481 = vrot.lane.b32.xlu0 %v478, 64
  %v482 = vpop.permute.xlu0 %481
  %v484 = vmul.f32 %v477, %v482
  %486 = vrot.lane.b32.xlu0 %v484, 32
  %v487 = vpop.permute.xlu0 %486
  %v489 = vadd.f32 %v479, %v487
  %v490 = vtanh.pop %v489
  %492 = vrot.lane.b32.xlu0 %v490, 64
  %v493 = vpop.permute.xlu0 %492
  %v495 = vmul.f32 %v477, %v493
  %497 = vrot.lane.b32.xlu0 %v452, 96
  %v498 = vpop.permute.xlu0 %497
  %vm500 = vcmask 261120
  %v501 = vsel %vm500, %v498, %v489
  %v502 = vpack.c.bf16 %v458, %v458
  %v504 = vrot.slane %v502, 3
  %vm505 = vcmask 1040384
  %v508 = vsel %vm505, %v502, %v504
  %510 = vrot.lane.b32.xlu0 %v508, 32
  %v511 = vpop.permute.xlu0 %510
  %vm513 = vcmask 253952
  %514 = vst.msk [vmem:[%s4] sm:$0x1] %vm513, %v511
  %v515 = vpack.c.bf16 %v495, %v495
  %v517 = vrot.slane %v515, 3
  %v520 = vsel %vm505, %v515, %v517
  %522 = vrot.lane.b32.xlu0 %v520, 64
  %v523 = vpop.permute.xlu0 %522
  %s525 = scalar_lea.vmem %s4, 7
  %vm526 = vcmask 516352
  %527 = vst.msk [vmem:[%s525] sm:$0x1] %vm526, %v523
  %529 = vrot.lane.b32.xlu0 %v458, 32
  %v530 = vpop.permute.xlu0 %529
  %533 = vrot.lane.b32.xlu0 %v495, 64
  %v534 = vpop.permute.xlu0 %533
  %v536 = vsel %vm500, %v530, %v534
  %v537 = vld [vmem:[%s110] sm:$0x3]
  %v538 = vld [vmem:[%s300 + $0x2] sm:$0x3]
  %v539 = vpack.c.bf16 %v536, %v536
  %v541 = vsel %vm390, %v539, 0
  %543 = vmatpush.bf16.msra.mxu0 0
  %544 = vmatpush.bf16.msra.mxu0 0
  %545 = vmatpush.bf16.msra.mxu0 0
  %546 = vmatpush.bf16.msra.mxu0 0
  %547 = vmatpush.bf16.msra.mxu0 %v380
  %548 = vmatpush.bf16.msra.mxu0 %v378
  %549 = vmatpush.bf16.msra.mxu0 %v376
  %550 = vmatpush.bf16.msra.mxu0 %v374
  %551 = vmatmul.bf16.gmra.mxu0 %v541
  %v552 = vpop.f32.mrf.mxu0
  %v553 = vadd.f32 0.0, %v552
  %v554 = vpop.f32.mrf.mxu0
  %555 = vdwg.mxu0
  %556 = vmatpush.bf16.msra.mxu0 0
  %557 = vmatpush.bf16.msra.mxu0 0
  %558 = vmatpush.bf16.msra.mxu0 0
  %559 = vmatpush.bf16.msra.mxu0 0
  %560 = vmatpush.bf16.msra.mxu0 %v381
  %561 = vmatpush.bf16.msra.mxu0 %v379
  %562 = vmatpush.bf16.msra.mxu0 %v377
  %563 = vmatpush.bf16.msra.mxu0 %v375
  %564 = vmatmul.bf16.gmra.mxu0 %v541
  %v565 = vpop.f32.mrf.mxu0
  %v566 = vadd.f32 0.0, %v565
  %v567 = vpop.f32.mrf.mxu0
  %568 = vdwg.mxu0
  %v569 = vadd.f32 %v537, %v553
  %v570 = vadd.f32 %v538, %v566
  %v571 = vxor.u32 %v569, 2147483648
  %v572 = vmul.f32 %v571, 1.442695
  %v573 = vpow.pop %v572
  %v574 = vadd.f32 %v573, 1.0
  %v575 = vrcp.pop %v574
  %v576 = vmul.f32 %v574, %v575
  %v577 = vsub.f32 1.0, %v576
  %v578 = vmul.f32 %v575, %v577
  %v579 = vadd.f32 %v575, %v578
  %vm580 = vweird.f32 %v574
  %vm581 = vweird.f32 %v575
  %vm582 = vmor %vm580, %vm581
  %v583 = vsel %vm582, %v575, %v579
  %v584 = vand.u32 2147483647, %v574
  %vm585 = vcmp.eq.f32.partialorder %v584, 8.507059e+37
  %v586 = vand.u32 %v574, 2147483648
  %v587 = vor.u32 1.1754944e-38, %v586
  %v588 = vsel %vm585, %v587, %v583
  %v589 = vmul.f32 1.0, %v588
  %v590 = vtanh.pop %v569
  %592 = vrot.lane.b32.xlu0 %v501, 32
  %v593 = vpop.permute.xlu0 %592
  %v595 = vmul.f32 %v589, %v593
  %597 = vrot.lane.b32.xlu0 %v590, 64
  %v598 = vpop.permute.xlu0 %597
  %v600 = vmul.f32 %v589, %v598
  %602 = vrot.lane.b32.xlu0 %v600, 32
  %v603 = vpop.permute.xlu0 %602
  %v605 = vadd.f32 %v595, %v603
  %v606 = vtanh.pop %v605
  %608 = vrot.lane.b32.xlu0 %v606, 64
  %v609 = vpop.permute.xlu0 %608
  %v611 = vmul.f32 %v589, %v609
  %v612 = vxor.u32 %v570, 2147483648
  %v613 = vmul.f32 %v612, 1.442695
  %v614 = vpow.pop %v613
  %v615 = vadd.f32 %v614, 1.0
  %v616 = vrcp.pop %v615
  %v617 = vmul.f32 %v615, %v616
  %v618 = vsub.f32 1.0, %v617
  %v619 = vmul.f32 %v616, %v618
  %v620 = vadd.f32 %v616, %v619
  %vm621 = vweird.f32 %v615
  %vm622 = vweird.f32 %v616
  %vm623 = vmor %vm621, %vm622
  %v624 = vsel %vm623, %v616, %v620
  %v625 = vand.u32 2147483647, %v615
  %vm626 = vcmp.eq.f32.partialorder %v625, 8.507059e+37
  %v627 = vand.u32 %v615, 2147483648
  %v628 = vor.u32 1.1754944e-38, %v627
  %v629 = vsel %vm626, %v628, %v624
  %v630 = vmul.f32 1.0, %v629
  %v631 = vtanh.pop %v570
  %v632 = vmul.f32 %v630, %v501
  %634 = vrot.lane.b32.xlu0 %v631, 64
  %v635 = vpop.permute.xlu0 %634
  %v637 = vmul.f32 %v630, %v635
  %639 = vrot.lane.b32.xlu0 %v637, 32
  %v640 = vpop.permute.xlu0 %639
  %v642 = vadd.f32 %v632, %v640
  %v643 = vtanh.pop %v642
  %645 = vrot.lane.b32.xlu0 %v643, 64
  %v646 = vpop.permute.xlu0 %645
  %v648 = vmul.f32 %v630, %v646
  %650 = vrot.lane.b32.xlu0 %v605, 96
  %v651 = vpop.permute.xlu0 %650
  %v653 = vsel %vm500, %v651, %v642
  %v654 = vpack.c.bf16 %v611, %v611
  %v656 = vrot.slane %v654, 3
  %v659 = vsel %vm505, %v654, %v656
  %661 = vrot.lane.b32.xlu0 %v659, 32
  %v662 = vpop.permute.xlu0 %661
  %s664 = scalar_lea.vmem %s4, 1
  %665 = vst.msk [vmem:[%s664] sm:$0x1] %vm513, %v662
  %v666 = vpack.c.bf16 %v648, %v648
  %v668 = vrot.slane %v666, 3
  %v671 = vsel %vm505, %v666, %v668
  %673 = vrot.lane.b32.xlu0 %v671, 64
  %v674 = vpop.permute.xlu0 %673
  %s676 = scalar_lea.vmem %s4, 6
  %677 = vst.msk [vmem:[%s676] sm:$0x1] %vm526, %v674
  %679 = vrot.lane.b32.xlu0 %v611, 32
  %v680 = vpop.permute.xlu0 %679
  %683 = vrot.lane.b32.xlu0 %v648, 64
  %v684 = vpop.permute.xlu0 %683
  %v686 = vsel %vm500, %v680, %v684
  %v687 = vld [vmem:[%s148] sm:$0x3]
  %v688 = vld [vmem:[%s262 + $0x2] sm:$0x3]
  %v689 = vpack.c.bf16 %v686, %v686
  %v691 = vsel %vm390, %v689, 0
  %693 = vmatpush.bf16.msra.mxu0 0
  %694 = vmatpush.bf16.msra.mxu0 0
  %695 = vmatpush.bf16.msra.mxu0 0
  %696 = vmatpush.bf16.msra.mxu0 0
  %697 = vmatpush.bf16.msra.mxu0 %v380
  %698 = vmatpush.bf16.msra.mxu0 %v378
  %699 = vmatpush.bf16.msra.mxu0 %v376
  %700 = vmatpush.bf16.msra.mxu0 %v374
  %701 = vmatmul.bf16.gmra.mxu0 %v691
  %v702 = vpop.f32.mrf.mxu0
  %v703 = vadd.f32 0.0, %v702
  %v704 = vpop.f32.mrf.mxu0
  %705 = vdwg.mxu0
  %706 = vmatpush.bf16.msra.mxu0 0
  %707 = vmatpush.bf16.msra.mxu0 0
  %708 = vmatpush.bf16.msra.mxu0 0
  %709 = vmatpush.bf16.msra.mxu0 0
  %710 = vmatpush.bf16.msra.mxu0 %v381
  %711 = vmatpush.bf16.msra.mxu0 %v379
  %712 = vmatpush.bf16.msra.mxu0 %v377
  %713 = vmatpush.bf16.msra.mxu0 %v375
  %714 = vmatmul.bf16.gmra.mxu0 %v691
  %v715 = vpop.f32.mrf.mxu0
  %v716 = vadd.f32 0.0, %v715
  %v717 = vpop.f32.mrf.mxu0
  %718 = vdwg.mxu0
  %v719 = vadd.f32 %v687, %v703
  %v720 = vadd.f32 %v688, %v716
  %v721 = vxor.u32 %v719, 2147483648
  %v722 = vmul.f32 %v721, 1.442695
  %v723 = vpow.pop %v722
  %v724 = vadd.f32 %v723, 1.0
  %v725 = vrcp.pop %v724
  %v726 = vmul.f32 %v724, %v725
  %v727 = vsub.f32 1.0, %v726
  %v728 = vmul.f32 %v725, %v727
  %v729 = vadd.f32 %v725, %v728
  %vm730 = vweird.f32 %v724
  %vm731 = vweird.f32 %v725
  %vm732 = vmor %vm730, %vm731
  %v733 = vsel %vm732, %v725, %v729
  %v734 = vand.u32 2147483647, %v724
  %vm735 = vcmp.eq.f32.partialorder %v734, 8.507059e+37
  %v736 = vand.u32 %v724, 2147483648
  %v737 = vor.u32 1.1754944e-38, %v736
  %v738 = vsel %vm735, %v737, %v733
  %v739 = vmul.f32 1.0, %v738
  %v740 = vtanh.pop %v719
  %742 = vrot.lane.b32.xlu0 %v653, 32
  %v743 = vpop.permute.xlu0 %742
  %v745 = vmul.f32 %v739, %v743
  %747 = vrot.lane.b32.xlu0 %v740, 64
  %v748 = vpop.permute.xlu0 %747
  %v750 = vmul.f32 %v739, %v748
  %752 = vrot.lane.b32.xlu0 %v750, 32
  %v753 = vpop.permute.xlu0 %752
  %v755 = vadd.f32 %v745, %v753
  %v756 = vtanh.pop %v755
  %758 = vrot.lane.b32.xlu0 %v756, 64
  %v759 = vpop.permute.xlu0 %758
  %v761 = vmul.f32 %v739, %v759
  %v762 = vxor.u32 %v720, 2147483648
  %v763 = vmul.f32 %v762, 1.442695
  %v764 = vpow.pop %v763
  %v765 = vadd.f32 %v764, 1.0
  %v766 = vrcp.pop %v765
  %v767 = vmul.f32 %v765, %v766
  %v768 = vsub.f32 1.0, %v767
  %v769 = vmul.f32 %v766, %v768
  %v770 = vadd.f32 %v766, %v769
  %vm771 = vweird.f32 %v765
  %vm772 = vweird.f32 %v766
  %vm773 = vmor %vm771, %vm772
  %v774 = vsel %vm773, %v766, %v770
  %v775 = vand.u32 2147483647, %v765
  %vm776 = vcmp.eq.f32.partialorder %v775, 8.507059e+37
  %v777 = vand.u32 %v765, 2147483648
  %v778 = vor.u32 1.1754944e-38, %v777
  %v779 = vsel %vm776, %v778, %v774
  %v780 = vmul.f32 1.0, %v779
  %v781 = vtanh.pop %v720
  %v782 = vmul.f32 %v780, %v653
  %784 = vrot.lane.b32.xlu0 %v781, 64
  %v785 = vpop.permute.xlu0 %784
  %v787 = vmul.f32 %v780, %v785
  %789 = vrot.lane.b32.xlu0 %v787, 32
  %v790 = vpop.permute.xlu0 %789
  %v792 = vadd.f32 %v782, %v790
  %v793 = vtanh.pop %v792
  %795 = vrot.lane.b32.xlu0 %v793, 64
  %v796 = vpop.permute.xlu0 %795
  %v798 = vmul.f32 %v780, %v796
  %800 = vrot.lane.b32.xlu0 %v755, 96
  %v801 = vpop.permute.xlu0 %800
  %v803 = vsel %vm500, %v801, %v792
  %v804 = vpack.c.bf16 %v761, %v761
  %v806 = vrot.slane %v804, 3
  %v809 = vsel %vm505, %v804, %v806
  %811 = vrot.lane.b32.xlu0 %v809, 32
  %v812 = vpop.permute.xlu0 %811
  %s814 = scalar_lea.vmem %s4, 2
  %815 = vst.msk [vmem:[%s814] sm:$0x1] %vm513, %v812
  %v816 = vpack.c.bf16 %v798, %v798
  %v818 = vrot.slane %v816, 3
  %v821 = vsel %vm505, %v816, %v818
  %823 = vrot.lane.b32.xlu0 %v821, 64
  %v824 = vpop.permute.xlu0 %823
  %s826 = scalar_lea.vmem %s4, 5
  %827 = vst.msk [vmem:[%s826] sm:$0x1] %vm526, %v824
  %829 = vrot.lane.b32.xlu0 %v761, 32
  %v830 = vpop.permute.xlu0 %829
  %833 = vrot.lane.b32.xlu0 %v798, 64
  %v834 = vpop.permute.xlu0 %833
  %v836 = vsel %vm500, %v830, %v834
  %v837 = vld [vmem:[%s186] sm:$0x3]
  %v838 = vld [vmem:[%s224 + $0x2] sm:$0x3]
  %v839 = vpack.c.bf16 %v836, %v836
  %v841 = vsel %vm390, %v839, 0
  %843 = vmatpush.bf16.msra.mxu0 0
  %844 = vmatpush.bf16.msra.mxu0 0
  %845 = vmatpush.bf16.msra.mxu0 0
  %846 = vmatpush.bf16.msra.mxu0 0
  %847 = vmatpush.bf16.msra.mxu0 %v380
  %848 = vmatpush.bf16.msra.mxu0 %v378
  %849 = vmatpush.bf16.msra.mxu0 %v376
  %850 = vmatpush.bf16.msra.mxu0 %v374
  %851 = vmatmul.bf16.gmra.mxu0 %v841
  %v852 = vpop.f32.mrf.mxu0
  %v853 = vadd.f32 0.0, %v852
  %v854 = vpop.f32.mrf.mxu0
  %855 = vdwg.mxu0
  %856 = vmatpush.bf16.msra.mxu0 0
  %857 = vmatpush.bf16.msra.mxu0 0
  %858 = vmatpush.bf16.msra.mxu0 0
  %859 = vmatpush.bf16.msra.mxu0 0
  %860 = vmatpush.bf16.msra.mxu0 %v381
  %861 = vmatpush.bf16.msra.mxu0 %v379
  %862 = vmatpush.bf16.msra.mxu0 %v377
  %863 = vmatpush.bf16.msra.mxu0 %v375
  %864 = vmatmul.bf16.gmra.mxu0 %v841
  %v865 = vpop.f32.mrf.mxu0
  %v866 = vadd.f32 0.0, %v865
  %v867 = vpop.f32.mrf.mxu0
  %868 = vdwg.mxu0
  %v869 = vadd.f32 %v837, %v853
  %v870 = vadd.f32 %v838, %v866
  %v871 = vxor.u32 %v869, 2147483648
  %v872 = vmul.f32 %v871, 1.442695
  %v873 = vpow.pop %v872
  %v874 = vadd.f32 %v873, 1.0
  %v875 = vrcp.pop %v874
  %v876 = vmul.f32 %v874, %v875
  %v877 = vsub.f32 1.0, %v876
  %v878 = vmul.f32 %v875, %v877
  %v879 = vadd.f32 %v875, %v878
  %vm880 = vweird.f32 %v874
  %vm881 = vweird.f32 %v875
  %vm882 = vmor %vm880, %vm881
  %v883 = vsel %vm882, %v875, %v879
  %v884 = vand.u32 2147483647, %v874
  %vm885 = vcmp.eq.f32.partialorder %v884, 8.507059e+37
  %v886 = vand.u32 %v874, 2147483648
  %v887 = vor.u32 1.1754944e-38, %v886
  %v888 = vsel %vm885, %v887, %v883
  %v889 = vmul.f32 1.0, %v888
  %v890 = vtanh.pop %v869
  %892 = vrot.lane.b32.xlu0 %v803, 32
  %v893 = vpop.permute.xlu0 %892
  %v895 = vmul.f32 %v889, %v893
  %897 = vrot.lane.b32.xlu0 %v890, 64
  %v898 = vpop.permute.xlu0 %897
  %v900 = vmul.f32 %v889, %v898
  %902 = vrot.lane.b32.xlu0 %v900, 32
  %v903 = vpop.permute.xlu0 %902
  %v905 = vadd.f32 %v895, %v903
  %v906 = vtanh.pop %v905
  %908 = vrot.lane.b32.xlu0 %v906, 64
  %v909 = vpop.permute.xlu0 %908
  %v911 = vmul.f32 %v889, %v909
  %v912 = vxor.u32 %v870, 2147483648
  %v913 = vmul.f32 %v912, 1.442695
  %v914 = vpow.pop %v913
  %v915 = vadd.f32 %v914, 1.0
  %v916 = vrcp.pop %v915
  %v917 = vmul.f32 %v915, %v916
  %v918 = vsub.f32 1.0, %v917
  %v919 = vmul.f32 %v916, %v918
  %v920 = vadd.f32 %v916, %v919
  %vm921 = vweird.f32 %v915
  %vm922 = vweird.f32 %v916
  %vm923 = vmor %vm921, %vm922
  %v924 = vsel %vm923, %v916, %v920
  %v925 = vand.u32 2147483647, %v915
  %vm926 = vcmp.eq.f32.partialorder %v925, 8.507059e+37
  %v927 = vand.u32 %v915, 2147483648
  %v928 = vor.u32 1.1754944e-38, %v927
  %v929 = vsel %vm926, %v928, %v924
  %v930 = vmul.f32 1.0, %v929
  %v931 = vtanh.pop %v870
  %v932 = vmul.f32 %v930, %v803
  %934 = vrot.lane.b32.xlu0 %v931, 64
  %v935 = vpop.permute.xlu0 %934
  %v937 = vmul.f32 %v930, %v935
  %939 = vrot.lane.b32.xlu0 %v937, 32
  %v940 = vpop.permute.xlu0 %939
  %v942 = vadd.f32 %v932, %v940
  %v943 = vtanh.pop %v942
  %945 = vrot.lane.b32.xlu0 %v943, 64
  %v946 = vpop.permute.xlu0 %945
  %v948 = vmul.f32 %v930, %v946
  %950 = vrot.lane.b32.xlu0 %v905, 96
  %v951 = vpop.permute.xlu0 %950
  %v953 = vsel %vm500, %v951, %v942
  %v954 = vpack.c.bf16 %v911, %v911
  %v956 = vrot.slane %v954, 3
  %v959 = vsel %vm505, %v954, %v956
  %961 = vrot.lane.b32.xlu0 %v959, 32
  %v962 = vpop.permute.xlu0 %961
  %s964 = scalar_lea.vmem %s4, 3
  %965 = vst.msk [vmem:[%s964] sm:$0x1] %vm513, %v962
  %v966 = vpack.c.bf16 %v948, %v948
  %v968 = vrot.slane %v966, 3
  %v971 = vsel %vm505, %v966, %v968
  %973 = vrot.lane.b32.xlu0 %v971, 64
  %v974 = vpop.permute.xlu0 %973
  %s976 = scalar_lea.vmem %s4, 4
  %977 = vst.msk [vmem:[%s976] sm:$0x1] %vm526, %v974
  %979 = vrot.lane.b32.xlu0 %v911, 32
  %v980 = vpop.permute.xlu0 %979
  %983 = vrot.lane.b32.xlu0 %v948, 64
  %v984 = vpop.permute.xlu0 %983
  %v986 = vsel %vm500, %v980, %v984
  %v987 = vld [vmem:[%s224] sm:$0x3]
  %v988 = vld [vmem:[%s186 + $0x2] sm:$0x3]
  %v989 = vpack.c.bf16 %v986, %v986
  %v991 = vsel %vm390, %v989, 0
  %993 = vmatpush.bf16.msra.mxu0 0
  %994 = vmatpush.bf16.msra.mxu0 0
  %995 = vmatpush.bf16.msra.mxu0 0
  %996 = vmatpush.bf16.msra.mxu0 0
  %997 = vmatpush.bf16.msra.mxu0 %v380
  %998 = vmatpush.bf16.msra.mxu0 %v378
  %999 = vmatpush.bf16.msra.mxu0 %v376
  %1000 = vmatpush.bf16.msra.mxu0 %v374
  %1001 = vmatmul.bf16.gmra.mxu0 %v991
  %v1002 = vpop.f32.mrf.mxu0
  %v1003 = vadd.f32 0.0, %v1002
  %v1004 = vpop.f32.mrf.mxu0
  %1005 = vdwg.mxu0
  %1006 = vmatpush.bf16.msra.mxu0 0
  %1007 = vmatpush.bf16.msra.mxu0 0
  %1008 = vmatpush.bf16.msra.mxu0 0
  %1009 = vmatpush.bf16.msra.mxu0 0
  %1010 = vmatpush.bf16.msra.mxu0 %v381
  %1011 = vmatpush.bf16.msra.mxu0 %v379
  %1012 = vmatpush.bf16.msra.mxu0 %v377
  %1013 = vmatpush.bf16.msra.mxu0 %v375
  %1014 = vmatmul.bf16.gmra.mxu0 %v991
  %v1015 = vpop.f32.mrf.mxu0
  %v1016 = vadd.f32 0.0, %v1015
  %v1017 = vpop.f32.mrf.mxu0
  %1018 = vdwg.mxu0
  %v1019 = vadd.f32 %v987, %v1003
  %v1020 = vadd.f32 %v988, %v1016
  %v1021 = vxor.u32 %v1019, 2147483648
  %v1022 = vmul.f32 %v1021, 1.442695
  %v1023 = vpow.pop %v1022
  %v1024 = vadd.f32 %v1023, 1.0
  %v1025 = vrcp.pop %v1024
  %v1026 = vmul.f32 %v1024, %v1025
  %v1027 = vsub.f32 1.0, %v1026
  %v1028 = vmul.f32 %v1025, %v1027
  %v1029 = vadd.f32 %v1025, %v1028
  %vm1030 = vweird.f32 %v1024
  %vm1031 = vweird.f32 %v1025
  %vm1032 = vmor %vm1030, %vm1031
  %v1033 = vsel %vm1032, %v1025, %v1029
  %v1034 = vand.u32 2147483647, %v1024
  %vm1035 = vcmp.eq.f32.partialorder %v1034, 8.507059e+37
  %v1036 = vand.u32 %v1024, 2147483648
  %v1037 = vor.u32 1.1754944e-38, %v1036
  %v1038 = vsel %vm1035, %v1037, %v1033
  %v1039 = vmul.f32 1.0, %v1038
  %v1040 = vtanh.pop %v1019
  %1042 = vrot.lane.b32.xlu0 %v953, 32
  %v1043 = vpop.permute.xlu0 %1042
  %v1045 = vmul.f32 %v1039, %v1043
  %1047 = vrot.lane.b32.xlu0 %v1040, 64
  %v1048 = vpop.permute.xlu0 %1047
  %v1050 = vmul.f32 %v1039, %v1048
  %1052 = vrot.lane.b32.xlu0 %v1050, 32
  %v1053 = vpop.permute.xlu0 %1052
  %v1055 = vadd.f32 %v1045, %v1053
  %v1056 = vtanh.pop %v1055
  %1058 = vrot.lane.b32.xlu0 %v1056, 64
  %v1059 = vpop.permute.xlu0 %1058
  %v1061 = vmul.f32 %v1039, %v1059
  %v1062 = vxor.u32 %v1020, 2147483648
  %v1063 = vmul.f32 %v1062, 1.442695
  %v1064 = vpow.pop %v1063
  %v1065 = vadd.f32 %v1064, 1.0
  %v1066 = vrcp.pop %v1065
  %v1067 = vmul.f32 %v1065, %v1066
  %v1068 = vsub.f32 1.0, %v1067
  %v1069 = vmul.f32 %v1066, %v1068
  %v1070 = vadd.f32 %v1066, %v1069
  %vm1071 = vweird.f32 %v1065
  %vm1072 = vweird.f32 %v1066
  %vm1073 = vmor %vm1071, %vm1072
  %v1074 = vsel %vm1073, %v1066, %v1070
  %v1075 = vand.u32 2147483647, %v1065
  %vm1076 = vcmp.eq.f32.partialorder %v1075, 8.507059e+37
  %v1077 = vand.u32 %v1065, 2147483648
  %v1078 = vor.u32 1.1754944e-38, %v1077
  %v1079 = vsel %vm1076, %v1078, %v1074
  %v1080 = vmul.f32 1.0, %v1079
  %v1081 = vtanh.pop %v1020
  %v1082 = vmul.f32 %v1080, %v953
  %1084 = vrot.lane.b32.xlu0 %v1081, 64
  %v1085 = vpop.permute.xlu0 %1084
  %v1087 = vmul.f32 %v1080, %v1085
  %1089 = vrot.lane.b32.xlu0 %v1087, 32
  %v1090 = vpop.permute.xlu0 %1089
  %v1092 = vadd.f32 %v1082, %v1090
  %v1093 = vtanh.pop %v1092
  %1095 = vrot.lane.b32.xlu0 %v1093, 64
  %v1096 = vpop.permute.xlu0 %1095
  %v1098 = vmul.f32 %v1080, %v1096
  %1100 = vrot.lane.b32.xlu0 %v1055, 96
  %v1101 = vpop.permute.xlu0 %1100
  %v1103 = vsel %vm500, %v1101, %v1092
  %v1104 = vpack.c.bf16 %v1061, %v1061
  %v1106 = vrot.slane %v1104, 3
  %v1109 = vsel %vm505, %v1104, %v1106
  %1111 = vrot.lane.b32.xlu0 %v1109, 32
  %v1112 = vpop.permute.xlu0 %1111
  %1114 = vst.msk [vmem:[%s976] sm:$0x1] %vm513, %v1112
  %v1115 = vpack.c.bf16 %v1098, %v1098
  %v1117 = vrot.slane %v1115, 3
  %v1120 = vsel %vm505, %v1115, %v1117
  %1122 = vrot.lane.b32.xlu0 %v1120, 64
  %v1123 = vpop.permute.xlu0 %1122
  %1125 = vst.msk [vmem:[%s964] sm:$0x1] %vm526, %v1123
  %1127 = vrot.lane.b32.xlu0 %v1061, 32
  %v1128 = vpop.permute.xlu0 %1127
  %1131 = vrot.lane.b32.xlu0 %v1098, 64
  %v1132 = vpop.permute.xlu0 %1131
  %v1134 = vsel %vm500, %v1128, %v1132
  %v1135 = vld [vmem:[%s262] sm:$0x3]
  %v1136 = vld [vmem:[%s148 + $0x2] sm:$0x3]
  %v1137 = vpack.c.bf16 %v1134, %v1134
  %v1139 = vsel %vm390, %v1137, 0
  %1141 = vmatpush.bf16.msra.mxu0 0
  %1142 = vmatpush.bf16.msra.mxu0 0
  %1143 = vmatpush.bf16.msra.mxu0 0
  %1144 = vmatpush.bf16.msra.mxu0 0
  %1145 = vmatpush.bf16.msra.mxu0 %v380
  %1146 = vmatpush.bf16.msra.mxu0 %v378
  %1147 = vmatpush.bf16.msra.mxu0 %v376
  %1148 = vmatpush.bf16.msra.mxu0 %v374
  %1149 = vmatmul.bf16.gmra.mxu0 %v1139
  %v1150 = vpop.f32.mrf.mxu0
  %v1151 = vadd.f32 0.0, %v1150
  %v1152 = vpop.f32.mrf.mxu0
  %1153 = vdwg.mxu0
  %1154 = vmatpush.bf16.msra.mxu0 0
  %1155 = vmatpush.bf16.msra.mxu0 0
  %1156 = vmatpush.bf16.msra.mxu0 0
  %1157 = vmatpush.bf16.msra.mxu0 0
  %1158 = vmatpush.bf16.msra.mxu0 %v381
  %1159 = vmatpush.bf16.msra.mxu0 %v379
  %1160 = vmatpush.bf16.msra.mxu0 %v377
  %1161 = vmatpush.bf16.msra.mxu0 %v375
  %1162 = vmatmul.bf16.gmra.mxu0 %v1139
  %v1163 = vpop.f32.mrf.mxu0
  %v1164 = vadd.f32 0.0, %v1163
  %v1165 = vpop.f32.mrf.mxu0
  %1166 = vdwg.mxu0
  %v1167 = vadd.f32 %v1135, %v1151
  %v1168 = vadd.f32 %v1136, %v1164
  %v1169 = vxor.u32 %v1167, 2147483648
  %v1170 = vmul.f32 %v1169, 1.442695
  %v1171 = vpow.pop %v1170
  %v1172 = vadd.f32 %v1171, 1.0
  %v1173 = vrcp.pop %v1172
  %v1174 = vmul.f32 %v1172, %v1173
  %v1175 = vsub.f32 1.0, %v1174
  %v1176 = vmul.f32 %v1173, %v1175
  %v1177 = vadd.f32 %v1173, %v1176
  %vm1178 = vweird.f32 %v1172
  %vm1179 = vweird.f32 %v1173
  %vm1180 = vmor %vm1178, %vm1179
  %v1181 = vsel %vm1180, %v1173, %v1177
  %v1182 = vand.u32 2147483647, %v1172
  %vm1183 = vcmp.eq.f32.partialorder %v1182, 8.507059e+37
  %v1184 = vand.u32 %v1172, 2147483648
  %v1185 = vor.u32 1.1754944e-38, %v1184
  %v1186 = vsel %vm1183, %v1185, %v1181
  %v1187 = vmul.f32 1.0, %v1186
  %v1188 = vtanh.pop %v1167
  %1190 = vrot.lane.b32.xlu0 %v1103, 32
  %v1191 = vpop.permute.xlu0 %1190
  %v1193 = vmul.f32 %v1187, %v1191
  %1195 = vrot.lane.b32.xlu0 %v1188, 64
  %v1196 = vpop.permute.xlu0 %1195
  %v1198 = vmul.f32 %v1187, %v1196
  %1200 = vrot.lane.b32.xlu0 %v1198, 32
  %v1201 = vpop.permute.xlu0 %1200
  %v1203 = vadd.f32 %v1193, %v1201
  %v1204 = vtanh.pop %v1203
  %1206 = vrot.lane.b32.xlu0 %v1204, 64
  %v1207 = vpop.permute.xlu0 %1206
  %v1209 = vmul.f32 %v1187, %v1207
  %v1210 = vxor.u32 %v1168, 2147483648
  %v1211 = vmul.f32 %v1210, 1.442695
  %v1212 = vpow.pop %v1211
  %v1213 = vadd.f32 %v1212, 1.0
  %v1214 = vrcp.pop %v1213
  %v1215 = vmul.f32 %v1213, %v1214
  %v1216 = vsub.f32 1.0, %v1215
  %v1217 = vmul.f32 %v1214, %v1216
  %v1218 = vadd.f32 %v1214, %v1217
  %vm1219 = vweird.f32 %v1213
  %vm1220 = vweird.f32 %v1214
  %vm1221 = vmor %vm1219, %vm1220
  %v1222 = vsel %vm1221, %v1214, %v1218
  %v1223 = vand.u32 2147483647, %v1213
  %vm1224 = vcmp.eq.f32.partialorder %v1223, 8.507059e+37
  %v1225 = vand.u32 %v1213, 2147483648
  %v1226 = vor.u32 1.1754944e-38, %v1225
  %v1227 = vsel %vm1224, %v1226, %v1222
  %v1228 = vmul.f32 1.0, %v1227
  %v1229 = vtanh.pop %v1168
  %v1230 = vmul.f32 %v1228, %v1103
  %1232 = vrot.lane.b32.xlu0 %v1229, 64
  %v1233 = vpop.permute.xlu0 %1232
  %v1235 = vmul.f32 %v1228, %v1233
  %1237 = vrot.lane.b32.xlu0 %v1235, 32
  %v1238 = vpop.permute.xlu0 %1237
  %v1240 = vadd.f32 %v1230, %v1238
  %v1241 = vtanh.pop %v1240
  %1243 = vrot.lane.b32.xlu0 %v1241, 64
  %v1244 = vpop.permute.xlu0 %1243
  %v1246 = vmul.f32 %v1228, %v1244
  %1248 = vrot.lane.b32.xlu0 %v1203, 96
  %v1249 = vpop.permute.xlu0 %1248
  %v1251 = vsel %vm500, %v1249, %v1240
  %v1252 = vpack.c.bf16 %v1209, %v1209
  %v1254 = vrot.slane %v1252, 3
  %v1257 = vsel %vm505, %v1252, %v1254
  %1259 = vrot.lane.b32.xlu0 %v1257, 32
  %v1260 = vpop.permute.xlu0 %1259
  %1262 = vst.msk [vmem:[%s826] sm:$0x1] %vm513, %v1260
  %v1263 = vpack.c.bf16 %v1246, %v1246
  %v1265 = vrot.slane %v1263, 3
  %v1268 = vsel %vm505, %v1263, %v1265
  %1270 = vrot.lane.b32.xlu0 %v1268, 64
  %v1271 = vpop.permute.xlu0 %1270
  %1273 = vst.msk [vmem:[%s814] sm:$0x1] %vm526, %v1271
  %1275 = vrot.lane.b32.xlu0 %v1209, 32
  %v1276 = vpop.permute.xlu0 %1275
  %1279 = vrot.lane.b32.xlu0 %v1246, 64
  %v1280 = vpop.permute.xlu0 %1279
  %v1282 = vsel %vm500, %v1276, %v1280
  %v1283 = vld [vmem:[%s300] sm:$0x3]
  %v1284 = vld [vmem:[%s110 + $0x2] sm:$0x3]
  %v1285 = vpack.c.bf16 %v1282, %v1282
  %v1287 = vsel %vm390, %v1285, 0
  %1289 = vmatpush.bf16.msra.mxu0 0
  %1290 = vmatpush.bf16.msra.mxu0 0
  %1291 = vmatpush.bf16.msra.mxu0 0
  %1292 = vmatpush.bf16.msra.mxu0 0
  %1293 = vmatpush.bf16.msra.mxu0 %v380
  %1294 = vmatpush.bf16.msra.mxu0 %v378
  %1295 = vmatpush.bf16.msra.mxu0 %v376
  %1296 = vmatpush.bf16.msra.mxu0 %v374
  %1297 = vmatmul.bf16.gmra.mxu0 %v1287
  %v1298 = vpop.f32.mrf.mxu0
  %v1299 = vadd.f32 0.0, %v1298
  %v1300 = vpop.f32.mrf.mxu0
  %1301 = vdwg.mxu0
  %1302 = vmatpush.bf16.msra.mxu0 0
  %1303 = vmatpush.bf16.msra.mxu0 0
  %1304 = vmatpush.bf16.msra.mxu0 0
  %1305 = vmatpush.bf16.msra.mxu0 0
  %1306 = vmatpush.bf16.msra.mxu0 %v381
  %1307 = vmatpush.bf16.msra.mxu0 %v379
  %1308 = vmatpush.bf16.msra.mxu0 %v377
  %1309 = vmatpush.bf16.msra.mxu0 %v375
  %1310 = vmatmul.bf16.gmra.mxu0 %v1287
  %v1311 = vpop.f32.mrf.mxu0
  %v1312 = vadd.f32 0.0, %v1311
  %v1313 = vpop.f32.mrf.mxu0
  %1314 = vdwg.mxu0
  %v1315 = vadd.f32 %v1283, %v1299
  %v1316 = vadd.f32 %v1284, %v1312
  %v1317 = vxor.u32 %v1315, 2147483648
  %v1318 = vmul.f32 %v1317, 1.442695
  %v1319 = vpow.pop %v1318
  %v1320 = vadd.f32 %v1319, 1.0
  %v1321 = vrcp.pop %v1320
  %v1322 = vmul.f32 %v1320, %v1321
  %v1323 = vsub.f32 1.0, %v1322
  %v1324 = vmul.f32 %v1321, %v1323
  %v1325 = vadd.f32 %v1321, %v1324
  %vm1326 = vweird.f32 %v1320
  %vm1327 = vweird.f32 %v1321
  %vm1328 = vmor %vm1326, %vm1327
  %v1329 = vsel %vm1328, %v1321, %v1325
  %v1330 = vand.u32 2147483647, %v1320
  %vm1331 = vcmp.eq.f32.partialorder %v1330, 8.507059e+37
  %v1332 = vand.u32 %v1320, 2147483648
  %v1333 = vor.u32 1.1754944e-38, %v1332
  %v1334 = vsel %vm1331, %v1333, %v1329
  %v1335 = vmul.f32 1.0, %v1334
  %v1336 = vtanh.pop %v1315
  %1338 = vrot.lane.b32.xlu0 %v1251, 32
  %v1339 = vpop.permute.xlu0 %1338
  %v1341 = vmul.f32 %v1335, %v1339
  %1343 = vrot.lane.b32.xlu0 %v1336, 64
  %v1344 = vpop.permute.xlu0 %1343
  %v1346 = vmul.f32 %v1335, %v1344
  %1348 = vrot.lane.b32.xlu0 %v1346, 32
  %v1349 = vpop.permute.xlu0 %1348
  %v1351 = vadd.f32 %v1341, %v1349
  %v1352 = vtanh.pop %v1351
  %1354 = vrot.lane.b32.xlu0 %v1352, 64
  %v1355 = vpop.permute.xlu0 %1354
  %v1357 = vmul.f32 %v1335, %v1355
  %v1358 = vxor.u32 %v1316, 2147483648
  %v1359 = vmul.f32 %v1358, 1.442695
  %v1360 = vpow.pop %v1359
  %v1361 = vadd.f32 %v1360, 1.0
  %v1362 = vrcp.pop %v1361
  %v1363 = vmul.f32 %v1361, %v1362
  %v1364 = vsub.f32 1.0, %v1363
  %v1365 = vmul.f32 %v1362, %v1364
  %v1366 = vadd.f32 %v1362, %v1365
  %vm1367 = vweird.f32 %v1361
  %vm1368 = vweird.f32 %v1362
  %vm1369 = vmor %vm1367, %vm1368
  %v1370 = vsel %vm1369, %v1362, %v1366
  %v1371 = vand.u32 2147483647, %v1361
  %vm1372 = vcmp.eq.f32.partialorder %v1371, 8.507059e+37
  %v1373 = vand.u32 %v1361, 2147483648
  %v1374 = vor.u32 1.1754944e-38, %v1373
  %v1375 = vsel %vm1372, %v1374, %v1370
  %v1376 = vmul.f32 1.0, %v1375
  %v1377 = vtanh.pop %v1316
  %v1378 = vmul.f32 %v1376, %v1251
  %1380 = vrot.lane.b32.xlu0 %v1377, 64
  %v1381 = vpop.permute.xlu0 %1380
  %v1383 = vmul.f32 %v1376, %v1381
  %1385 = vrot.lane.b32.xlu0 %v1383, 32
  %v1386 = vpop.permute.xlu0 %1385
  %v1388 = vadd.f32 %v1378, %v1386
  %v1389 = vtanh.pop %v1388
  %1391 = vrot.lane.b32.xlu0 %v1389, 64
  %v1392 = vpop.permute.xlu0 %1391
  %v1394 = vmul.f32 %v1376, %v1392
  %1396 = vrot.lane.b32.xlu0 %v1351, 96
  %v1397 = vpop.permute.xlu0 %1396
  %v1399 = vsel %vm500, %v1397, %v1388
  %v1400 = vpack.c.bf16 %v1357, %v1357
  %v1402 = vrot.slane %v1400, 3
  %v1405 = vsel %vm505, %v1400, %v1402
  %1407 = vrot.lane.b32.xlu0 %v1405, 32
  %v1408 = vpop.permute.xlu0 %1407
  %1410 = vst.msk [vmem:[%s676] sm:$0x1] %vm513, %v1408
  %v1411 = vpack.c.bf16 %v1394, %v1394
  %v1413 = vrot.slane %v1411, 3
  %v1416 = vsel %vm505, %v1411, %v1413
  %1418 = vrot.lane.b32.xlu0 %v1416, 64
  %v1419 = vpop.permute.xlu0 %1418
  %1421 = vst.msk [vmem:[%s664] sm:$0x1] %vm526, %v1419
  %1423 = vrot.lane.b32.xlu0 %v1357, 32
  %v1424 = vpop.permute.xlu0 %1423
  %1427 = vrot.lane.b32.xlu0 %v1394, 64
  %v1428 = vpop.permute.xlu0 %1427
  %v1430 = vsel %vm500, %v1424, %v1428
  %v1431 = vld [vmem:[%s338] sm:$0x3]
  %v1432 = vld [vmem:[#allocation2 + $0x2] sm:$0x3]
  %v1433 = vpack.c.bf16 %v1430, %v1430
  %v1435 = vsel %vm390, %v1433, 0
  %1437 = vmatpush.bf16.msra.mxu0 0
  %1438 = vmatpush.bf16.msra.mxu0 0
  %1439 = vmatpush.bf16.msra.mxu0 0
  %1440 = vmatpush.bf16.msra.mxu0 0
  %1441 = vmatpush.bf16.msra.mxu0 %v380
  %1442 = vmatpush.bf16.msra.mxu0 %v378
  %1443 = vmatpush.bf16.msra.mxu0 %v376
  %1444 = vmatpush.bf16.msra.mxu0 %v374
  %1445 = vmatmul.bf16.gmra.mxu0 %v1435
  %v1446 = vpop.f32.mrf.mxu0
  %v1447 = vadd.f32 0.0, %v1446
  %v1448 = vpop.f32.mrf.mxu0
  %1449 = vdwg.mxu0
  %1450 = vmatpush.bf16.msra.mxu0 0
  %1451 = vmatpush.bf16.msra.mxu0 0
  %1452 = vmatpush.bf16.msra.mxu0 0
  %1453 = vmatpush.bf16.msra.mxu0 0
  %1454 = vmatpush.bf16.msra.mxu0 %v381
  %1455 = vmatpush.bf16.msra.mxu0 %v379
  %1456 = vmatpush.bf16.msra.mxu0 %v377
  %1457 = vmatpush.bf16.msra.mxu0 %v375
  %1458 = vmatmul.bf16.gmra.mxu0 %v1435
  %v1459 = vpop.f32.mrf.mxu0
  %v1460 = vadd.f32 0.0, %v1459
  %v1461 = vpop.f32.mrf.mxu0
  %1462 = vdwg.mxu0
  %v1463 = vadd.f32 %v1431, %v1447
  %v1464 = vadd.f32 %v1432, %v1460
  %v1465 = vxor.u32 %v1463, 2147483648
  %v1466 = vmul.f32 %v1465, 1.442695
  %v1467 = vpow.pop %v1466
  %v1468 = vadd.f32 %v1467, 1.0
  %v1469 = vrcp.pop %v1468
  %v1470 = vmul.f32 %v1468, %v1469
  %v1471 = vsub.f32 1.0, %v1470
  %v1472 = vmul.f32 %v1469, %v1471
  %v1473 = vadd.f32 %v1469, %v1472
  %vm1474 = vweird.f32 %v1468
  %vm1475 = vweird.f32 %v1469
  %vm1476 = vmor %vm1474, %vm1475
  %v1477 = vsel %vm1476, %v1469, %v1473
  %v1478 = vand.u32 2147483647, %v1468
  %vm1479 = vcmp.eq.f32.partialorder %v1478, 8.507059e+37
  %v1480 = vand.u32 %v1468, 2147483648
  %v1481 = vor.u32 1.1754944e-38, %v1480
  %v1482 = vsel %vm1479, %v1481, %v1477
  %v1483 = vmul.f32 1.0, %v1482
  %v1484 = vtanh.pop %v1463
  %1486 = vrot.lane.b32.xlu0 %v1399, 32
  %v1487 = vpop.permute.xlu0 %1486
  %v1489 = vmul.f32 %v1483, %v1487
  %1491 = vrot.lane.b32.xlu0 %v1484, 64
  %v1492 = vpop.permute.xlu0 %1491
  %v1494 = vmul.f32 %v1483, %v1492
  %1496 = vrot.lane.b32.xlu0 %v1494, 32
  %v1497 = vpop.permute.xlu0 %1496
  %v1499 = vadd.f32 %v1489, %v1497
  %v1500 = vtanh.pop %v1499
  %1502 = vrot.lane.b32.xlu0 %v1500, 64
  %v1503 = vpop.permute.xlu0 %1502
  %v1505 = vmul.f32 %v1483, %v1503
  %v1506 = vxor.u32 %v1464, 2147483648
  %v1507 = vmul.f32 %v1506, 1.442695
  %v1508 = vpow.pop %v1507
  %v1509 = vadd.f32 %v1508, 1.0
  %v1510 = vrcp.pop %v1509
  %v1511 = vmul.f32 %v1509, %v1510
  %v1512 = vsub.f32 1.0, %v1511
  %v1513 = vmul.f32 %v1510, %v1512
  %v1514 = vadd.f32 %v1510, %v1513
  %vm1515 = vweird.f32 %v1509
  %vm1516 = vweird.f32 %v1510
  %vm1517 = vmor %vm1515, %vm1516
  %v1518 = vsel %vm1517, %v1510, %v1514
  %v1519 = vand.u32 2147483647, %v1509
  %vm1520 = vcmp.eq.f32.partialorder %v1519, 8.507059e+37
  %v1521 = vand.u32 %v1509, 2147483648
  %v1522 = vor.u32 1.1754944e-38, %v1521
  %v1523 = vsel %vm1520, %v1522, %v1518
  %v1524 = vmul.f32 1.0, %v1523
  %v1525 = vtanh.pop %v1464
  %v1526 = vmul.f32 %v1524, %v1399
  %1528 = vrot.lane.b32.xlu0 %v1525, 64
  %v1529 = vpop.permute.xlu0 %1528
  %v1531 = vmul.f32 %v1524, %v1529
  %1533 = vrot.lane.b32.xlu0 %v1531, 32
  %v1534 = vpop.permute.xlu0 %1533
  %v1536 = vadd.f32 %v1526, %v1534
  %v1537 = vtanh.pop %v1536
  %1539 = vrot.lane.b32.xlu0 %v1537, 64
  %v1540 = vpop.permute.xlu0 %1539
  %v1542 = vmul.f32 %v1524, %v1540
  %v1543 = vpack.c.bf16 %v1505, %v1505
  %v1545 = vrot.slane %v1543, 3
  %v1548 = vsel %vm505, %v1543, %v1545
  %1550 = vrot.lane.b32.xlu0 %v1548, 32
  %v1551 = vpop.permute.xlu0 %1550
  %1553 = vst.msk [vmem:[%s525] sm:$0x1] %vm513, %v1551
  %v1554 = vpack.c.bf16 %v1542, %v1542
  %v1556 = vrot.slane %v1554, 3
  %v1559 = vsel %vm505, %v1554, %v1556
  %1561 = vrot.lane.b32.xlu0 %v1559, 64
  %v1562 = vpop.permute.xlu0 %1561
  %1564 = vst.msk [vmem:[%s4] sm:$0x1] %vm526, %v1562
  // Predicated region
  $region18: #{bilstm_forward.2} parent=0 // pred_check
    _
  $region19: #{bilstm_forward.2} parent=0 // pred_check_branch
    %1566 = sbr.rel (0) target = $region21
  $region20: #{bilstm_forward.2} parent=0 // pred_region
    _
  $region21: #{bilstm_forward.2} parent=0 // pred_fallthru
    _
  // Predicated region
  $region22: #{bilstm_forward.2} parent=0 // pred_check
    _
  $region23: #{bilstm_forward.2} parent=0 // pred_check_branch
    %1568 = sbr.rel (0) target = $region25
  $region24: #{bilstm_forward.2} parent=0 // pred_region
    _
  $region25: #{bilstm_forward.2} parent=0 // pred_fallthru
    _

</llo_original>
